<compile_context>
chip_gen: v6e
topology: v6e:2x2x1
jax: 0.10.0
libtpu: 0.0.40
codegen_flags: <defaults>
</compile_context>

<pallas_src>
import functools

import jax
import jax.numpy as jnp
from jax.experimental import pallas as pl
from jax.experimental.pallas import tpu as pltpu


# ------------------------------ fused kernel --------------------------------

def _decoder_layer_kernel(*refs, num_heads, L, S, matmul_dtype, need_weights,
                          slf_mode, enc_mode, approx_recip):
  """Whole DecoderLayer for one batch-block, feature-major internally."""
  refs = list(refs)
  seqs_ref = refs.pop(0)          # (H, Bt*L)
  enc_ref = refs.pop(0)           # (H, Bt*S)
  keep_ref = refs.pop(0)          # (1, Bt*L)
  slf_mask_ref = refs.pop(0) if slf_mode == "array" else None
  enc_mask_ref = refs.pop(0) if enc_mode == "array" else None
  ln_g_ref = refs.pop(0)          # (H, 1)
  ln_b_ref = refs.pop(0)          # (H, 1)
  w_in_s_ref = refs.pop(0); b_in_s_ref = refs.pop(0)   # (3H, H), (3H, 1)
  wo_s_ref = refs.pop(0); bo_s_ref = refs.pop(0)       # (H, H), (H, 1)
  wq_c_ref = refs.pop(0); bq_c_ref = refs.pop(0)       # (H, H), (H, 1)
  w_kv_c_ref = refs.pop(0); b_kv_c_ref = refs.pop(0)   # (2H, H), (2H, 1)
  wo_c_ref = refs.pop(0); bo_c_ref = refs.pop(0)       # (H, H), (H, 1)
  w1_ref = refs.pop(0); b1_ref = refs.pop(0)           # (H, H), (H, 1)
  w2_ref = refs.pop(0); b2_ref = refs.pop(0)           # (H, H), (H, 1)
  out_ref = refs.pop(0)                                # (H, Bt*L)
  slf_attn_ref = refs.pop(0) if need_weights else None  # (Bt, L, L)
  enc_attn_ref = refs.pop(0) if need_weights else None  # (Bt, L, S)

  H = seqs_ref.shape[0]
  Nt = seqs_ref.shape[1]
  Bt = Nt // L
  nh = num_heads
  dh = H // nh
  f32 = jnp.float32
  md = matmul_dtype

  def mm(w_ref, x_t, b_ref):
    # (F_out, H) @ (H, N) + (F_out, 1); torch (out, in) weight layout as-is.
    return jnp.dot(w_ref[...].astype(md), x_t.astype(md),
                   preferred_element_type=f32) + b_ref[...]

  # Additive attention masks, built once per grid step (shared over rows).
  if slf_mode == "causal":
    rows = jax.lax.broadcasted_iota(jnp.int32, (L, L), 0)
    cols = jax.lax.broadcasted_iota(jnp.int32, (L, L), 1)
    slf_mask = jnp.where(cols > rows, jnp.float32(-1e9), jnp.float32(0.0))
  elif slf_mode == "array":
    slf_mask = slf_mask_ref[...]
  else:
    slf_mask = None
  enc_mask = enc_mask_ref[...] if enc_mode == "array" else None

  def attention(q_t, k_t, v_t, Lk, mask, attn_ref):
    # q_t: (H, Bt*L); k_t/v_t: (H, Bt*Lk).  Per-row attention (no cross-batch
    # mixing); the row loop is Python-unrolled so the live (nh, L, Lk) score /
    # prob tensors never scale with Bt.
    ctx_rows = []
    for b in range(Bt):
      qb = q_t[:, b * L:(b + 1) * L].reshape(nh, dh, L)
      kb = k_t[:, b * Lk:(b + 1) * Lk].reshape(nh, dh, Lk)
      vb = v_t[:, b * Lk:(b + 1) * Lk].reshape(nh, dh, Lk)
      qb = jnp.swapaxes(qb, 1, 2)                            # (nh, L, dh)
      s = jnp.einsum("hqd,hdk->hqk", qb.astype(md), kb.astype(md),
                     preferred_element_type=f32)             # (nh, L, Lk)
      if mask is not None:
        s = s + mask
      s = s - jnp.max(s, axis=-1, keepdims=True)
      e = jnp.exp(s)
      p = e * pl.reciprocal(jnp.sum(e, axis=-1, keepdims=True),
                            approx=approx_recip)
      # context comes out feature-major directly (no output transpose).
      ctx = jnp.einsum("hek,hqk->heq", vb.astype(md), p.astype(md),
                       preferred_element_type=f32)           # (nh, dh, L)
      ctx_rows.append(ctx.reshape(H, L))
      if attn_ref is not None:
        attn_ref[b] = (jnp.sum(p, axis=0) * (1.0 / nh)).astype(attn_ref.dtype)
    return ctx_rows[0] if Bt == 1 else jnp.concatenate(ctx_rows, axis=-1)

  # ---- LayerNorm over the feature axis (eps=1e-8, biased variance) ---------
  x = seqs_ref[...].astype(f32)                              # (H, Nt)
  mu = jnp.mean(x, axis=0, keepdims=True)
  xc = x - mu
  var = jnp.mean(xc * xc, axis=0, keepdims=True)
  dec_in = xc * jax.lax.rsqrt(var + 1e-8) * ln_g_ref[...] + ln_b_ref[...]

  # ---- self attention: one fused QKV matmul (scale pre-folded into Q) ------
  qkv = mm(w_in_s_ref, dec_in, b_in_s_ref)                   # (3H, Nt)
  ctx1 = attention(qkv[0:H], qkv[H:2 * H], qkv[2 * H:3 * H],
                   L, slf_mask, slf_attn_ref)
  d1 = mm(wo_s_ref, ctx1, bo_s_ref)                          # (H, Nt)

  # ---- cross attention: Q from self-attn output, K/V from enc_output -------
  enc = enc_ref[...].astype(f32)                             # (H, Bt*S)
  q_c = mm(wq_c_ref, d1, bq_c_ref)                           # (H, Nt)
  kv_c = mm(w_kv_c_ref, enc, b_kv_c_ref)                     # (2H, Bt*S)
  ctx2 = attention(q_c, kv_c[0:H], kv_c[H:2 * H], S, enc_mask, enc_attn_ref)
  d2 = mm(wo_c_ref, ctx2, bo_c_ref)                          # (H, Nt)

  # ---- PointWiseFeedForward (1x1 convs) + both residuals + timeline mask ---
  h1 = jnp.maximum(mm(w1_ref, d2, b1_ref), 0.0)
  ffn = mm(w2_ref, h1, b2_ref)
  y = (dec_in + d2 + ffn) * keep_ref[...]                    # (H, Nt) * (1, Nt)
  out_ref[...] = y.astype(out_ref.dtype)                     # lane-dense store


# ------------------------------ wrapper --------------------------------------

def _pick_batch_block(B, L, S, target_tokens=256, max_tokens=4096):
  """Rows per grid step: biggest MXU fill that keeps blocks (8,128)-legal."""
  valid = [bt for bt in range(1, B + 1)
           if B % bt == 0
           and (bt == B or ((bt * L) % 128 == 0 and (bt * S) % 128 == 0))]
  under = [bt for bt in valid if bt * max(L, S) <= max_tokens]
  for bt in sorted(under):                      # reach target, keep >=2 steps
    if bt * L >= target_tokens and B // bt >= 2:
      return bt
  for bt in sorted(under):
    if bt * L >= target_tokens:
      return bt
  if under:
    return max(under)
  return min(valid)


def decoder_layer(seqs, enc_output, timeline_mask, params,
                  slf_attn_mask=None, enc_attn_mask=None,
                  num_heads=4, matmul_dtype=jnp.bfloat16,
                  need_weights=False, batch_block=None):
  """SASRec DecoderLayer forward.

  seqs: (B, L, H), enc_output: (B, S, H) (batch-major: a pure permutation of
  the torch module's seq-first layout), timeline_mask: (B, L) bool where True
  marks padded positions.  slf_attn_mask / enc_attn_mask may be None, the
  string "causal" (self only; mask generated in-kernel), or an additive float
  (Lq, Lk) array.  Returns (out, slf_attn, enc_attn); the attention maps are
  None unless need_weights=True.
  """
  B, L, H = seqs.shape
  S = enc_output.shape[1]
  assert H % num_heads == 0
  dh = H // num_heads
  scale = 1.0 / float(dh) ** 0.5
  f32 = jnp.float32

  Bt = int(batch_block) if batch_block is not None else _pick_batch_block(B, L, S)
  if B % Bt != 0:
    raise ValueError(f"batch_block {Bt} must divide B={B}")
  if Bt != B and ((Bt * L) % 128 != 0 or (Bt * S) % 128 != 0):
    raise ValueError("batch_block*L and batch_block*S must be multiples of 128 "
                     "unless batch_block == B")

  # ---- mask modes (None masks compiled out; causal generated in-kernel) ----
  if slf_attn_mask is None:
    slf_mode, slf_mask_arr = "none", None
  elif isinstance(slf_attn_mask, str):
    assert slf_attn_mask == "causal"
    slf_mode, slf_mask_arr = "causal", None
  else:
    slf_mode, slf_mask_arr = "array", slf_attn_mask.astype(f32)
  if enc_attn_mask is None:
    enc_mode, enc_mask_arr = "none", None
  else:
    enc_mode, enc_mask_arr = "array", enc_attn_mask.astype(f32)

  # ---- activations: feature-major, tokens flattened batch-major ------------
  seqs_t = jnp.transpose(seqs, (2, 0, 1)).reshape(H, B * L)   # (H, B*L)
  enc_t = jnp.transpose(enc_output, (2, 0, 1)).reshape(H, B * S)
  keep = jnp.logical_not(timeline_mask).astype(f32).reshape(1, B * L)

  # ---- pack parameters (cheap one-off ops; torch layouts used directly) ----
  ln_g = params["ln_g"].reshape(H, 1).astype(f32)
  ln_b = params["ln_b"].reshape(H, 1).astype(f32)

  w_in_s = params["slf"]["in_w"]                     # (3H, H) = [Wq; Wk; Wv]
  b_in_s = params["slf"]["in_b"]                     # (3H,)
  w_in_s = jnp.concatenate([w_in_s[:H] * scale, w_in_s[H:]], axis=0)
  b_in_s = jnp.concatenate([b_in_s[:H] * scale, b_in_s[H:]],
                           axis=0).reshape(3 * H, 1).astype(f32)
  wo_s = params["slf"]["out_w"]
  bo_s = params["slf"]["out_b"].reshape(H, 1).astype(f32)

  w_in_c = params["enc"]["in_w"]
  b_in_c = params["enc"]["in_b"]
  wq_c = w_in_c[:H] * scale
  bq_c = (b_in_c[:H] * scale).reshape(H, 1).astype(f32)
  w_kv_c = w_in_c[H:]                                # (2H, H) = [Wk; Wv]
  b_kv_c = b_in_c[H:].reshape(2 * H, 1).astype(f32)
  wo_c = params["enc"]["out_w"]
  bo_c = params["enc"]["out_b"].reshape(H, 1).astype(f32)

  w1 = params["ffn"]["w1"]
  b1 = params["ffn"]["b1"].reshape(H, 1).astype(f32)
  w2 = params["ffn"]["w2"]
  b2 = params["ffn"]["b2"].reshape(H, 1).astype(f32)

  # MXU operand dtype (bf16 by default; accumulation stays f32).
  w_in_s, wo_s, wq_c, w_kv_c, wo_c, w1, w2 = (
      w.astype(matmul_dtype)
      for w in (w_in_s, wo_s, wq_c, w_kv_c, wo_c, w1, w2))

  # ---- specs ----------------------------------------------------------------
  def const(shape):
    nd = len(shape)
    return pl.BlockSpec(shape, lambda i, _nd=nd: (0,) * _nd)

  inputs = [seqs_t, enc_t, keep]
  in_specs = [
      pl.BlockSpec((H, Bt * L), lambda i: (0, i)),
      pl.BlockSpec((H, Bt * S), lambda i: (0, i)),
      pl.BlockSpec((1, Bt * L), lambda i: (0, i)),
  ]
  if slf_mode == "array":
    inputs.append(slf_mask_arr); in_specs.append(const((L, L)))
  if enc_mode == "array":
    inputs.append(enc_mask_arr); in_specs.append(const((L, S)))
  weights = [ln_g, ln_b, w_in_s, b_in_s, wo_s, bo_s,
             wq_c, bq_c, w_kv_c, b_kv_c, wo_c, bo_c, w1, b1, w2, b2]
  inputs += weights
  in_specs += [const(tuple(w.shape)) for w in weights]

  out_shape = [jax.ShapeDtypeStruct((H, B * L), seqs.dtype)]
  out_specs = [pl.BlockSpec((H, Bt * L), lambda i: (0, i))]
  if need_weights:
    out_shape += [jax.ShapeDtypeStruct((B, L, L), f32),
                  jax.ShapeDtypeStruct((B, L, S), f32)]
    out_specs += [pl.BlockSpec((Bt, L, L), lambda i: (i, 0, 0)),
                  pl.BlockSpec((Bt, L, S), lambda i: (i, 0, 0))]

  # ---- VMEM limit (generation-aware) and advisory cost estimate ------------
  try:
    vmem_cap = int(pltpu.get_tpu_info().vmem_capacity_bytes)
  except Exception:  # pragma: no cover - conservative fallback
    vmem_cap = 64 * 1024 * 1024
  vmem_limit = min((vmem_cap * 3) // 4, 96 * 1024 * 1024)

  n_tok, n_src = B * L, B * S
  proj_flops = 2 * H * H * (3 * n_tok + n_tok + n_tok + 2 * n_src
                            + n_tok + 2 * n_tok)
  attn_flops = 4 * H * (n_tok * L + n_tok * S)
  transcendentals = num_heads * (n_tok * L + n_tok * S)
  in_bytes = sum(int(a.size) * int(a.dtype.itemsize) for a in inputs)
  out_bytes = B * L * H * int(seqs.dtype.itemsize)
  if need_weights:
    out_bytes += 4 * (B * L * L + B * L * S)
  cost = pl.CostEstimate(flops=int(proj_flops + attn_flops),
                         transcendentals=int(transcendentals),
                         bytes_accessed=int(in_bytes + out_bytes))

  kernel = functools.partial(
      _decoder_layer_kernel, num_heads=num_heads, L=L, S=S,
      matmul_dtype=matmul_dtype, need_weights=need_weights,
      slf_mode=slf_mode, enc_mode=enc_mode,
      approx_recip=not need_weights)  # exact softmax when maps are returned

  res = pl.pallas_call(
      kernel,
      out_shape=tuple(out_shape),
      grid=(B // Bt,),
      in_specs=in_specs,
      out_specs=tuple(out_specs),
      compiler_params=pltpu.CompilerParams(
          dimension_semantics=("parallel",),
          vmem_limit_bytes=int(vmem_limit)),
      cost_estimate=cost,
  )(*inputs)

  if need_weights:
    out_t, slf_attn, enc_attn = res
  else:
    (out_t,) = res
    slf_attn = enc_attn = None
  out = jnp.transpose(out_t.reshape(H, B, L), (1, 2, 0))      # (B, L, H)
  return out, slf_attn, enc_attn


# ------------------------------ setup / demo ---------------------------------

def init_params(key, H):
  def nrm(k, shape, scale=0.1):
    return (scale * jax.random.normal(k, shape)).astype(jnp.float32)

  ks = jax.random.split(key, 8)
  ln_g = jnp.ones((H,), jnp.float32) + nrm(ks[0], (H,), 0.02)
  ln_b = nrm(ks[1], (H,), 0.02)

  def mha_params(k):
    k0, k1, k2, k3 = jax.random.split(k, 4)
    return {"in_w": nrm(k0, (3 * H, H)),       # torch in_proj_weight [q;k;v]
            "in_b": nrm(k1, (3 * H,), 0.02),   # torch in_proj_bias
            "out_w": nrm(k2, (H, H)),          # torch out_proj.weight
            "out_b": nrm(k3, (H,), 0.02)}      # torch out_proj.bias

  ffn = {"w1": nrm(ks[4], (H, H)), "b1": nrm(ks[5], (H,), 0.02),   # Conv1d k=1
         "w2": nrm(ks[6], (H, H)), "b2": nrm(ks[7], (H,), 0.02)}
  return {"ln_g": ln_g, "ln_b": ln_b,
          "slf": mha_params(ks[2]), "enc": mha_params(ks[3]), "ffn": ffn}


if __name__ == "__main__":
  B, L, S, H, NH = 2, 8, 8, 32, 4

  key = jax.random.PRNGKey(0)
  k_seq, k_enc, k_par = jax.random.split(key, 3)

  seqs = jax.random.normal(k_seq, (B, L, H), dtype=jnp.float32)
  enc_output = jax.random.normal(k_enc, (B, S, H), dtype=jnp.float32)
  # timeline_mask: True = padded position (zeroed in the output)
  timeline_mask = jnp.array([[False] * 6 + [True] * 2, [False] * 8],
                            dtype=jnp.bool_)
  params = init_params(k_par, H)

  # Production path: causal mask generated in-kernel, no attention-map
  # writeback, approx softmax reciprocal.
  out_fast, _, _ = decoder_layer(seqs, enc_output, timeline_mask, params,
                                 slf_attn_mask="causal", num_heads=NH)

  # Full path: same causal mask supplied as an explicit additive float array,
  # attention maps requested (exact softmax reciprocal).
  causal = jnp.where(jnp.triu(jnp.ones((L, L), jnp.bool_), k=1),
                     -1e9, 0.0).astype(jnp.float32)
  out_full, slf_attn, enc_attn = decoder_layer(
      seqs, enc_output, timeline_mask, params,
      slf_attn_mask=causal, enc_attn_mask=None, num_heads=NH,
      need_weights=True)

  jax.block_until_ready((out_fast, out_full, slf_attn, enc_attn))

  assert out_fast.shape == (B, L, H) and out_full.shape == (B, L, H)
  assert slf_attn.shape == (B, L, L) and enc_attn.shape == (B, L, S)
  assert bool(jnp.all(jnp.isfinite(out_fast)))
  assert bool(jnp.all(jnp.isfinite(out_full)))
  # Both specializations implement the same math (up to the approx reciprocal).
  assert bool(jnp.max(jnp.abs(out_fast - out_full)) < 5e-2)
  # Padded timeline positions are exactly zeroed.
  assert bool(jnp.max(jnp.abs(out_fast[0, 6:])) == 0.0)
  print("KERNEL_OK")
</pallas_src>

<mosaic_0001>
module attributes {stable_mosaic.version = 11 : i64} {
  func.func @_decoder_layer_kernel(%arg0: i32, %arg1: memref<32x16xf32, #tpu.memory_space<vmem>>, %arg2: memref<32x16xf32, #tpu.memory_space<vmem>>, %arg3: memref<1x16xf32, #tpu.memory_space<vmem>>, %arg4: memref<32x1xf32, #tpu.memory_space<vmem>>, %arg5: memref<32x1xf32, #tpu.memory_space<vmem>>, %arg6: memref<96x32xbf16, #tpu.memory_space<vmem>>, %arg7: memref<96x1xf32, #tpu.memory_space<vmem>>, %arg8: memref<32x32xbf16, #tpu.memory_space<vmem>>, %arg9: memref<32x1xf32, #tpu.memory_space<vmem>>, %arg10: memref<32x32xbf16, #tpu.memory_space<vmem>>, %arg11: memref<32x1xf32, #tpu.memory_space<vmem>>, %arg12: memref<64x32xbf16, #tpu.memory_space<vmem>>, %arg13: memref<64x1xf32, #tpu.memory_space<vmem>>, %arg14: memref<32x32xbf16, #tpu.memory_space<vmem>>, %arg15: memref<32x1xf32, #tpu.memory_space<vmem>>, %arg16: memref<32x32xbf16, #tpu.memory_space<vmem>>, %arg17: memref<32x1xf32, #tpu.memory_space<vmem>>, %arg18: memref<32x32xbf16, #tpu.memory_space<vmem>>, %arg19: memref<32x1xf32, #tpu.memory_space<vmem>>, %arg20: memref<32x16xf32, #tpu.memory_space<vmem>>) attributes {dimension_semantics = [#tpu.dimension_semantics<parallel>], iteration_bounds = array<i64: 1>, scalar_prefetch = 0 : i64, scratch_operands = 0 : i64, tpu.core_type = #tpu.core_type<tc>, window_params = [{transform_indices = @transform_0, window_bounds = array<i64: 32, 16>}, {transform_indices = @transform_1, window_bounds = array<i64: 32, 16>}, {transform_indices = @transform_2, window_bounds = array<i64: 1, 16>}, {pipeline_mode = #tpu.pipeline_mode<synchronous>, transform_indices = @transform_3, window_bounds = array<i64: 32, 1>}, {pipeline_mode = #tpu.pipeline_mode<synchronous>, transform_indices = @transform_4, window_bounds = array<i64: 32, 1>}, {pipeline_mode = #tpu.pipeline_mode<synchronous>, transform_indices = @transform_5, window_bounds = array<i64: 96, 32>}, {pipeline_mode = #tpu.pipeline_mode<synchronous>, transform_indices = @transform_6, window_bounds = array<i64: 96, 1>}, {pipeline_mode = #tpu.pipeline_mode<synchronous>, transform_indices = @transform_7, window_bounds = array<i64: 32, 32>}, {pipeline_mode = #tpu.pipeline_mode<synchronous>, transform_indices = @transform_8, window_bounds = array<i64: 32, 1>}, {pipeline_mode = #tpu.pipeline_mode<synchronous>, transform_indices = @transform_9, window_bounds = array<i64: 32, 32>}, {pipeline_mode = #tpu.pipeline_mode<synchronous>, transform_indices = @transform_10, window_bounds = array<i64: 32, 1>}, {pipeline_mode = #tpu.pipeline_mode<synchronous>, transform_indices = @transform_11, window_bounds = array<i64: 64, 32>}, {pipeline_mode = #tpu.pipeline_mode<synchronous>, transform_indices = @transform_12, window_bounds = array<i64: 64, 1>}, {pipeline_mode = #tpu.pipeline_mode<synchronous>, transform_indices = @transform_13, window_bounds = array<i64: 32, 32>}, {pipeline_mode = #tpu.pipeline_mode<synchronous>, transform_indices = @transform_14, window_bounds = array<i64: 32, 1>}, {pipeline_mode = #tpu.pipeline_mode<synchronous>, transform_indices = @transform_15, window_bounds = array<i64: 32, 32>}, {pipeline_mode = #tpu.pipeline_mode<synchronous>, transform_indices = @transform_16, window_bounds = array<i64: 32, 1>}, {pipeline_mode = #tpu.pipeline_mode<synchronous>, transform_indices = @transform_17, window_bounds = array<i64: 32, 32>}, {pipeline_mode = #tpu.pipeline_mode<synchronous>, transform_indices = @transform_18, window_bounds = array<i64: 32, 1>}, {transform_indices = @transform_19, window_bounds = array<i64: 32, 16>}]} {
    %0 = tpu.iota {dimensions = array<i32: 0>} : vector<8x8xi32>
    %1 = tpu.iota {dimensions = array<i32: 1>} : vector<8x8xi32>
    %2 = arith.cmpi sgt, %1, %0 : vector<8x8xi32>
    %cst = arith.constant -1.000000e+09 : f32
    %cst_0 = arith.constant 0.000000e+00 : f32
    %3 = vector.broadcast %cst : f32 to vector<8x8xf32>
    %4 = vector.broadcast %cst_0 : f32 to vector<8x8xf32>
    %5 = arith.select %2, %3, %4 : vector<8x8xi1>, vector<8x8xf32>
    %c0 = arith.constant 0 : index
    %c0_1 = arith.constant 0 : index
    %6 = vector.load %arg1[%c0, %c0_1] : memref<32x16xf32, #tpu.memory_space<vmem>>, vector<32x16xf32>
    %cst_2 = arith.constant dense<0.000000e+00> : vector<16xf32>
    %7 = vector.multi_reduction <add>, %6, %cst_2 [0] : vector<32x16xf32> to vector<16xf32>
    %8 = vector.shape_cast %7 : vector<16xf32> to vector<1x16xf32>
    %cst_3 = arith.constant 3.200000e+01 : f32
    %9 = vector.broadcast %cst_3 : f32 to vector<1x16xf32>
    %10 = arith.divf %8, %9 : vector<1x16xf32>
    %11 = vector.broadcast %10 : vector<1x16xf32> to vector<32x16xf32>
    %12 = arith.subf %6, %11 : vector<32x16xf32>
    %13 = arith.mulf %12, %12 : vector<32x16xf32>
    %cst_4 = arith.constant dense<0.000000e+00> : vector<16xf32>
    %14 = vector.multi_reduction <add>, %13, %cst_4 [0] : vector<32x16xf32> to vector<16xf32>
    %15 = vector.shape_cast %14 : vector<16xf32> to vector<1x16xf32>
    %cst_5 = arith.constant 3.200000e+01 : f32
    %16 = vector.broadcast %cst_5 : f32 to vector<1x16xf32>
    %17 = arith.divf %15, %16 : vector<1x16xf32>
    %cst_6 = arith.constant 9.99999993E-9 : f32
    %18 = vector.broadcast %cst_6 : f32 to vector<1x16xf32>
    %19 = arith.addf %17, %18 : vector<1x16xf32>
    %20 = math.rsqrt %19 : vector<1x16xf32>
    %21 = vector.broadcast %20 : vector<1x16xf32> to vector<32x16xf32>
    %22 = arith.mulf %12, %21 : vector<32x16xf32>
    %c0_7 = arith.constant 0 : index
    %c0_8 = arith.constant 0 : index
    %23 = vector.load %arg4[%c0_7, %c0_8] : memref<32x1xf32, #tpu.memory_space<vmem>>, vector<32x1xf32>
    %24 = vector.broadcast %23 : vector<32x1xf32> to vector<32x16xf32>
    %25 = arith.mulf %22, %24 : vector<32x16xf32>
    %c0_9 = arith.constant 0 : index
    %c0_10 = arith.constant 0 : index
    %26 = vector.load %arg5[%c0_9, %c0_10] : memref<32x1xf32, #tpu.memory_space<vmem>>, vector<32x1xf32>
    %27 = vector.broadcast %26 : vector<32x1xf32> to vector<32x16xf32>
    %28 = arith.addf %25, %27 : vector<32x16xf32>
    %c0_11 = arith.constant 0 : index
    %c0_12 = arith.constant 0 : index
    %29 = vector.load %arg6[%c0_11, %c0_12] : memref<96x32xbf16, #tpu.memory_space<vmem>>, vector<96x32xbf16>
    %30 = arith.truncf %28 : vector<32x16xf32> to vector<32x16xbf16>
    %cst_13 = arith.constant dense<0.000000e+00> : vector<96x16xf32>
    %31 = tpu.matmul %29, %30, %cst_13 {dimension_numbers = #tpu.dot_dimension_numbers<[1], [0], [0], [1], [0, 0, 1, 1], [], []>} : vector<96x32xbf16>, vector<32x16xbf16>, vector<96x16xf32> -> vector<96x16xf32>
    %c0_14 = arith.constant 0 : index
    %c0_15 = arith.constant 0 : index
    %32 = vector.load %arg7[%c0_14, %c0_15] : memref<96x1xf32, #tpu.memory_space<vmem>>, vector<96x1xf32>
    %33 = vector.broadcast %32 : vector<96x1xf32> to vector<96x16xf32>
    %34 = arith.addf %31, %33 : vector<96x16xf32>
    %35 = vector.extract_strided_slice %34 {offsets = [0, 0], sizes = [32, 16], strides = [1, 1]} : vector<96x16xf32> to vector<32x16xf32>
    %36 = vector.extract_strided_slice %34 {offsets = [32, 0], sizes = [32, 16], strides = [1, 1]} : vector<96x16xf32> to vector<32x16xf32>
    %37 = vector.extract_strided_slice %34 {offsets = [64, 0], sizes = [32, 16], strides = [1, 1]} : vector<96x16xf32> to vector<32x16xf32>
    %38 = vector.extract_strided_slice %35 {offsets = [0, 0], sizes = [32, 8], strides = [1, 1]} : vector<32x16xf32> to vector<32x8xf32>
    %39 = vector.shape_cast %38 : vector<32x8xf32> to vector<4x8x8xf32>
    %40 = vector.extract_strided_slice %36 {offsets = [0, 0], sizes = [32, 8], strides = [1, 1]} : vector<32x16xf32> to vector<32x8xf32>
    %41 = vector.shape_cast %40 : vector<32x8xf32> to vector<4x8x8xf32>
    %42 = vector.extract_strided_slice %37 {offsets = [0, 0], sizes = [32, 8], strides = [1, 1]} : vector<32x16xf32> to vector<32x8xf32>
    %43 = vector.shape_cast %42 : vector<32x8xf32> to vector<4x8x8xf32>
    %44 = tpu.transpose %39, [0, 2, 1] : vector<4x8x8xf32> -> vector<4x8x8xf32>
    %45 = arith.truncf %44 : vector<4x8x8xf32> to vector<4x8x8xbf16>
    %46 = arith.truncf %41 : vector<4x8x8xf32> to vector<4x8x8xbf16>
    "tpu.trace_start"() <{level = 10 : i32, message = "hqd,hdk->hqk"}> : () -> ()
    %cst_16 = arith.constant dense<0.000000e+00> : vector<4x8x8xf32>
    %47 = tpu.matmul %45, %46, %cst_16 {dimension_numbers = #tpu.dot_dimension_numbers<[2], [1], [1], [2], [0, 0, 0, 1, 1, 2], [0], [0]>} : vector<4x8x8xbf16>, vector<4x8x8xbf16>, vector<4x8x8xf32> -> vector<4x8x8xf32>
    "tpu.trace_stop"() : () -> ()
    %48 = vector.shape_cast %5 : vector<8x8xf32> to vector<1x8x8xf32>
    %49 = vector.broadcast %48 : vector<1x8x8xf32> to vector<4x8x8xf32>
    %50 = arith.addf %47, %49 : vector<4x8x8xf32>
    %cst_17 = arith.constant dense<0xFF800000> : vector<4x8xf32>
    %51 = vector.multi_reduction <maximumf>, %50, %cst_17 [2] : vector<4x8x8xf32> to vector<4x8xf32>
    %52 = vector.shape_cast %51 : vector<4x8xf32> to vector<4x8x1xf32>
    %53 = vector.broadcast %52 : vector<4x8x1xf32> to vector<4x8x8xf32>
    %54 = arith.subf %50, %53 : vector<4x8x8xf32>
    %55 = math.exp %54 : vector<4x8x8xf32>
    %cst_18 = arith.constant dense<0.000000e+00> : vector<4x8xf32>
    %56 = vector.multi_reduction <add>, %55, %cst_18 [2] : vector<4x8x8xf32> to vector<4x8xf32>
    %57 = vector.shape_cast %56 : vector<4x8xf32> to vector<4x8x1xf32>
    %58 = tpu.reciprocal %57 {approx = true} : vector<4x8x1xf32> -> vector<4x8x1xf32>
    %59 = vector.broadcast %58 : vector<4x8x1xf32> to vector<4x8x8xf32>
    %60 = arith.mulf %55, %59 : vector<4x8x8xf32>
    %61 = arith.truncf %43 : vector<4x8x8xf32> to vector<4x8x8xbf16>
    %62 = arith.truncf %60 : vector<4x8x8xf32> to vector<4x8x8xbf16>
    "tpu.trace_start"() <{level = 10 : i32, message = "hek,hqk->heq"}> : () -> ()
    %cst_19 = arith.constant dense<0.000000e+00> : vector<4x8x8xf32>
    %63 = tpu.matmul %61, %62, %cst_19 {dimension_numbers = #tpu.dot_dimension_numbers<[2], [2], [1], [1], [0, 0, 0, 1, 1, 1], [0], [0]>} : vector<4x8x8xbf16>, vector<4x8x8xbf16>, vector<4x8x8xf32> -> vector<4x8x8xf32>
    "tpu.trace_stop"() : () -> ()
    %64 = vector.shape_cast %63 : vector<4x8x8xf32> to vector<32x8xf32>
    %65 = vector.extract_strided_slice %35 {offsets = [0, 8], sizes = [32, 8], strides = [1, 1]} : vector<32x16xf32> to vector<32x8xf32>
    %66 = vector.shape_cast %65 : vector<32x8xf32> to vector<4x8x8xf32>
    %67 = vector.extract_strided_slice %36 {offsets = [0, 8], sizes = [32, 8], strides = [1, 1]} : vector<32x16xf32> to vector<32x8xf32>
    %68 = vector.shape_cast %67 : vector<32x8xf32> to vector<4x8x8xf32>
    %69 = vector.extract_strided_slice %37 {offsets = [0, 8], sizes = [32, 8], strides = [1, 1]} : vector<32x16xf32> to vector<32x8xf32>
    %70 = vector.shape_cast %69 : vector<32x8xf32> to vector<4x8x8xf32>
    %71 = tpu.transpose %66, [0, 2, 1] : vector<4x8x8xf32> -> vector<4x8x8xf32>
    %72 = arith.truncf %71 : vector<4x8x8xf32> to vector<4x8x8xbf16>
    %73 = arith.truncf %68 : vector<4x8x8xf32> to vector<4x8x8xbf16>
    "tpu.trace_start"() <{level = 10 : i32, message = "hqd,hdk->hqk"}> : () -> ()
    %cst_20 = arith.constant dense<0.000000e+00> : vector<4x8x8xf32>
    %74 = tpu.matmul %72, %73, %cst_20 {dimension_numbers = #tpu.dot_dimension_numbers<[2], [1], [1], [2], [0, 0, 0, 1, 1, 2], [0], [0]>} : vector<4x8x8xbf16>, vector<4x8x8xbf16>, vector<4x8x8xf32> -> vector<4x8x8xf32>
    "tpu.trace_stop"() : () -> ()
    %75 = vector.shape_cast %5 : vector<8x8xf32> to vector<1x8x8xf32>
    %76 = vector.broadcast %75 : vector<1x8x8xf32> to vector<4x8x8xf32>
    %77 = arith.addf %74, %76 : vector<4x8x8xf32>
    %cst_21 = arith.constant dense<0xFF800000> : vector<4x8xf32>
    %78 = vector.multi_reduction <maximumf>, %77, %cst_21 [2] : vector<4x8x8xf32> to vector<4x8xf32>
    %79 = vector.shape_cast %78 : vector<4x8xf32> to vector<4x8x1xf32>
    %80 = vector.broadcast %79 : vector<4x8x1xf32> to vector<4x8x8xf32>
    %81 = arith.subf %77, %80 : vector<4x8x8xf32>
    %82 = math.exp %81 : vector<4x8x8xf32>
    %cst_22 = arith.constant dense<0.000000e+00> : vector<4x8xf32>
    %83 = vector.multi_reduction <add>, %82, %cst_22 [2] : vector<4x8x8xf32> to vector<4x8xf32>
    %84 = vector.shape_cast %83 : vector<4x8xf32> to vector<4x8x1xf32>
    %85 = tpu.reciprocal %84 {approx = true} : vector<4x8x1xf32> -> vector<4x8x1xf32>
    %86 = vector.broadcast %85 : vector<4x8x1xf32> to vector<4x8x8xf32>
    %87 = arith.mulf %82, %86 : vector<4x8x8xf32>
    %88 = arith.truncf %70 : vector<4x8x8xf32> to vector<4x8x8xbf16>
    %89 = arith.truncf %87 : vector<4x8x8xf32> to vector<4x8x8xbf16>
    "tpu.trace_start"() <{level = 10 : i32, message = "hek,hqk->heq"}> : () -> ()
    %cst_23 = arith.constant dense<0.000000e+00> : vector<4x8x8xf32>
    %90 = tpu.matmul %88, %89, %cst_23 {dimension_numbers = #tpu.dot_dimension_numbers<[2], [2], [1], [1], [0, 0, 0, 1, 1, 1], [0], [0]>} : vector<4x8x8xbf16>, vector<4x8x8xbf16>, vector<4x8x8xf32> -> vector<4x8x8xf32>
    "tpu.trace_stop"() : () -> ()
    %91 = vector.shape_cast %90 : vector<4x8x8xf32> to vector<32x8xf32>
    %92 = tpu.concatenate %64, %91 in 1 : vector<32x8xf32>, vector<32x8xf32> -> vector<32x16xf32>
    %c0_24 = arith.constant 0 : index
    %c0_25 = arith.constant 0 : index
    %93 = vector.load %arg8[%c0_24, %c0_25] : memref<32x32xbf16, #tpu.memory_space<vmem>>, vector<32x32xbf16>
    %94 = arith.truncf %92 : vector<32x16xf32> to vector<32x16xbf16>
    %cst_26 = arith.constant dense<0.000000e+00> : vector<32x16xf32>
    %95 = tpu.matmul %93, %94, %cst_26 {dimension_numbers = #tpu.dot_dimension_numbers<[1], [0], [0], [1], [0, 0, 1, 1], [], []>} : vector<32x32xbf16>, vector<32x16xbf16>, vector<32x16xf32> -> vector<32x16xf32>
    %c0_27 = arith.constant 0 : index
    %c0_28 = arith.constant 0 : index
    %96 = vector.load %arg9[%c0_27, %c0_28] : memref<32x1xf32, #tpu.memory_space<vmem>>, vector<32x1xf32>
    %97 = vector.broadcast %96 : vector<32x1xf32> to vector<32x16xf32>
    %98 = arith.addf %95, %97 : vector<32x16xf32>
    %c0_29 = arith.constant 0 : index
    %c0_30 = arith.constant 0 : index
    %99 = vector.load %arg2[%c0_29, %c0_30] : memref<32x16xf32, #tpu.memory_space<vmem>>, vector<32x16xf32>
    %c0_31 = arith.constant 0 : index
    %c0_32 = arith.constant 0 : index
    %100 = vector.load %arg10[%c0_31, %c0_32] : memref<32x32xbf16, #tpu.memory_space<vmem>>, vector<32x32xbf16>
    %101 = arith.truncf %98 : vector<32x16xf32> to vector<32x16xbf16>
    %cst_33 = arith.constant dense<0.000000e+00> : vector<32x16xf32>
    %102 = tpu.matmul %100, %101, %cst_33 {dimension_numbers = #tpu.dot_dimension_numbers<[1], [0], [0], [1], [0, 0, 1, 1], [], []>} : vector<32x32xbf16>, vector<32x16xbf16>, vector<32x16xf32> -> vector<32x16xf32>
    %c0_34 = arith.constant 0 : index
    %c0_35 = arith.constant 0 : index
    %103 = vector.load %arg11[%c0_34, %c0_35] : memref<32x1xf32, #tpu.memory_space<vmem>>, vector<32x1xf32>
    %104 = vector.broadcast %103 : vector<32x1xf32> to vector<32x16xf32>
    %105 = arith.addf %102, %104 : vector<32x16xf32>
    %c0_36 = arith.constant 0 : index
    %c0_37 = arith.constant 0 : index
    %106 = vector.load %arg12[%c0_36, %c0_37] : memref<64x32xbf16, #tpu.memory_space<vmem>>, vector<64x32xbf16>
    %107 = arith.truncf %99 : vector<32x16xf32> to vector<32x16xbf16>
    %cst_38 = arith.constant dense<0.000000e+00> : vector<64x16xf32>
    %108 = tpu.matmul %106, %107, %cst_38 {dimension_numbers = #tpu.dot_dimension_numbers<[1], [0], [0], [1], [0, 0, 1, 1], [], []>} : vector<64x32xbf16>, vector<32x16xbf16>, vector<64x16xf32> -> vector<64x16xf32>
    %c0_39 = arith.constant 0 : index
    %c0_40 = arith.constant 0 : index
    %109 = vector.load %arg13[%c0_39, %c0_40] : memref<64x1xf32, #tpu.memory_space<vmem>>, vector<64x1xf32>
    %110 = vector.broadcast %109 : vector<64x1xf32> to vector<64x16xf32>
    %111 = arith.addf %108, %110 : vector<64x16xf32>
    %112 = vector.extract_strided_slice %111 {offsets = [0, 0], sizes = [32, 16], strides = [1, 1]} : vector<64x16xf32> to vector<32x16xf32>
    %113 = vector.extract_strided_slice %111 {offsets = [32, 0], sizes = [32, 16], strides = [1, 1]} : vector<64x16xf32> to vector<32x16xf32>
    %114 = vector.extract_strided_slice %105 {offsets = [0, 0], sizes = [32, 8], strides = [1, 1]} : vector<32x16xf32> to vector<32x8xf32>
    %115 = vector.shape_cast %114 : vector<32x8xf32> to vector<4x8x8xf32>
    %116 = vector.extract_strided_slice %112 {offsets = [0, 0], sizes = [32, 8], strides = [1, 1]} : vector<32x16xf32> to vector<32x8xf32>
    %117 = vector.shape_cast %116 : vector<32x8xf32> to vector<4x8x8xf32>
    %118 = vector.extract_strided_slice %113 {offsets = [0, 0], sizes = [32, 8], strides = [1, 1]} : vector<32x16xf32> to vector<32x8xf32>
    %119 = vector.shape_cast %118 : vector<32x8xf32> to vector<4x8x8xf32>
    %120 = tpu.transpose %115, [0, 2, 1] : vector<4x8x8xf32> -> vector<4x8x8xf32>
    %121 = arith.truncf %120 : vector<4x8x8xf32> to vector<4x8x8xbf16>
    %122 = arith.truncf %117 : vector<4x8x8xf32> to vector<4x8x8xbf16>
    "tpu.trace_start"() <{level = 10 : i32, message = "hqd,hdk->hqk"}> : () -> ()
    %cst_41 = arith.constant dense<0.000000e+00> : vector<4x8x8xf32>
    %123 = tpu.matmul %121, %122, %cst_41 {dimension_numbers = #tpu.dot_dimension_numbers<[2], [1], [1], [2], [0, 0, 0, 1, 1, 2], [0], [0]>} : vector<4x8x8xbf16>, vector<4x8x8xbf16>, vector<4x8x8xf32> -> vector<4x8x8xf32>
    "tpu.trace_stop"() : () -> ()
    %cst_42 = arith.constant dense<0xFF800000> : vector<4x8xf32>
    %124 = vector.multi_reduction <maximumf>, %123, %cst_42 [2] : vector<4x8x8xf32> to vector<4x8xf32>
    %125 = vector.shape_cast %124 : vector<4x8xf32> to vector<4x8x1xf32>
    %126 = vector.broadcast %125 : vector<4x8x1xf32> to vector<4x8x8xf32>
    %127 = arith.subf %123, %126 : vector<4x8x8xf32>
    %128 = math.exp %127 : vector<4x8x8xf32>
    %cst_43 = arith.constant dense<0.000000e+00> : vector<4x8xf32>
    %129 = vector.multi_reduction <add>, %128, %cst_43 [2] : vector<4x8x8xf32> to vector<4x8xf32>
    %130 = vector.shape_cast %129 : vector<4x8xf32> to vector<4x8x1xf32>
    %131 = tpu.reciprocal %130 {approx = true} : vector<4x8x1xf32> -> vector<4x8x1xf32>
    %132 = vector.broadcast %131 : vector<4x8x1xf32> to vector<4x8x8xf32>
    %133 = arith.mulf %128, %132 : vector<4x8x8xf32>
    %134 = arith.truncf %119 : vector<4x8x8xf32> to vector<4x8x8xbf16>
    %135 = arith.truncf %133 : vector<4x8x8xf32> to vector<4x8x8xbf16>
    "tpu.trace_start"() <{level = 10 : i32, message = "hek,hqk->heq"}> : () -> ()
    %cst_44 = arith.constant dense<0.000000e+00> : vector<4x8x8xf32>
    %136 = tpu.matmul %134, %135, %cst_44 {dimension_numbers = #tpu.dot_dimension_numbers<[2], [2], [1], [1], [0, 0, 0, 1, 1, 1], [0], [0]>} : vector<4x8x8xbf16>, vector<4x8x8xbf16>, vector<4x8x8xf32> -> vector<4x8x8xf32>
    "tpu.trace_stop"() : () -> ()
    %137 = vector.shape_cast %136 : vector<4x8x8xf32> to vector<32x8xf32>
    %138 = vector.extract_strided_slice %105 {offsets = [0, 8], sizes = [32, 8], strides = [1, 1]} : vector<32x16xf32> to vector<32x8xf32>
    %139 = vector.shape_cast %138 : vector<32x8xf32> to vector<4x8x8xf32>
    %140 = vector.extract_strided_slice %112 {offsets = [0, 8], sizes = [32, 8], strides = [1, 1]} : vector<32x16xf32> to vector<32x8xf32>
    %141 = vector.shape_cast %140 : vector<32x8xf32> to vector<4x8x8xf32>
    %142 = vector.extract_strided_slice %113 {offsets = [0, 8], sizes = [32, 8], strides = [1, 1]} : vector<32x16xf32> to vector<32x8xf32>
    %143 = vector.shape_cast %142 : vector<32x8xf32> to vector<4x8x8xf32>
    %144 = tpu.transpose %139, [0, 2, 1] : vector<4x8x8xf32> -> vector<4x8x8xf32>
    %145 = arith.truncf %144 : vector<4x8x8xf32> to vector<4x8x8xbf16>
    %146 = arith.truncf %141 : vector<4x8x8xf32> to vector<4x8x8xbf16>
    "tpu.trace_start"() <{level = 10 : i32, message = "hqd,hdk->hqk"}> : () -> ()
    %cst_45 = arith.constant dense<0.000000e+00> : vector<4x8x8xf32>
    %147 = tpu.matmul %145, %146, %cst_45 {dimension_numbers = #tpu.dot_dimension_numbers<[2], [1], [1], [2], [0, 0, 0, 1, 1, 2], [0], [0]>} : vector<4x8x8xbf16>, vector<4x8x8xbf16>, vector<4x8x8xf32> -> vector<4x8x8xf32>
    "tpu.trace_stop"() : () -> ()
    %cst_46 = arith.constant dense<0xFF800000> : vector<4x8xf32>
    %148 = vector.multi_reduction <maximumf>, %147, %cst_46 [2] : vector<4x8x8xf32> to vector<4x8xf32>
    %149 = vector.shape_cast %148 : vector<4x8xf32> to vector<4x8x1xf32>
    %150 = vector.broadcast %149 : vector<4x8x1xf32> to vector<4x8x8xf32>
    %151 = arith.subf %147, %150 : vector<4x8x8xf32>
    %152 = math.exp %151 : vector<4x8x8xf32>
    %cst_47 = arith.constant dense<0.000000e+00> : vector<4x8xf32>
    %153 = vector.multi_reduction <add>, %152, %cst_47 [2] : vector<4x8x8xf32> to vector<4x8xf32>
    %154 = vector.shape_cast %153 : vector<4x8xf32> to vector<4x8x1xf32>
    %155 = tpu.reciprocal %154 {approx = true} : vector<4x8x1xf32> -> vector<4x8x1xf32>
    %156 = vector.broadcast %155 : vector<4x8x1xf32> to vector<4x8x8xf32>
    %157 = arith.mulf %152, %156 : vector<4x8x8xf32>
    %158 = arith.truncf %143 : vector<4x8x8xf32> to vector<4x8x8xbf16>
    %159 = arith.truncf %157 : vector<4x8x8xf32> to vector<4x8x8xbf16>
    "tpu.trace_start"() <{level = 10 : i32, message = "hek,hqk->heq"}> : () -> ()
    %cst_48 = arith.constant dense<0.000000e+00> : vector<4x8x8xf32>
    %160 = tpu.matmul %158, %159, %cst_48 {dimension_numbers = #tpu.dot_dimension_numbers<[2], [2], [1], [1], [0, 0, 0, 1, 1, 1], [0], [0]>} : vector<4x8x8xbf16>, vector<4x8x8xbf16>, vector<4x8x8xf32> -> vector<4x8x8xf32>
    "tpu.trace_stop"() : () -> ()
    %161 = vector.shape_cast %160 : vector<4x8x8xf32> to vector<32x8xf32>
    %162 = tpu.concatenate %137, %161 in 1 : vector<32x8xf32>, vector<32x8xf32> -> vector<32x16xf32>
    %c0_49 = arith.constant 0 : index
    %c0_50 = arith.constant 0 : index
    %163 = vector.load %arg14[%c0_49, %c0_50] : memref<32x32xbf16, #tpu.memory_space<vmem>>, vector<32x32xbf16>
    %164 = arith.truncf %162 : vector<32x16xf32> to vector<32x16xbf16>
    %cst_51 = arith.constant dense<0.000000e+00> : vector<32x16xf32>
    %165 = tpu.matmul %163, %164, %cst_51 {dimension_numbers = #tpu.dot_dimension_numbers<[1], [0], [0], [1], [0, 0, 1, 1], [], []>} : vector<32x32xbf16>, vector<32x16xbf16>, vector<32x16xf32> -> vector<32x16xf32>
    %c0_52 = arith.constant 0 : index
    %c0_53 = arith.constant 0 : index
    %166 = vector.load %arg15[%c0_52, %c0_53] : memref<32x1xf32, #tpu.memory_space<vmem>>, vector<32x1xf32>
    %167 = vector.broadcast %166 : vector<32x1xf32> to vector<32x16xf32>
    %168 = arith.addf %165, %167 : vector<32x16xf32>
    %c0_54 = arith.constant 0 : index
    %c0_55 = arith.constant 0 : index
    %169 = vector.load %arg16[%c0_54, %c0_55] : memref<32x32xbf16, #tpu.memory_space<vmem>>, vector<32x32xbf16>
    %170 = arith.truncf %168 : vector<32x16xf32> to vector<32x16xbf16>
    %cst_56 = arith.constant dense<0.000000e+00> : vector<32x16xf32>
    %171 = tpu.matmul %169, %170, %cst_56 {dimension_numbers = #tpu.dot_dimension_numbers<[1], [0], [0], [1], [0, 0, 1, 1], [], []>} : vector<32x32xbf16>, vector<32x16xbf16>, vector<32x16xf32> -> vector<32x16xf32>
    %c0_57 = arith.constant 0 : index
    %c0_58 = arith.constant 0 : index
    %172 = vector.load %arg17[%c0_57, %c0_58] : memref<32x1xf32, #tpu.memory_space<vmem>>, vector<32x1xf32>
    %173 = vector.broadcast %172 : vector<32x1xf32> to vector<32x16xf32>
    %174 = arith.addf %171, %173 : vector<32x16xf32>
    %cst_59 = arith.constant 0.000000e+00 : f32
    %175 = vector.broadcast %cst_59 : f32 to vector<32x16xf32>
    %176 = arith.maximumf %174, %175 : vector<32x16xf32>
    %c0_60 = arith.constant 0 : index
    %c0_61 = arith.constant 0 : index
    %177 = vector.load %arg18[%c0_60, %c0_61] : memref<32x32xbf16, #tpu.memory_space<vmem>>, vector<32x32xbf16>
    %178 = arith.truncf %176 : vector<32x16xf32> to vector<32x16xbf16>
    %cst_62 = arith.constant dense<0.000000e+00> : vector<32x16xf32>
    %179 = tpu.matmul %177, %178, %cst_62 {dimension_numbers = #tpu.dot_dimension_numbers<[1], [0], [0], [1], [0, 0, 1, 1], [], []>} : vector<32x32xbf16>, vector<32x16xbf16>, vector<32x16xf32> -> vector<32x16xf32>
    %c0_63 = arith.constant 0 : index
    %c0_64 = arith.constant 0 : index
    %180 = vector.load %arg19[%c0_63, %c0_64] : memref<32x1xf32, #tpu.memory_space<vmem>>, vector<32x1xf32>
    %181 = vector.broadcast %180 : vector<32x1xf32> to vector<32x16xf32>
    %182 = arith.addf %179, %181 : vector<32x16xf32>
    %183 = arith.addf %28, %168 : vector<32x16xf32>
    %184 = arith.addf %183, %182 : vector<32x16xf32>
    %c0_65 = arith.constant 0 : index
    %c0_66 = arith.constant 0 : index
    %185 = vector.load %arg3[%c0_65, %c0_66] : memref<1x16xf32, #tpu.memory_space<vmem>>, vector<1x16xf32>
    %186 = vector.broadcast %185 : vector<1x16xf32> to vector<32x16xf32>
    %187 = arith.mulf %184, %186 : vector<32x16xf32>
    %c0_67 = arith.constant 0 : index
    %c0_68 = arith.constant 0 : index
    %188 = vector.load %arg20[%c0_67, %c0_68] : memref<32x16xf32, #tpu.memory_space<vmem>>, vector<32x16xf32>
    tpu.vector_store %arg20[%c0_67, %c0_68], %187 {strides = array<i32>} : memref<32x16xf32, #tpu.memory_space<vmem>>, vector<32x16xf32>,
    return
  }
  func.func @transform_0(%arg0: i32) -> (i32, i32) {
    %c0_i32 = arith.constant 0 : i32
    %c0_i32_0 = arith.constant 0 : i32
    return %c0_i32, %arg0 : i32, i32
  }
  func.func @transform_1(%arg0: i32) -> (i32, i32) {
    %c0_i32 = arith.constant 0 : i32
    %c0_i32_0 = arith.constant 0 : i32
    return %c0_i32, %arg0 : i32, i32
  }
  func.func @transform_2(%arg0: i32) -> (i32, i32) {
    %c0_i32 = arith.constant 0 : i32
    %c0_i32_0 = arith.constant 0 : i32
    return %c0_i32, %arg0 : i32, i32
  }
  func.func @transform_3(%arg0: i32) -> (i32, i32) {
    %c0_i32 = arith.constant 0 : i32
    %c0_i32_0 = arith.constant 0 : i32
    %c0_i32_1 = arith.constant 0 : i32
    return %c0_i32, %c0_i32_0 : i32, i32
  }
  func.func @transform_4(%arg0: i32) -> (i32, i32) {
    %c0_i32 = arith.constant 0 : i32
    %c0_i32_0 = arith.constant 0 : i32
    %c0_i32_1 = arith.constant 0 : i32
    return %c0_i32, %c0_i32_0 : i32, i32
  }
  func.func @transform_5(%arg0: i32) -> (i32, i32) {
    %c0_i32 = arith.constant 0 : i32
    %c0_i32_0 = arith.constant 0 : i32
    %c0_i32_1 = arith.constant 0 : i32
    return %c0_i32, %c0_i32_0 : i32, i32
  }
  func.func @transform_6(%arg0: i32) -> (i32, i32) {
    %c0_i32 = arith.constant 0 : i32
    %c0_i32_0 = arith.constant 0 : i32
    %c0_i32_1 = arith.constant 0 : i32
    return %c0_i32, %c0_i32_0 : i32, i32
  }
  func.func @transform_7(%arg0: i32) -> (i32, i32) {
    %c0_i32 = arith.constant 0 : i32
    %c0_i32_0 = arith.constant 0 : i32
    %c0_i32_1 = arith.constant 0 : i32
    return %c0_i32, %c0_i32_0 : i32, i32
  }
  func.func @transform_8(%arg0: i32) -> (i32, i32) {
    %c0_i32 = arith.constant 0 : i32
    %c0_i32_0 = arith.constant 0 : i32
    %c0_i32_1 = arith.constant 0 : i32
    return %c0_i32, %c0_i32_0 : i32, i32
  }
  func.func @transform_9(%arg0: i32) -> (i32, i32) {
    %c0_i32 = arith.constant 0 : i32
    %c0_i32_0 = arith.constant 0 : i32
    %c0_i32_1 = arith.constant 0 : i32
    return %c0_i32, %c0_i32_0 : i32, i32
  }
  func.func @transform_10(%arg0: i32) -> (i32, i32) {
    %c0_i32 = arith.constant 0 : i32
    %c0_i32_0 = arith.constant 0 : i32
    %c0_i32_1 = arith.constant 0 : i32
    return %c0_i32, %c0_i32_0 : i32, i32
  }
  func.func @transform_11(%arg0: i32) -> (i32, i32) {
    %c0_i32 = arith.constant 0 : i32
    %c0_i32_0 = arith.constant 0 : i32
    %c0_i32_1 = arith.constant 0 : i32
    return %c0_i32, %c0_i32_0 : i32, i32
  }
  func.func @transform_12(%arg0: i32) -> (i32, i32) {
    %c0_i32 = arith.constant 0 : i32
    %c0_i32_0 = arith.constant 0 : i32
    %c0_i32_1 = arith.constant 0 : i32
    return %c0_i32, %c0_i32_0 : i32, i32
  }
  func.func @transform_13(%arg0: i32) -> (i32, i32) {
    %c0_i32 = arith.constant 0 : i32
    %c0_i32_0 = arith.constant 0 : i32
    %c0_i32_1 = arith.constant 0 : i32
    return %c0_i32, %c0_i32_0 : i32, i32
  }
  func.func @transform_14(%arg0: i32) -> (i32, i32) {
    %c0_i32 = arith.constant 0 : i32
    %c0_i32_0 = arith.constant 0 : i32
    %c0_i32_1 = arith.constant 0 : i32
    return %c0_i32, %c0_i32_0 : i32, i32
  }
  func.func @transform_15(%arg0: i32) -> (i32, i32) {
    %c0_i32 = arith.constant 0 : i32
    %c0_i32_0 = arith.constant 0 : i32
    %c0_i32_1 = arith.constant 0 : i32
    return %c0_i32, %c0_i32_0 : i32, i32
  }
  func.func @transform_16(%arg0: i32) -> (i32, i32) {
    %c0_i32 = arith.constant 0 : i32
    %c0_i32_0 = arith.constant 0 : i32
    %c0_i32_1 = arith.constant 0 : i32
    return %c0_i32, %c0_i32_0 : i32, i32
  }
  func.func @transform_17(%arg0: i32) -> (i32, i32) {
    %c0_i32 = arith.constant 0 : i32
    %c0_i32_0 = arith.constant 0 : i32
    %c0_i32_1 = arith.constant 0 : i32
    return %c0_i32, %c0_i32_0 : i32, i32
  }
  func.func @transform_18(%arg0: i32) -> (i32, i32) {
    %c0_i32 = arith.constant 0 : i32
    %c0_i32_0 = arith.constant 0 : i32
    %c0_i32_1 = arith.constant 0 : i32
    return %c0_i32, %c0_i32_0 : i32, i32
  }
  func.func @transform_19(%arg0: i32) -> (i32, i32) {
    %c0_i32 = arith.constant 0 : i32
    %c0_i32_0 = arith.constant 0 : i32
    return %c0_i32, %arg0 : i32, i32
  }
}

</mosaic_0001>

<llo_original>
// kernel: tpu_custom_call.1
$region0: #{tpu_custom_call.1}
  #allocation0 [shape = 'u32[]', space=smem, size = 0x4, offset = 0x4, fixed_abs, tag = 'smem constant byte address 0x4 - core index']
  #allocation1 [shape = 'u32[144,128]{1,0:T(1,128)}', space=vmem, size = 0x12000, scoped, tag = 'internal scratch']
  %s0 = inlined_call_operand.vmem [shape: f32[32,16], index: 0, kind: input, shape index: {}]
  %s1 = inlined_call_operand.vmem [shape: f32[32,16], index: 1, kind: input, shape index: {}]
  %s2 = inlined_call_operand.vmem [shape: f32[1,16], index: 2, kind: input, shape index: {}]
  %s3 = inlined_call_operand.vmem [shape: f32[32,1], index: 3, kind: input, shape index: {}]
  %s4 = inlined_call_operand.vmem [shape: f32[32,1], index: 4, kind: input, shape index: {}]
  %s5 = inlined_call_operand.vmem [shape: bf16[96,32], index: 5, kind: input, shape index: {}]
  %s6 = inlined_call_operand.vmem [shape: f32[96,1], index: 6, kind: input, shape index: {}]
  %s7 = inlined_call_operand.vmem [shape: bf16[32,32], index: 7, kind: input, shape index: {}]
  %s8 = inlined_call_operand.vmem [shape: f32[32,1], index: 8, kind: input, shape index: {}]
  %s9 = inlined_call_operand.vmem [shape: bf16[32,32], index: 9, kind: input, shape index: {}]
  %s10 = inlined_call_operand.vmem [shape: f32[32,1], index: 10, kind: input, shape index: {}]
  %s11 = inlined_call_operand.vmem [shape: bf16[64,32], index: 11, kind: input, shape index: {}]
  %s12 = inlined_call_operand.vmem [shape: f32[64,1], index: 12, kind: input, shape index: {}]
  %s13 = inlined_call_operand.vmem [shape: bf16[32,32], index: 13, kind: input, shape index: {}]
  %s14 = inlined_call_operand.vmem [shape: f32[32,1], index: 14, kind: input, shape index: {}]
  %s15 = inlined_call_operand.vmem [shape: bf16[32,32], index: 15, kind: input, shape index: {}]
  %s16 = inlined_call_operand.vmem [shape: f32[32,1], index: 16, kind: input, shape index: {}]
  %s17 = inlined_call_operand.vmem [shape: bf16[32,32], index: 17, kind: input, shape index: {}]
  %s18 = inlined_call_operand.vmem [shape: f32[32,1], index: 18, kind: input, shape index: {}]
  %s19 = inlined_call_operand.vmem [shape: f32[32,16], index: 19, kind: output, shape index: {}]
  %s20 = sld [smem:[#allocation0]]
  $region86: #{tpu_custom_call.1} parent=0
    _
  %s22 = ssub.s32 1, %s20
  %s23 = scalar_select 0, %s22, %s20
  // Predicated region
  $region2: #{tpu_custom_call.1} parent=0 // pred_check
    _
  $region3: #{tpu_custom_call.1} parent=0 // pred_check_branch
    %25 = sbr.rel (0) target = $region5
  $region4: #{tpu_custom_call.1} parent=0 // pred_region
    _
  $region5: #{tpu_custom_call.1} parent=0 // pred_fallthru
    _
  // Predicated region
  $region6: #{tpu_custom_call.1} parent=0 // pred_check
    _
  $region7: #{tpu_custom_call.1} parent=0 // pred_check_branch
    %27 = sbr.rel (0) target = $region9
  $region8: #{tpu_custom_call.1} parent=0 // pred_region
    _
  $region9: #{tpu_custom_call.1} parent=0 // pred_fallthru
    _
  // Predicated region
  $region10: #{tpu_custom_call.1} parent=0 // pred_check
    _
  $region11: #{tpu_custom_call.1} parent=0 // pred_check_branch
    %29 = sbr.rel (0) target = $region13
  $region12: #{tpu_custom_call.1} parent=0 // pred_region
    _
  $region13: #{tpu_custom_call.1} parent=0 // pred_fallthru
    _
  // Predicated region
  $region14: #{tpu_custom_call.1} parent=0 // pred_check
    _
  $region15: #{tpu_custom_call.1} parent=0 // pred_check_branch
    %31 = sbr.rel (0) target = $region17
  $region16: #{tpu_custom_call.1} parent=0 // pred_region
    _
  $region17: #{tpu_custom_call.1} parent=0 // pred_fallthru
    _
  // Predicated region
  $region18: #{tpu_custom_call.1} parent=0 // pred_check
    _
  $region19: #{tpu_custom_call.1} parent=0 // pred_check_branch
    %33 = sbr.rel (0) target = $region21
  $region20: #{tpu_custom_call.1} parent=0 // pred_region
    _
  $region21: #{tpu_custom_call.1} parent=0 // pred_fallthru
    _
  // Predicated region
  $region22: #{tpu_custom_call.1} parent=0 // pred_check
    _
  $region23: #{tpu_custom_call.1} parent=0 // pred_check_branch
    %35 = sbr.rel (0) target = $region25
  $region24: #{tpu_custom_call.1} parent=0 // pred_region
    _
  $region25: #{tpu_custom_call.1} parent=0 // pred_fallthru
    _
  // Predicated region
  $region26: #{tpu_custom_call.1} parent=0 // pred_check
    _
  $region27: #{tpu_custom_call.1} parent=0 // pred_check_branch
    %37 = sbr.rel (0) target = $region29
  $region28: #{tpu_custom_call.1} parent=0 // pred_region
    _
  $region29: #{tpu_custom_call.1} parent=0 // pred_fallthru
    _
  // Predicated region
  $region30: #{tpu_custom_call.1} parent=0 // pred_check
    _
  $region31: #{tpu_custom_call.1} parent=0 // pred_check_branch
    %39 = sbr.rel (0) target = $region33
  $region32: #{tpu_custom_call.1} parent=0 // pred_region
    _
  $region33: #{tpu_custom_call.1} parent=0 // pred_fallthru
    _
  // Predicated region
  $region34: #{tpu_custom_call.1} parent=0 // pred_check
    _
  $region35: #{tpu_custom_call.1} parent=0 // pred_check_branch
    %41 = sbr.rel (0) target = $region37
  $region36: #{tpu_custom_call.1} parent=0 // pred_region
    _
  $region37: #{tpu_custom_call.1} parent=0 // pred_fallthru
    _
  // Predicated region
  $region38: #{tpu_custom_call.1} parent=0 // pred_check
    _
  $region39: #{tpu_custom_call.1} parent=0 // pred_check_branch
    %43 = sbr.rel (0) target = $region41
  $region40: #{tpu_custom_call.1} parent=0 // pred_region
    _
  $region41: #{tpu_custom_call.1} parent=0 // pred_fallthru
    _
  // Predicated region
  $region42: #{tpu_custom_call.1} parent=0 // pred_check
    _
  $region43: #{tpu_custom_call.1} parent=0 // pred_check_branch
    %45 = sbr.rel (0) target = $region45
  $region44: #{tpu_custom_call.1} parent=0 // pred_region
    _
  $region45: #{tpu_custom_call.1} parent=0 // pred_fallthru
    _
  // Predicated region
  $region46: #{tpu_custom_call.1} parent=0 // pred_check
    _
  $region47: #{tpu_custom_call.1} parent=0 // pred_check_branch
    %47 = sbr.rel (0) target = $region49
  $region48: #{tpu_custom_call.1} parent=0 // pred_region
    _
  $region49: #{tpu_custom_call.1} parent=0 // pred_fallthru
    _
  // Predicated region
  $region50: #{tpu_custom_call.1} parent=0 // pred_check
    _
  $region51: #{tpu_custom_call.1} parent=0 // pred_check_branch
    %49 = sbr.rel (0) target = $region53
  $region52: #{tpu_custom_call.1} parent=0 // pred_region
    _
  $region53: #{tpu_custom_call.1} parent=0 // pred_fallthru
    _
  // Predicated region
  $region54: #{tpu_custom_call.1} parent=0 // pred_check
    _
  $region55: #{tpu_custom_call.1} parent=0 // pred_check_branch
    %51 = sbr.rel (0) target = $region57
  $region56: #{tpu_custom_call.1} parent=0 // pred_region
    _
  $region57: #{tpu_custom_call.1} parent=0 // pred_fallthru
    _
  // Predicated region
  $region58: #{tpu_custom_call.1} parent=0 // pred_check
    _
  $region59: #{tpu_custom_call.1} parent=0 // pred_check_branch
    %53 = sbr.rel (0) target = $region61
  $region60: #{tpu_custom_call.1} parent=0 // pred_region
    _
  $region61: #{tpu_custom_call.1} parent=0 // pred_fallthru
    _
  // Predicated region
  $region62: #{tpu_custom_call.1} parent=0 // pred_check
    _
  $region63: #{tpu_custom_call.1} parent=0 // pred_check_branch
    %55 = sbr.rel (0) target = $region65
  $region64: #{tpu_custom_call.1} parent=0 // pred_region
    _
  $region65: #{tpu_custom_call.1} parent=0 // pred_fallthru
    _
  // Predicated region
  $region66: #{tpu_custom_call.1} parent=0 // pred_check
    _
  $region67: #{tpu_custom_call.1} parent=0 // pred_check_branch
    %57 = sbr.rel (0) target = $region69
  $region68: #{tpu_custom_call.1} parent=0 // pred_region
    _
  $region69: #{tpu_custom_call.1} parent=0 // pred_fallthru
    _
  // Predicated region
  $region70: #{tpu_custom_call.1} parent=0 // pred_check
    _
  $region71: #{tpu_custom_call.1} parent=0 // pred_check_branch
    %59 = sbr.rel (0) target = $region73
  $region72: #{tpu_custom_call.1} parent=0 // pred_region
    _
  $region73: #{tpu_custom_call.1} parent=0 // pred_fallthru
    _
  // Predicated region
  $region74: #{tpu_custom_call.1} parent=0 // pred_check
    _
  $region75: #{tpu_custom_call.1} parent=0 // pred_check_branch
    %61 = sbr.rel (0) target = $region77
  $region76: #{tpu_custom_call.1} parent=0 // pred_region
    _
  $region77: #{tpu_custom_call.1} parent=0 // pred_fallthru
    _
  %v63 = vlaneseq
  %v64 = vshrl.u32 %v63, 7
  %v65 = vlaneseq
  %v66 = vand.u32 %v65, 127
  %vm67 = vcmp.gt.s32.totalorder %v66, %v64
  %v68 = vsel %vm67, -1e+09, 0.0
  %v69 = vld [vmem:[%s0] sm:$0xff]
  %v70 = vld [vmem:[%s0 + $0x8] sm:$0xff]
  %v71 = vld [vmem:[%s0 + $0x10] sm:$0xff]
  %v72 = vld [vmem:[%s0 + $0x18] sm:$0xff]
  %vm73 = vcmask 130048
  %v74 = vsel %vm73, %v69, 0.0
  %v75 = vsel %vm73, %v70, 0.0
  %v76 = vadd.f32 %v74, %v75
  %v77 = vsel %vm73, %v71, 0.0
  %v78 = vadd.f32 %v76, %v77
  %v79 = vsel %vm73, %v72, 0.0
  %v80 = vadd.f32 %v78, %v79
  %v81 = vrot.slane %v80, 4
  %v82 = vadd.f32 %v80, %v81
  %v83 = vrot.slane %v82, 2
  %v84 = vadd.f32 %v82, %v83
  %v85 = vrot.slane %v84, 1
  %v86 = vadd.f32 %v84, %v85
  %v87 = vrcp.pop 32.0
  %v88 = vmul.f32 %v86, %v87
  %v89 = vsub.f32 %v69, %v88
  %v90 = vsub.f32 %v70, %v88
  %v91 = vsub.f32 %v71, %v88
  %v92 = vsub.f32 %v72, %v88
  %v93 = vmul.f32 %v89, %v89
  %v94 = vmul.f32 %v90, %v90
  %v95 = vmul.f32 %v91, %v91
  %v96 = vmul.f32 %v92, %v92
  %v97 = vsel %vm73, %v93, 0.0
  %v98 = vsel %vm73, %v94, 0.0
  %v99 = vadd.f32 %v97, %v98
  %v100 = vsel %vm73, %v95, 0.0
  %v101 = vadd.f32 %v99, %v100
  %v102 = vsel %vm73, %v96, 0.0
  %v103 = vadd.f32 %v101, %v102
  %v104 = vrot.slane %v103, 4
  %v105 = vadd.f32 %v103, %v104
  %v106 = vrot.slane %v105, 2
  %v107 = vadd.f32 %v105, %v106
  %v108 = vrot.slane %v107, 1
  %v109 = vadd.f32 %v107, %v108
  %v110 = vmul.f32 %v109, %v87
  %v111 = vadd.f32 %v110, 1e-08
  %v112 = vrsqrt.pop %v111
  %v113 = vmul.f32 %v89, %v112
  %v114 = vmul.f32 %v90, %v112
  %v115 = vmul.f32 %v91, %v112
  %v116 = vmul.f32 %v92, %v112
  %v117 = vld [vmem:[%s3] sm:$0xff]
  %v118 = vld [vmem:[%s3 + $0x8] sm:$0xff]
  %v119 = vld [vmem:[%s3 + $0x10] sm:$0xff]
  %v120 = vld [vmem:[%s3 + $0x18] sm:$0xff]
  %122 = vset.pattern.permute.xlu0 0
  %123 = vperm.xlu0 %122, %v117
  %v124 = vpop.permute.xlu0 %123
  %127 = vset.pattern.permute.xlu0 0
  %128 = vperm.xlu0 %127, %v118
  %v129 = vpop.permute.xlu0 %128
  %132 = vset.pattern.permute.xlu0 0
  %133 = vperm.xlu0 %132, %v119
  %v134 = vpop.permute.xlu0 %133
  %137 = vset.pattern.permute.xlu0 0
  %138 = vperm.xlu0 %137, %v120
  %v139 = vpop.permute.xlu0 %138
  %v141 = vmul.f32 %v113, %v124
  %v142 = vmul.f32 %v114, %v129
  %v143 = vmul.f32 %v115, %v134
  %v144 = vmul.f32 %v116, %v139
  %v145 = vld [vmem:[%s4] sm:$0xff]
  %v146 = vld [vmem:[%s4 + $0x8] sm:$0xff]
  %v147 = vld [vmem:[%s4 + $0x10] sm:$0xff]
  %v148 = vld [vmem:[%s4 + $0x18] sm:$0xff]
  %150 = vset.pattern.permute.xlu0 0
  %151 = vperm.xlu0 %150, %v145
  %v152 = vpop.permute.xlu0 %151
  %155 = vset.pattern.permute.xlu0 0
  %156 = vperm.xlu0 %155, %v146
  %v157 = vpop.permute.xlu0 %156
  %160 = vset.pattern.permute.xlu0 0
  %161 = vperm.xlu0 %160, %v147
  %v162 = vpop.permute.xlu0 %161
  %165 = vset.pattern.permute.xlu0 0
  %166 = vperm.xlu0 %165, %v148
  %v167 = vpop.permute.xlu0 %166
  %v169 = vadd.f32 %v141, %v152
  %v170 = vadd.f32 %v142, %v157
  %v171 = vadd.f32 %v143, %v162
  %v172 = vadd.f32 %v144, %v167
  %v173 = vld [vmem:[%s5] sm:$0xf]
  %v174 = vld [vmem:[%s5 + $0x4] sm:$0xf]
  %v175 = vld [vmem:[%s5 + $0x8] sm:$0xf]
  %v176 = vld [vmem:[%s5 + $0xc] sm:$0xf]
  %v177 = vld [vmem:[%s5 + $0x10] sm:$0xf]
  %v178 = vld [vmem:[%s5 + $0x14] sm:$0xf]
  %v179 = vld [vmem:[%s5 + $0x18] sm:$0xf]
  %v180 = vld [vmem:[%s5 + $0x1c] sm:$0xf]
  %v181 = vld [vmem:[%s5 + $0x20] sm:$0xf]
  %v182 = vld [vmem:[%s5 + $0x24] sm:$0xf]
  %v183 = vld [vmem:[%s5 + $0x28] sm:$0xf]
  %v184 = vld [vmem:[%s5 + $0x2c] sm:$0xf]
  %v185 = vpack.c.bf16 %v170, %v169
  %v186 = vpack.c.bf16 %v172, %v171
  %v187 = vld [vmem:[%s6] sm:$0xff]
  %v188 = vld [vmem:[%s6 + $0x8] sm:$0xff]
  %v189 = vld [vmem:[%s6 + $0x10] sm:$0xff]
  %v190 = vld [vmem:[%s6 + $0x18] sm:$0xff]
  %v191 = vld [vmem:[%s6 + $0x20] sm:$0xff]
  %v192 = vld [vmem:[%s6 + $0x28] sm:$0xff]
  %v193 = vld [vmem:[%s6 + $0x30] sm:$0xff]
  %v194 = vld [vmem:[%s6 + $0x38] sm:$0xff]
  %v195 = vld [vmem:[%s6 + $0x40] sm:$0xff]
  %v196 = vld [vmem:[%s6 + $0x48] sm:$0xff]
  %v197 = vld [vmem:[%s6 + $0x50] sm:$0xff]
  %v198 = vld [vmem:[%s6 + $0x58] sm:$0xff]
  %200 = vset.pattern.permute.xlu0 0
  %201 = vperm.xlu0 %200, %v187
  %v202 = vpop.permute.xlu0 %201
  %205 = vset.pattern.permute.xlu0 0
  %206 = vperm.xlu0 %205, %v188
  %v207 = vpop.permute.xlu0 %206
  %210 = vset.pattern.permute.xlu0 0
  %211 = vperm.xlu0 %210, %v189
  %v212 = vpop.permute.xlu0 %211
  %215 = vset.pattern.permute.xlu0 0
  %216 = vperm.xlu0 %215, %v190
  %v217 = vpop.permute.xlu0 %216
  %220 = vset.pattern.permute.xlu0 0
  %221 = vperm.xlu0 %220, %v191
  %v222 = vpop.permute.xlu0 %221
  %225 = vset.pattern.permute.xlu0 0
  %226 = vperm.xlu0 %225, %v192
  %v227 = vpop.permute.xlu0 %226
  %230 = vset.pattern.permute.xlu0 0
  %231 = vperm.xlu0 %230, %v193
  %v232 = vpop.permute.xlu0 %231
  %235 = vset.pattern.permute.xlu0 0
  %236 = vperm.xlu0 %235, %v194
  %v237 = vpop.permute.xlu0 %236
  %240 = vset.pattern.permute.xlu0 0
  %241 = vperm.xlu0 %240, %v195
  %v242 = vpop.permute.xlu0 %241
  %245 = vset.pattern.permute.xlu0 0
  %246 = vperm.xlu0 %245, %v196
  %v247 = vpop.permute.xlu0 %246
  %250 = vset.pattern.permute.xlu0 0
  %251 = vperm.xlu0 %250, %v197
  %v252 = vpop.permute.xlu0 %251
  %255 = vset.pattern.permute.xlu0 0
  %256 = vperm.xlu0 %255, %v198
  %v257 = vpop.permute.xlu0 %256
  %v271 = vunpack.c.l.b16 %v173
  %v272 = vunpack.c.l.b16 %v174
  %v273 = vunpack.c.l.b16 %v175
  %v274 = vunpack.c.l.b16 %v176
  %v275 = vunpack.c.l.b16 %v177
  %v276 = vunpack.c.l.b16 %v178
  %v277 = vunpack.c.l.b16 %v179
  %v278 = vunpack.c.l.b16 %v180
  %v279 = vunpack.c.l.b16 %v181
  %v280 = vunpack.c.l.b16 %v182
  %v281 = vunpack.c.l.b16 %v183
  %v282 = vunpack.c.l.b16 %v184
  %v283 = vpack.c.b16 %v272, %v271
  %v284 = vpack.c.b16 %v274, %v273
  %v285 = vpack.c.b16 %v276, %v275
  %v286 = vpack.c.b16 %v278, %v277
  %v287 = vpack.c.b16 %v280, %v279
  %v288 = vpack.c.b16 %v282, %v281
  %vm289 = vcmask 261120
  %v291 = vsel %vm289, %v283, 0
  %v294 = vsel %vm289, %v284, 0
  %v297 = vsel %vm289, %v285, 0
  %v300 = vsel %vm289, %v286, 0
  %v303 = vsel %vm289, %v287, 0
  %v306 = vsel %vm289, %v288, 0
  %308 = vmatprep.subr.bf16.mxu0 0
  %309 = vmatpush1.bf16.msra.mxu0 0
  %310 = vmatprep.subr.bf16.mxu0 0
  %311 = vmatpush1.bf16.msra.mxu0 0
  %312 = vmatprep.subr.bf16.mxu0 0
  %313 = vmatpush1.bf16.msra.mxu0 0
  %314 = vmatprep.subr.bf16.mxu0 0
  %315 = vmatpush1.bf16.msra.mxu0 0
  %316 = vmatprep.subr.bf16.mxu0 0
  %317 = vmatpush1.bf16.msra.mxu0 0
  %318 = vmatprep.subr.bf16.mxu0 0
  %319 = vmatpush1.bf16.msra.mxu0 0
  %320 = vmatprep.subr.bf16.mxu0 0
  %321 = vmatpush1.bf16.msra.mxu0 %v186
  %322 = vmatprep.subr.bf16.mxu0 0
  %323 = vmatpush1.bf16.msra.mxu0 %v185
  %324 = vmatprep.subr.bf16.mxu0 0
  %325 = vmatpush2.bf16.msra.mxu0 0
  %326 = vmatprep.subr.bf16.mxu0 0
  %327 = vmatpush2.bf16.msra.mxu0 0
  %328 = vmatprep.subr.bf16.mxu0 0
  %329 = vmatpush2.bf16.msra.mxu0 0
  %330 = vmatprep.subr.bf16.mxu0 0
  %331 = vmatpush2.bf16.msra.mxu0 0
  %332 = vmatprep.subr.bf16.mxu0 0
  %333 = vmatpush2.bf16.msra.mxu0 0
  %334 = vmatprep.subr.bf16.mxu0 0
  %335 = vmatpush2.bf16.msra.mxu0 0
  %336 = vmatprep.subr.bf16.mxu0 0
  %337 = vmatpush2.bf16.msra.mxu0 0
  %338 = vmatprep.subr.bf16.mxu0 0
  %339 = vmatpush2.bf16.msra.mxu0 0
  %340 = vmatprep.mubr.bf16.mxu0 0
  %341 = vmatmul.mubr.bf16.gmra.mxu0 %v291
  %v342 = vpop.f32.mrf.mxu0
  %v343 = vadd.f32 %v202, %v342
  %v344 = vpop.f32.mrf.mxu0
  %v345 = vpop.f32.mrf.mxu0
  %v346 = vadd.f32 %v207, %v345
  %v347 = vpop.f32.mrf.mxu0
  %348 = vmatprep.mubr.bf16.mxu0 0
  %349 = vmatmul.mubr.bf16.gmra.mxu0 %v294
  %v350 = vpop.f32.mrf.mxu0
  %v351 = vadd.f32 %v212, %v350
  %v352 = vpop.f32.mrf.mxu0
  %v353 = vpop.f32.mrf.mxu0
  %v354 = vadd.f32 %v217, %v353
  %v355 = vpop.f32.mrf.mxu0
  %356 = vmatprep.mubr.bf16.mxu0 0
  %357 = vmatmul.mubr.bf16.gmra.mxu0 %v297
  %v358 = vpop.f32.mrf.mxu0
  %v359 = vadd.f32 %v222, %v358
  %v360 = vpop.f32.mrf.mxu0
  %v361 = vpop.f32.mrf.mxu0
  %v362 = vadd.f32 %v227, %v361
  %v363 = vpop.f32.mrf.mxu0
  %364 = vmatprep.mubr.bf16.mxu0 0
  %365 = vmatmul.mubr.bf16.gmra.mxu0 %v300
  %v366 = vpop.f32.mrf.mxu0
  %v367 = vadd.f32 %v232, %v366
  %v368 = vpop.f32.mrf.mxu0
  %v369 = vpop.f32.mrf.mxu0
  %v370 = vadd.f32 %v237, %v369
  %v371 = vpop.f32.mrf.mxu0
  %372 = vmatprep.mubr.bf16.mxu0 0
  %373 = vmatmul.mubr.bf16.gmra.mxu0 %v303
  %v374 = vpop.f32.mrf.mxu0
  %v375 = vadd.f32 %v242, %v374
  %v376 = vpop.f32.mrf.mxu0
  %v377 = vpop.f32.mrf.mxu0
  %v378 = vadd.f32 %v247, %v377
  %v379 = vpop.f32.mrf.mxu0
  %380 = vmatprep.mubr.bf16.mxu0 0
  %381 = vmatmul.mubr.bf16.gmra.mxu0 %v306
  %v382 = vpop.f32.mrf.mxu0
  %v383 = vadd.f32 %v252, %v382
  %v384 = vpop.f32.mrf.mxu0
  %v385 = vpop.f32.mrf.mxu0
  %v386 = vadd.f32 %v257, %v385
  %v387 = vpop.f32.mrf.mxu0
  %388 = vdwg.mxu0
  %389 = vxpose.xlu0.b32.start [1/16] %v343, 128
  %390 = vxpose.xlu0.b32.cont [2/16] 0.0, 128
  %391 = vxpose.xlu0.b32.cont [3/16] 0.0, 128
  %392 = vxpose.xlu0.b32.cont [4/16] 0.0, 128
  %393 = vxpose.xlu0.b32.cont [5/16] 0.0, 128
  %394 = vxpose.xlu0.b32.cont [6/16] 0.0, 128
  %395 = vxpose.xlu0.b32.cont [7/16] 0.0, 128
  %396 = vxpose.xlu0.b32.cont [8/16] 0.0, 128
  %397 = vxpose.xlu0.b32.cont [9/16] 0.0, 128
  %398 = vxpose.xlu0.b32.cont [10/16] 0.0, 128
  %399 = vxpose.xlu0.b32.cont [11/16] 0.0, 128
  %400 = vxpose.xlu0.b32.cont [12/16] 0.0, 128
  %401 = vxpose.xlu0.b32.cont [13/16] 0.0, 128
  %402 = vxpose.xlu0.b32.cont [14/16] 0.0, 128
  %403 = vxpose.xlu0.b32.cont [15/16] 0.0, 128
  %404 = vxpose.xlu0.b32.end [16/16] 0.0, 128
  %v405 = vpop.trf.xlu0
  %v406 = vpop.trf.xlu0
  %v407 = vpop.trf.xlu0
  %v408 = vpop.trf.xlu0
  %v409 = vpop.trf.xlu0
  %v410 = vpop.trf.xlu0
  %v411 = vpop.trf.xlu0
  %v412 = vpop.trf.xlu0
  %v413 = vpop.trf.xlu0
  %v414 = vpop.trf.xlu0
  %v415 = vpop.trf.xlu0
  %v416 = vpop.trf.xlu0
  %v417 = vpop.trf.xlu0
  %v418 = vpop.trf.xlu0
  %v419 = vpop.trf.xlu0
  %v420 = vpop.trf.xlu0
  %421 = vxpose.xlu0.b32.start [1/16] %v346, 128
  %422 = vxpose.xlu0.b32.cont [2/16] 0.0, 128
  %423 = vxpose.xlu0.b32.cont [3/16] 0.0, 128
  %424 = vxpose.xlu0.b32.cont [4/16] 0.0, 128
  %425 = vxpose.xlu0.b32.cont [5/16] 0.0, 128
  %426 = vxpose.xlu0.b32.cont [6/16] 0.0, 128
  %427 = vxpose.xlu0.b32.cont [7/16] 0.0, 128
  %428 = vxpose.xlu0.b32.cont [8/16] 0.0, 128
  %429 = vxpose.xlu0.b32.cont [9/16] 0.0, 128
  %430 = vxpose.xlu0.b32.cont [10/16] 0.0, 128
  %431 = vxpose.xlu0.b32.cont [11/16] 0.0, 128
  %432 = vxpose.xlu0.b32.cont [12/16] 0.0, 128
  %433 = vxpose.xlu0.b32.cont [13/16] 0.0, 128
  %434 = vxpose.xlu0.b32.cont [14/16] 0.0, 128
  %435 = vxpose.xlu0.b32.cont [15/16] 0.0, 128
  %436 = vxpose.xlu0.b32.end [16/16] 0.0, 128
  %v437 = vpop.trf.xlu0
  %v438 = vpop.trf.xlu0
  %v439 = vpop.trf.xlu0
  %v440 = vpop.trf.xlu0
  %v441 = vpop.trf.xlu0
  %v442 = vpop.trf.xlu0
  %v443 = vpop.trf.xlu0
  %v444 = vpop.trf.xlu0
  %v445 = vpop.trf.xlu0
  %v446 = vpop.trf.xlu0
  %v447 = vpop.trf.xlu0
  %v448 = vpop.trf.xlu0
  %v449 = vpop.trf.xlu0
  %v450 = vpop.trf.xlu0
  %v451 = vpop.trf.xlu0
  %v452 = vpop.trf.xlu0
  %453 = vxpose.xlu0.b32.start [1/16] %v351, 128
  %454 = vxpose.xlu0.b32.cont [2/16] 0.0, 128
  %455 = vxpose.xlu0.b32.cont [3/16] 0.0, 128
  %456 = vxpose.xlu0.b32.cont [4/16] 0.0, 128
  %457 = vxpose.xlu0.b32.cont [5/16] 0.0, 128
  %458 = vxpose.xlu0.b32.cont [6/16] 0.0, 128
  %459 = vxpose.xlu0.b32.cont [7/16] 0.0, 128
  %460 = vxpose.xlu0.b32.cont [8/16] 0.0, 128
  %461 = vxpose.xlu0.b32.cont [9/16] 0.0, 128
  %462 = vxpose.xlu0.b32.cont [10/16] 0.0, 128
  %463 = vxpose.xlu0.b32.cont [11/16] 0.0, 128
  %464 = vxpose.xlu0.b32.cont [12/16] 0.0, 128
  %465 = vxpose.xlu0.b32.cont [13/16] 0.0, 128
  %466 = vxpose.xlu0.b32.cont [14/16] 0.0, 128
  %467 = vxpose.xlu0.b32.cont [15/16] 0.0, 128
  %468 = vxpose.xlu0.b32.end [16/16] 0.0, 128
  %v469 = vpop.trf.xlu0
  %v470 = vpop.trf.xlu0
  %v471 = vpop.trf.xlu0
  %v472 = vpop.trf.xlu0
  %v473 = vpop.trf.xlu0
  %v474 = vpop.trf.xlu0
  %v475 = vpop.trf.xlu0
  %v476 = vpop.trf.xlu0
  %v477 = vpop.trf.xlu0
  %v478 = vpop.trf.xlu0
  %v479 = vpop.trf.xlu0
  %v480 = vpop.trf.xlu0
  %v481 = vpop.trf.xlu0
  %v482 = vpop.trf.xlu0
  %v483 = vpop.trf.xlu0
  %v484 = vpop.trf.xlu0
  %485 = vxpose.xlu0.b32.start [1/16] %v354, 128
  %486 = vxpose.xlu0.b32.cont [2/16] 0.0, 128
  %487 = vxpose.xlu0.b32.cont [3/16] 0.0, 128
  %488 = vxpose.xlu0.b32.cont [4/16] 0.0, 128
  %489 = vxpose.xlu0.b32.cont [5/16] 0.0, 128
  %490 = vxpose.xlu0.b32.cont [6/16] 0.0, 128
  %491 = vxpose.xlu0.b32.cont [7/16] 0.0, 128
  %492 = vxpose.xlu0.b32.cont [8/16] 0.0, 128
  %493 = vxpose.xlu0.b32.cont [9/16] 0.0, 128
  %494 = vxpose.xlu0.b32.cont [10/16] 0.0, 128
  %495 = vxpose.xlu0.b32.cont [11/16] 0.0, 128
  %496 = vxpose.xlu0.b32.cont [12/16] 0.0, 128
  %497 = vxpose.xlu0.b32.cont [13/16] 0.0, 128
  %498 = vxpose.xlu0.b32.cont [14/16] 0.0, 128
  %499 = vxpose.xlu0.b32.cont [15/16] 0.0, 128
  %500 = vxpose.xlu0.b32.end [16/16] 0.0, 128
  %v501 = vpop.trf.xlu0
  %v502 = vpop.trf.xlu0
  %v503 = vpop.trf.xlu0
  %v504 = vpop.trf.xlu0
  %v505 = vpop.trf.xlu0
  %v506 = vpop.trf.xlu0
  %v507 = vpop.trf.xlu0
  %v508 = vpop.trf.xlu0
  %v509 = vpop.trf.xlu0
  %v510 = vpop.trf.xlu0
  %v511 = vpop.trf.xlu0
  %v512 = vpop.trf.xlu0
  %v513 = vpop.trf.xlu0
  %v514 = vpop.trf.xlu0
  %v515 = vpop.trf.xlu0
  %v516 = vpop.trf.xlu0
  %v517 = vpack.c.bf16 %v405, %v405
  %v518 = vpack.c.bf16 %v437, %v437
  %v519 = vpack.c.bf16 %v469, %v469
  %v520 = vpack.c.bf16 %v501, %v501
  %v521 = vpack.c.bf16 %v359, %v359
  %v522 = vpack.c.bf16 %v362, %v362
  %v523 = vpack.c.bf16 %v367, %v367
  %v524 = vpack.c.bf16 %v370, %v370
  %vm525 = vcmask 64512
  %v527 = vsel %vm525, %v517, 0
  %vm529 = vcmask 1043456
  %v531 = vsel %vm529, %v521, 0
  %533 = vmatprep.subr.bf16.mxu0 0
  %534 = vmatpush1.bf16.msra.mxu0 0
  %535 = vmatprep.subr.bf16.mxu0 0
  %536 = vmatpush1.bf16.msra.mxu0 0
  %537 = vmatprep.subr.bf16.mxu0 0
  %538 = vmatpush1.bf16.msra.mxu0 0
  %539 = vmatprep.subr.bf16.mxu0 0
  %540 = vmatpush1.bf16.msra.mxu0 0
  %541 = vmatprep.subr.bf16.mxu0 0
  %542 = vmatpush1.bf16.msra.mxu0 0
  %543 = vmatprep.subr.bf16.mxu0 0
  %544 = vmatpush1.bf16.msra.mxu0 0
  %545 = vmatprep.subr.bf16.mxu0 0
  %546 = vmatpush1.bf16.msra.mxu0 0
  %547 = vmatprep.subr.bf16.mxu0 0
  %548 = vmatpush1.bf16.msra.mxu0 %v531
  %549 = vmatprep.subr.bf16.mxu0 0
  %550 = vmatpush2.bf16.msra.mxu0 0
  %551 = vmatprep.subr.bf16.mxu0 0
  %552 = vmatpush2.bf16.msra.mxu0 0
  %553 = vmatprep.subr.bf16.mxu0 0
  %554 = vmatpush2.bf16.msra.mxu0 0
  %555 = vmatprep.subr.bf16.mxu0 0
  %556 = vmatpush2.bf16.msra.mxu0 0
  %557 = vmatprep.subr.bf16.mxu0 0
  %558 = vmatpush2.bf16.msra.mxu0 0
  %559 = vmatprep.subr.bf16.mxu0 0
  %560 = vmatpush2.bf16.msra.mxu0 0
  %561 = vmatprep.subr.bf16.mxu0 0
  %562 = vmatpush2.bf16.msra.mxu0 0
  %563 = vmatprep.subr.bf16.mxu0 0
  %564 = vmatpush2.bf16.msra.mxu0 0
  %565 = vmatprep.mubr.bf16.mxu0 0
  %566 = vmatmul.mubr.bf16.gmra.mxu0 %v527
  %v567 = vpop.f32.mrf.mxu0
  %v568 = vadd.f32 %v68, %v567
  %v569 = vpop.f32.mrf.mxu0
  %v570 = vpop.f32.mrf.mxu0
  %v571 = vpop.f32.mrf.mxu0
  %572 = vdwg.mxu0
  %v574 = vsel %vm525, %v518, 0
  %v577 = vsel %vm529, %v522, 0
  %579 = vmatprep.subr.bf16.mxu0 0
  %580 = vmatpush1.bf16.msra.mxu0 0
  %581 = vmatprep.subr.bf16.mxu0 0
  %582 = vmatpush1.bf16.msra.mxu0 0
  %583 = vmatprep.subr.bf16.mxu0 0
  %584 = vmatpush1.bf16.msra.mxu0 0
  %585 = vmatprep.subr.bf16.mxu0 0
  %586 = vmatpush1.bf16.msra.mxu0 0
  %587 = vmatprep.subr.bf16.mxu0 0
  %588 = vmatpush1.bf16.msra.mxu0 0
  %589 = vmatprep.subr.bf16.mxu0 0
  %590 = vmatpush1.bf16.msra.mxu0 0
  %591 = vmatprep.subr.bf16.mxu0 0
  %592 = vmatpush1.bf16.msra.mxu0 0
  %593 = vmatprep.subr.bf16.mxu0 0
  %594 = vmatpush1.bf16.msra.mxu0 %v577
  %595 = vmatprep.subr.bf16.mxu0 0
  %596 = vmatpush2.bf16.msra.mxu0 0
  %597 = vmatprep.subr.bf16.mxu0 0
  %598 = vmatpush2.bf16.msra.mxu0 0
  %599 = vmatprep.subr.bf16.mxu0 0
  %600 = vmatpush2.bf16.msra.mxu0 0
  %601 = vmatprep.subr.bf16.mxu0 0
  %602 = vmatpush2.bf16.msra.mxu0 0
  %603 = vmatprep.subr.bf16.mxu0 0
  %604 = vmatpush2.bf16.msra.mxu0 0
  %605 = vmatprep.subr.bf16.mxu0 0
  %606 = vmatpush2.bf16.msra.mxu0 0
  %607 = vmatprep.subr.bf16.mxu0 0
  %608 = vmatpush2.bf16.msra.mxu0 0
  %609 = vmatprep.subr.bf16.mxu0 0
  %610 = vmatpush2.bf16.msra.mxu0 0
  %611 = vmatprep.mubr.bf16.mxu0 0
  %612 = vmatmul.mubr.bf16.gmra.mxu0 %v574
  %v613 = vpop.f32.mrf.mxu0
  %v614 = vadd.f32 %v68, %v613
  %v615 = vpop.f32.mrf.mxu0
  %v616 = vpop.f32.mrf.mxu0
  %v617 = vpop.f32.mrf.mxu0
  %618 = vdwg.mxu0
  %v620 = vsel %vm525, %v519, 0
  %v623 = vsel %vm529, %v523, 0
  %625 = vmatprep.subr.bf16.mxu0 0
  %626 = vmatpush1.bf16.msra.mxu0 0
  %627 = vmatprep.subr.bf16.mxu0 0
  %628 = vmatpush1.bf16.msra.mxu0 0
  %629 = vmatprep.subr.bf16.mxu0 0
  %630 = vmatpush1.bf16.msra.mxu0 0
  %631 = vmatprep.subr.bf16.mxu0 0
  %632 = vmatpush1.bf16.msra.mxu0 0
  %633 = vmatprep.subr.bf16.mxu0 0
  %634 = vmatpush1.bf16.msra.mxu0 0
  %635 = vmatprep.subr.bf16.mxu0 0
  %636 = vmatpush1.bf16.msra.mxu0 0
  %637 = vmatprep.subr.bf16.mxu0 0
  %638 = vmatpush1.bf16.msra.mxu0 0
  %639 = vmatprep.subr.bf16.mxu0 0
  %640 = vmatpush1.bf16.msra.mxu0 %v623
  %641 = vmatprep.subr.bf16.mxu0 0
  %642 = vmatpush2.bf16.msra.mxu0 0
  %643 = vmatprep.subr.bf16.mxu0 0
  %644 = vmatpush2.bf16.msra.mxu0 0
  %645 = vmatprep.subr.bf16.mxu0 0
  %646 = vmatpush2.bf16.msra.mxu0 0
  %647 = vmatprep.subr.bf16.mxu0 0
  %648 = vmatpush2.bf16.msra.mxu0 0
  %649 = vmatprep.subr.bf16.mxu0 0
  %650 = vmatpush2.bf16.msra.mxu0 0
  %651 = vmatprep.subr.bf16.mxu0 0
  %652 = vmatpush2.bf16.msra.mxu0 0
  %653 = vmatprep.subr.bf16.mxu0 0
  %654 = vmatpush2.bf16.msra.mxu0 0
  %655 = vmatprep.subr.bf16.mxu0 0
  %656 = vmatpush2.bf16.msra.mxu0 0
  %657 = vmatprep.mubr.bf16.mxu0 0
  %658 = vmatmul.mubr.bf16.gmra.mxu0 %v620
  %v659 = vpop.f32.mrf.mxu0
  %v660 = vadd.f32 %v68, %v659
  %v661 = vpop.f32.mrf.mxu0
  %v662 = vpop.f32.mrf.mxu0
  %v663 = vpop.f32.mrf.mxu0
  %664 = vdwg.mxu0
  %v666 = vsel %vm525, %v520, 0
  %v669 = vsel %vm529, %v524, 0
  %671 = vmatprep.subr.bf16.mxu0 0
  %672 = vmatpush1.bf16.msra.mxu0 0
  %673 = vmatprep.subr.bf16.mxu0 0
  %674 = vmatpush1.bf16.msra.mxu0 0
  %675 = vmatprep.subr.bf16.mxu0 0
  %676 = vmatpush1.bf16.msra.mxu0 0
  %677 = vmatprep.subr.bf16.mxu0 0
  %678 = vmatpush1.bf16.msra.mxu0 0
  %679 = vmatprep.subr.bf16.mxu0 0
  %680 = vmatpush1.bf16.msra.mxu0 0
  %681 = vmatprep.subr.bf16.mxu0 0
  %682 = vmatpush1.bf16.msra.mxu0 0
  %683 = vmatprep.subr.bf16.mxu0 0
  %684 = vmatpush1.bf16.msra.mxu0 0
  %685 = vmatprep.subr.bf16.mxu0 0
  %686 = vmatpush1.bf16.msra.mxu0 %v669
  %687 = vmatprep.subr.bf16.mxu0 0
  %688 = vmatpush2.bf16.msra.mxu0 0
  %689 = vmatprep.subr.bf16.mxu0 0
  %690 = vmatpush2.bf16.msra.mxu0 0
  %691 = vmatprep.subr.bf16.mxu0 0
  %692 = vmatpush2.bf16.msra.mxu0 0
  %693 = vmatprep.subr.bf16.mxu0 0
  %694 = vmatpush2.bf16.msra.mxu0 0
  %695 = vmatprep.subr.bf16.mxu0 0
  %696 = vmatpush2.bf16.msra.mxu0 0
  %697 = vmatprep.subr.bf16.mxu0 0
  %698 = vmatpush2.bf16.msra.mxu0 0
  %699 = vmatprep.subr.bf16.mxu0 0
  %700 = vmatpush2.bf16.msra.mxu0 0
  %701 = vmatprep.subr.bf16.mxu0 0
  %702 = vmatpush2.bf16.msra.mxu0 0
  %703 = vmatprep.mubr.bf16.mxu0 0
  %704 = vmatmul.mubr.bf16.gmra.mxu0 %v666
  %v705 = vpop.f32.mrf.mxu0
  %v706 = vadd.f32 %v68, %v705
  %v707 = vpop.f32.mrf.mxu0
  %v708 = vpop.f32.mrf.mxu0
  %v709 = vpop.f32.mrf.mxu0
  %710 = vdwg.mxu0
  %v711 = vsel %vm525, %v568, -inf
  %712 = vmax.xlane.f32.xlu0 %v711
  %v713 = vpop.xlane.xlu0 %712
  %v714 = vsel %vm525, %v614, -inf
  %715 = vmax.xlane.f32.xlu0 %v714
  %v716 = vpop.xlane.xlu0 %715
  %v717 = vsel %vm525, %v660, -inf
  %718 = vmax.xlane.f32.xlu0 %v717
  %v719 = vpop.xlane.xlu0 %718
  %v720 = vsel %vm525, %v706, -inf
  %721 = vmax.xlane.f32.xlu0 %v720
  %v722 = vpop.xlane.xlu0 %721
  %v723 = vsub.f32 %v568, %v713
  %v724 = vsub.f32 %v614, %v716
  %v725 = vsub.f32 %v660, %v719
  %v726 = vsub.f32 %v706, %v722
  %v727 = vmul.f32 %v723, 1.442695
  %v728 = vpow.pop %v727
  %v729 = vmul.f32 %v724, 1.442695
  %v730 = vpow.pop %v729
  %v731 = vmul.f32 %v725, 1.442695
  %v732 = vpow.pop %v731
  %v733 = vmul.f32 %v726, 1.442695
  %v734 = vpow.pop %v733
  %v735 = vsel %vm525, %v728, 0.0
  %736 = vadd.xlane.f32.xlu0 %v735
  %v737 = vpop.xlane.xlu0 %736
  %v738 = vsel %vm525, %v730, 0.0
  %739 = vadd.xlane.f32.xlu0 %v738
  %v740 = vpop.xlane.xlu0 %739
  %v741 = vsel %vm525, %v732, 0.0
  %742 = vadd.xlane.f32.xlu0 %v741
  %v743 = vpop.xlane.xlu0 %742
  %v744 = vsel %vm525, %v734, 0.0
  %745 = vadd.xlane.f32.xlu0 %v744
  %v746 = vpop.xlane.xlu0 %745
  %v747 = vrcp.pop %v737
  %v748 = vrcp.pop %v740
  %v749 = vrcp.pop %v743
  %v750 = vrcp.pop %v746
  %v751 = vmul.f32 %v728, %v747
  %v752 = vmul.f32 %v730, %v748
  %v753 = vmul.f32 %v732, %v749
  %v754 = vmul.f32 %v734, %v750
  %v755 = vpack.c.bf16 %v375, %v375
  %v756 = vpack.c.bf16 %v378, %v378
  %v757 = vpack.c.bf16 %v383, %v383
  %v758 = vpack.c.bf16 %v386, %v386
  %v759 = vpack.c.bf16 %v751, %v751
  %v760 = vpack.c.bf16 %v752, %v752
  %v761 = vpack.c.bf16 %v753, %v753
  %v762 = vpack.c.bf16 %v754, %v754
  %v764 = vsel %vm525, %v755, 0
  %v767 = vsel %vm525, %v759, 0
  %769 = vmatprep.subr.bf16.mxu0 0
  %770 = vmatpush1.bf16.xpose.msra.mxu0 0
  %771 = vmatprep.subr.bf16.mxu0 0
  %772 = vmatpush1.bf16.xpose.msra.mxu0 0
  %773 = vmatprep.subr.bf16.mxu0 0
  %774 = vmatpush1.bf16.xpose.msra.mxu0 0
  %775 = vmatprep.subr.bf16.mxu0 0
  %776 = vmatpush1.bf16.xpose.msra.mxu0 0
  %777 = vmatprep.subr.bf16.mxu0 0
  %778 = vmatpush1.bf16.xpose.msra.mxu0 0
  %779 = vmatprep.subr.bf16.mxu0 0
  %780 = vmatpush1.bf16.xpose.msra.mxu0 0
  %781 = vmatprep.subr.bf16.mxu0 0
  %782 = vmatpush1.bf16.xpose.msra.mxu0 0
  %783 = vmatprep.subr.bf16.mxu0 0
  %784 = vmatpush1.bf16.xpose.msra.mxu0 %v767
  %785 = vmatprep.subr.bf16.mxu0 0
  %786 = vmatpush2.bf16.xpose.msra.mxu0 0
  %787 = vmatprep.subr.bf16.mxu0 0
  %788 = vmatpush2.bf16.xpose.msra.mxu0 0
  %789 = vmatprep.subr.bf16.mxu0 0
  %790 = vmatpush2.bf16.xpose.msra.mxu0 0
  %791 = vmatprep.subr.bf16.mxu0 0
  %792 = vmatpush2.bf16.xpose.msra.mxu0 0
  %793 = vmatprep.subr.bf16.mxu0 0
  %794 = vmatpush2.bf16.xpose.msra.mxu0 0
  %795 = vmatprep.subr.bf16.mxu0 0
  %796 = vmatpush2.bf16.xpose.msra.mxu0 0
  %797 = vmatprep.subr.bf16.mxu0 0
  %798 = vmatpush2.bf16.xpose.msra.mxu0 0
  %799 = vmatprep.subr.bf16.mxu0 0
  %800 = vmatpush2.bf16.xpose.msra.mxu0 0
  %801 = vmatprep.mubr.bf16.mxu0 0
  %802 = vmatmul.mubr.bf16.gmra.mxu0 %v764
  %v803 = vpop.f32.mrf.mxu0
  %v804 = vadd.f32 0.0, %v803
  %v805 = vpop.f32.mrf.mxu0
  %v806 = vpop.f32.mrf.mxu0
  %v807 = vpop.f32.mrf.mxu0
  %808 = vdwg.mxu0
  %v810 = vsel %vm525, %v756, 0
  %v813 = vsel %vm525, %v760, 0
  %815 = vmatprep.subr.bf16.mxu0 0
  %816 = vmatpush1.bf16.xpose.msra.mxu0 0
  %817 = vmatprep.subr.bf16.mxu0 0
  %818 = vmatpush1.bf16.xpose.msra.mxu0 0
  %819 = vmatprep.subr.bf16.mxu0 0
  %820 = vmatpush1.bf16.xpose.msra.mxu0 0
  %821 = vmatprep.subr.bf16.mxu0 0
  %822 = vmatpush1.bf16.xpose.msra.mxu0 0
  %823 = vmatprep.subr.bf16.mxu0 0
  %824 = vmatpush1.bf16.xpose.msra.mxu0 0
  %825 = vmatprep.subr.bf16.mxu0 0
  %826 = vmatpush1.bf16.xpose.msra.mxu0 0
  %827 = vmatprep.subr.bf16.mxu0 0
  %828 = vmatpush1.bf16.xpose.msra.mxu0 0
  %829 = vmatprep.subr.bf16.mxu0 0
  %830 = vmatpush1.bf16.xpose.msra.mxu0 %v813
  %831 = vmatprep.subr.bf16.mxu0 0
  %832 = vmatpush2.bf16.xpose.msra.mxu0 0
  %833 = vmatprep.subr.bf16.mxu0 0
  %834 = vmatpush2.bf16.xpose.msra.mxu0 0
  %835 = vmatprep.subr.bf16.mxu0 0
  %836 = vmatpush2.bf16.xpose.msra.mxu0 0
  %837 = vmatprep.subr.bf16.mxu0 0
  %838 = vmatpush2.bf16.xpose.msra.mxu0 0
  %839 = vmatprep.subr.bf16.mxu0 0
  %840 = vmatpush2.bf16.xpose.msra.mxu0 0
  %841 = vmatprep.subr.bf16.mxu0 0
  %842 = vmatpush2.bf16.xpose.msra.mxu0 0
  %843 = vmatprep.subr.bf16.mxu0 0
  %844 = vmatpush2.bf16.xpose.msra.mxu0 0
  %845 = vmatprep.subr.bf16.mxu0 0
  %846 = vmatpush2.bf16.xpose.msra.mxu0 0
  %847 = vmatprep.mubr.bf16.mxu0 0
  %848 = vmatmul.mubr.bf16.gmra.mxu0 %v810
  %v849 = vpop.f32.mrf.mxu0
  %v850 = vadd.f32 0.0, %v849
  %v851 = vpop.f32.mrf.mxu0
  %v852 = vpop.f32.mrf.mxu0
  %v853 = vpop.f32.mrf.mxu0
  %854 = vdwg.mxu0
  %v856 = vsel %vm525, %v757, 0
  %v859 = vsel %vm525, %v761, 0
  %861 = vmatprep.subr.bf16.mxu0 0
  %862 = vmatpush1.bf16.xpose.msra.mxu0 0
  %863 = vmatprep.subr.bf16.mxu0 0
  %864 = vmatpush1.bf16.xpose.msra.mxu0 0
  %865 = vmatprep.subr.bf16.mxu0 0
  %866 = vmatpush1.bf16.xpose.msra.mxu0 0
  %867 = vmatprep.subr.bf16.mxu0 0
  %868 = vmatpush1.bf16.xpose.msra.mxu0 0
  %869 = vmatprep.subr.bf16.mxu0 0
  %870 = vmatpush1.bf16.xpose.msra.mxu0 0
  %871 = vmatprep.subr.bf16.mxu0 0
  %872 = vmatpush1.bf16.xpose.msra.mxu0 0
  %873 = vmatprep.subr.bf16.mxu0 0
  %874 = vmatpush1.bf16.xpose.msra.mxu0 0
  %875 = vmatprep.subr.bf16.mxu0 0
  %876 = vmatpush1.bf16.xpose.msra.mxu0 %v859
  %877 = vmatprep.subr.bf16.mxu0 0
  %878 = vmatpush2.bf16.xpose.msra.mxu0 0
  %879 = vmatprep.subr.bf16.mxu0 0
  %880 = vmatpush2.bf16.xpose.msra.mxu0 0
  %881 = vmatprep.subr.bf16.mxu0 0
  %882 = vmatpush2.bf16.xpose.msra.mxu0 0
  %883 = vmatprep.subr.bf16.mxu0 0
  %884 = vmatpush2.bf16.xpose.msra.mxu0 0
  %885 = vmatprep.subr.bf16.mxu0 0
  %886 = vmatpush2.bf16.xpose.msra.mxu0 0
  %887 = vmatprep.subr.bf16.mxu0 0
  %888 = vmatpush2.bf16.xpose.msra.mxu0 0
  %889 = vmatprep.subr.bf16.mxu0 0
  %890 = vmatpush2.bf16.xpose.msra.mxu0 0
  %891 = vmatprep.subr.bf16.mxu0 0
  %892 = vmatpush2.bf16.xpose.msra.mxu0 0
  %893 = vmatprep.mubr.bf16.mxu0 0
  %894 = vmatmul.mubr.bf16.gmra.mxu0 %v856
  %v895 = vpop.f32.mrf.mxu0
  %v896 = vadd.f32 0.0, %v895
  %v897 = vpop.f32.mrf.mxu0
  %v898 = vpop.f32.mrf.mxu0
  %v899 = vpop.f32.mrf.mxu0
  %900 = vdwg.mxu0
  %v902 = vsel %vm525, %v758, 0
  %v905 = vsel %vm525, %v762, 0
  %907 = vmatprep.subr.bf16.mxu0 0
  %908 = vmatpush1.bf16.xpose.msra.mxu0 0
  %909 = vmatprep.subr.bf16.mxu0 0
  %910 = vmatpush1.bf16.xpose.msra.mxu0 0
  %911 = vmatprep.subr.bf16.mxu0 0
  %912 = vmatpush1.bf16.xpose.msra.mxu0 0
  %913 = vmatprep.subr.bf16.mxu0 0
  %914 = vmatpush1.bf16.xpose.msra.mxu0 0
  %915 = vmatprep.subr.bf16.mxu0 0
  %916 = vmatpush1.bf16.xpose.msra.mxu0 0
  %917 = vmatprep.subr.bf16.mxu0 0
  %918 = vmatpush1.bf16.xpose.msra.mxu0 0
  %919 = vmatprep.subr.bf16.mxu0 0
  %920 = vmatpush1.bf16.xpose.msra.mxu0 0
  %921 = vmatprep.subr.bf16.mxu0 0
  %922 = vmatpush1.bf16.xpose.msra.mxu0 %v905
  %923 = vmatprep.subr.bf16.mxu0 0
  %924 = vmatpush2.bf16.xpose.msra.mxu0 0
  %925 = vmatprep.subr.bf16.mxu0 0
  %926 = vmatpush2.bf16.xpose.msra.mxu0 0
  %927 = vmatprep.subr.bf16.mxu0 0
  %928 = vmatpush2.bf16.xpose.msra.mxu0 0
  %929 = vmatprep.subr.bf16.mxu0 0
  %930 = vmatpush2.bf16.xpose.msra.mxu0 0
  %931 = vmatprep.subr.bf16.mxu0 0
  %932 = vmatpush2.bf16.xpose.msra.mxu0 0
  %933 = vmatprep.subr.bf16.mxu0 0
  %934 = vmatpush2.bf16.xpose.msra.mxu0 0
  %935 = vmatprep.subr.bf16.mxu0 0
  %936 = vmatpush2.bf16.xpose.msra.mxu0 0
  %937 = vmatprep.subr.bf16.mxu0 0
  %938 = vmatpush2.bf16.xpose.msra.mxu0 0
  %939 = vmatprep.mubr.bf16.mxu0 0
  %940 = vmatmul.mubr.bf16.gmra.mxu0 %v902
  %v941 = vpop.f32.mrf.mxu0
  %v942 = vadd.f32 0.0, %v941
  %v943 = vpop.f32.mrf.mxu0
  %v944 = vpop.f32.mrf.mxu0
  %v945 = vpop.f32.mrf.mxu0
  %946 = vdwg.mxu0
  %951 = vrot.lane.b32.xlu0 %v343, 120
  %v952 = vpop.permute.xlu0 %951
  %953 = vrot.lane.b32.xlu0 %v346, 120
  %v954 = vpop.permute.xlu0 %953
  %955 = vrot.lane.b32.xlu0 %v351, 120
  %v956 = vpop.permute.xlu0 %955
  %957 = vrot.lane.b32.xlu0 %v354, 120
  %v958 = vpop.permute.xlu0 %957
  %963 = vxpose.xlu0.b32.start [1/16] %v952, 128
  %964 = vxpose.xlu0.b32.cont [2/16] 0.0, 128
  %965 = vxpose.xlu0.b32.cont [3/16] 0.0, 128
  %966 = vxpose.xlu0.b32.cont [4/16] 0.0, 128
  %967 = vxpose.xlu0.b32.cont [5/16] 0.0, 128
  %968 = vxpose.xlu0.b32.cont [6/16] 0.0, 128
  %969 = vxpose.xlu0.b32.cont [7/16] 0.0, 128
  %970 = vxpose.xlu0.b32.cont [8/16] 0.0, 128
  %971 = vxpose.xlu0.b32.cont [9/16] 0.0, 128
  %972 = vxpose.xlu0.b32.cont [10/16] 0.0, 128
  %973 = vxpose.xlu0.b32.cont [11/16] 0.0, 128
  %974 = vxpose.xlu0.b32.cont [12/16] 0.0, 128
  %975 = vxpose.xlu0.b32.cont [13/16] 0.0, 128
  %976 = vxpose.xlu0.b32.cont [14/16] 0.0, 128
  %977 = vxpose.xlu0.b32.cont [15/16] 0.0, 128
  %978 = vxpose.xlu0.b32.end [16/16] 0.0, 128
  %v979 = vpop.trf.xlu0
  %v980 = vpop.trf.xlu0
  %v981 = vpop.trf.xlu0
  %v982 = vpop.trf.xlu0
  %v983 = vpop.trf.xlu0
  %v984 = vpop.trf.xlu0
  %v985 = vpop.trf.xlu0
  %v986 = vpop.trf.xlu0
  %v987 = vpop.trf.xlu0
  %v988 = vpop.trf.xlu0
  %v989 = vpop.trf.xlu0
  %v990 = vpop.trf.xlu0
  %v991 = vpop.trf.xlu0
  %v992 = vpop.trf.xlu0
  %v993 = vpop.trf.xlu0
  %v994 = vpop.trf.xlu0
  %995 = vxpose.xlu0.b32.start [1/16] %v954, 128
  %996 = vxpose.xlu0.b32.cont [2/16] 0.0, 128
  %997 = vxpose.xlu0.b32.cont [3/16] 0.0, 128
  %998 = vxpose.xlu0.b32.cont [4/16] 0.0, 128
  %999 = vxpose.xlu0.b32.cont [5/16] 0.0, 128
  %1000 = vxpose.xlu0.b32.cont [6/16] 0.0, 128
  %1001 = vxpose.xlu0.b32.cont [7/16] 0.0, 128
  %1002 = vxpose.xlu0.b32.cont [8/16] 0.0, 128
  %1003 = vxpose.xlu0.b32.cont [9/16] 0.0, 128
  %1004 = vxpose.xlu0.b32.cont [10/16] 0.0, 128
  %1005 = vxpose.xlu0.b32.cont [11/16] 0.0, 128
  %1006 = vxpose.xlu0.b32.cont [12/16] 0.0, 128
  %1007 = vxpose.xlu0.b32.cont [13/16] 0.0, 128
  %1008 = vxpose.xlu0.b32.cont [14/16] 0.0, 128
  %1009 = vxpose.xlu0.b32.cont [15/16] 0.0, 128
  %1010 = vxpose.xlu0.b32.end [16/16] 0.0, 128
  %v1011 = vpop.trf.xlu0
  %v1012 = vpop.trf.xlu0
  %v1013 = vpop.trf.xlu0
  %v1014 = vpop.trf.xlu0
  %v1015 = vpop.trf.xlu0
  %v1016 = vpop.trf.xlu0
  %v1017 = vpop.trf.xlu0
  %v1018 = vpop.trf.xlu0
  %v1019 = vpop.trf.xlu0
  %v1020 = vpop.trf.xlu0
  %v1021 = vpop.trf.xlu0
  %v1022 = vpop.trf.xlu0
  %v1023 = vpop.trf.xlu0
  %v1024 = vpop.trf.xlu0
  %v1025 = vpop.trf.xlu0
  %v1026 = vpop.trf.xlu0
  %1027 = vxpose.xlu0.b32.start [1/16] %v956, 128
  %1028 = vxpose.xlu0.b32.cont [2/16] 0.0, 128
  %1029 = vxpose.xlu0.b32.cont [3/16] 0.0, 128
  %1030 = vxpose.xlu0.b32.cont [4/16] 0.0, 128
  %1031 = vxpose.xlu0.b32.cont [5/16] 0.0, 128
  %1032 = vxpose.xlu0.b32.cont [6/16] 0.0, 128
  %1033 = vxpose.xlu0.b32.cont [7/16] 0.0, 128
  %1034 = vxpose.xlu0.b32.cont [8/16] 0.0, 128
  %1035 = vxpose.xlu0.b32.cont [9/16] 0.0, 128
  %1036 = vxpose.xlu0.b32.cont [10/16] 0.0, 128
  %1037 = vxpose.xlu0.b32.cont [11/16] 0.0, 128
  %1038 = vxpose.xlu0.b32.cont [12/16] 0.0, 128
  %1039 = vxpose.xlu0.b32.cont [13/16] 0.0, 128
  %1040 = vxpose.xlu0.b32.cont [14/16] 0.0, 128
  %1041 = vxpose.xlu0.b32.cont [15/16] 0.0, 128
  %1042 = vxpose.xlu0.b32.end [16/16] 0.0, 128
  %v1043 = vpop.trf.xlu0
  %v1044 = vpop.trf.xlu0
  %v1045 = vpop.trf.xlu0
  %v1046 = vpop.trf.xlu0
  %v1047 = vpop.trf.xlu0
  %v1048 = vpop.trf.xlu0
  %v1049 = vpop.trf.xlu0
  %v1050 = vpop.trf.xlu0
  %v1051 = vpop.trf.xlu0
  %v1052 = vpop.trf.xlu0
  %v1053 = vpop.trf.xlu0
  %v1054 = vpop.trf.xlu0
  %v1055 = vpop.trf.xlu0
  %v1056 = vpop.trf.xlu0
  %v1057 = vpop.trf.xlu0
  %v1058 = vpop.trf.xlu0
  %1059 = vxpose.xlu0.b32.start [1/16] %v958, 128
  %1060 = vxpose.xlu0.b32.cont [2/16] 0.0, 128
  %1061 = vxpose.xlu0.b32.cont [3/16] 0.0, 128
  %1062 = vxpose.xlu0.b32.cont [4/16] 0.0, 128
  %1063 = vxpose.xlu0.b32.cont [5/16] 0.0, 128
  %1064 = vxpose.xlu0.b32.cont [6/16] 0.0, 128
  %1065 = vxpose.xlu0.b32.cont [7/16] 0.0, 128
  %1066 = vxpose.xlu0.b32.cont [8/16] 0.0, 128
  %1067 = vxpose.xlu0.b32.cont [9/16] 0.0, 128
  %1068 = vxpose.xlu0.b32.cont [10/16] 0.0, 128
  %1069 = vxpose.xlu0.b32.cont [11/16] 0.0, 128
  %1070 = vxpose.xlu0.b32.cont [12/16] 0.0, 128
  %1071 = vxpose.xlu0.b32.cont [13/16] 0.0, 128
  %1072 = vxpose.xlu0.b32.cont [14/16] 0.0, 128
  %1073 = vxpose.xlu0.b32.cont [15/16] 0.0, 128
  %1074 = vxpose.xlu0.b32.end [16/16] 0.0, 128
  %v1075 = vpop.trf.xlu0
  %v1076 = vpop.trf.xlu0
  %v1077 = vpop.trf.xlu0
  %v1078 = vpop.trf.xlu0
  %v1079 = vpop.trf.xlu0
  %v1080 = vpop.trf.xlu0
  %v1081 = vpop.trf.xlu0
  %v1082 = vpop.trf.xlu0
  %v1083 = vpop.trf.xlu0
  %v1084 = vpop.trf.xlu0
  %v1085 = vpop.trf.xlu0
  %v1086 = vpop.trf.xlu0
  %v1087 = vpop.trf.xlu0
  %v1088 = vpop.trf.xlu0
  %v1089 = vpop.trf.xlu0
  %v1090 = vpop.trf.xlu0
  %v1091 = vpack.c.bf16 %v979, %v979
  %v1092 = vpack.c.bf16 %v1011, %v1011
  %v1093 = vpack.c.bf16 %v1043, %v1043
  %v1094 = vpack.c.bf16 %v1075, %v1075
  %1096 = vrot.lane.b32.xlu0 %v521, 120
  %v1097 = vpop.permute.xlu0 %1096
  %v1099 = vsel %vm525, %v1091, 0
  %v1102 = vsel %vm529, %v1097, 0
  %1104 = vmatprep.subr.bf16.mxu0 0
  %1105 = vmatpush1.bf16.msra.mxu0 0
  %1106 = vmatprep.subr.bf16.mxu0 0
  %1107 = vmatpush1.bf16.msra.mxu0 0
  %1108 = vmatprep.subr.bf16.mxu0 0
  %1109 = vmatpush1.bf16.msra.mxu0 0
  %1110 = vmatprep.subr.bf16.mxu0 0
  %1111 = vmatpush1.bf16.msra.mxu0 0
  %1112 = vmatprep.subr.bf16.mxu0 0
  %1113 = vmatpush1.bf16.msra.mxu0 0
  %1114 = vmatprep.subr.bf16.mxu0 0
  %1115 = vmatpush1.bf16.msra.mxu0 0
  %1116 = vmatprep.subr.bf16.mxu0 0
  %1117 = vmatpush1.bf16.msra.mxu0 0
  %1118 = vmatprep.subr.bf16.mxu0 0
  %1119 = vmatpush1.bf16.msra.mxu0 %v1102
  %1120 = vmatprep.subr.bf16.mxu0 0
  %1121 = vmatpush2.bf16.msra.mxu0 0
  %1122 = vmatprep.subr.bf16.mxu0 0
  %1123 = vmatpush2.bf16.msra.mxu0 0
  %1124 = vmatprep.subr.bf16.mxu0 0
  %1125 = vmatpush2.bf16.msra.mxu0 0
  %1126 = vmatprep.subr.bf16.mxu0 0
  %1127 = vmatpush2.bf16.msra.mxu0 0
  %1128 = vmatprep.subr.bf16.mxu0 0
  %1129 = vmatpush2.bf16.msra.mxu0 0
  %1130 = vmatprep.subr.bf16.mxu0 0
  %1131 = vmatpush2.bf16.msra.mxu0 0
  %1132 = vmatprep.subr.bf16.mxu0 0
  %1133 = vmatpush2.bf16.msra.mxu0 0
  %1134 = vmatprep.subr.bf16.mxu0 0
  %1135 = vmatpush2.bf16.msra.mxu0 0
  %1136 = vmatprep.mubr.bf16.mxu0 0
  %1137 = vmatmul.mubr.bf16.gmra.mxu0 %v1099
  %v1138 = vpop.f32.mrf.mxu0
  %v1139 = vadd.f32 %v68, %v1138
  %v1140 = vpop.f32.mrf.mxu0
  %v1141 = vpop.f32.mrf.mxu0
  %v1142 = vpop.f32.mrf.mxu0
  %1143 = vdwg.mxu0
  %1145 = vrot.lane.b32.xlu0 %v522, 120
  %v1146 = vpop.permute.xlu0 %1145
  %v1148 = vsel %vm525, %v1092, 0
  %v1151 = vsel %vm529, %v1146, 0
  %1153 = vmatprep.subr.bf16.mxu0 0
  %1154 = vmatpush1.bf16.msra.mxu0 0
  %1155 = vmatprep.subr.bf16.mxu0 0
  %1156 = vmatpush1.bf16.msra.mxu0 0
  %1157 = vmatprep.subr.bf16.mxu0 0
  %1158 = vmatpush1.bf16.msra.mxu0 0
  %1159 = vmatprep.subr.bf16.mxu0 0
  %1160 = vmatpush1.bf16.msra.mxu0 0
  %1161 = vmatprep.subr.bf16.mxu0 0
  %1162 = vmatpush1.bf16.msra.mxu0 0
  %1163 = vmatprep.subr.bf16.mxu0 0
  %1164 = vmatpush1.bf16.msra.mxu0 0
  %1165 = vmatprep.subr.bf16.mxu0 0
  %1166 = vmatpush1.bf16.msra.mxu0 0
  %1167 = vmatprep.subr.bf16.mxu0 0
  %1168 = vmatpush1.bf16.msra.mxu0 %v1151
  %1169 = vmatprep.subr.bf16.mxu0 0
  %1170 = vmatpush2.bf16.msra.mxu0 0
  %1171 = vmatprep.subr.bf16.mxu0 0
  %1172 = vmatpush2.bf16.msra.mxu0 0
  %1173 = vmatprep.subr.bf16.mxu0 0
  %1174 = vmatpush2.bf16.msra.mxu0 0
  %1175 = vmatprep.subr.bf16.mxu0 0
  %1176 = vmatpush2.bf16.msra.mxu0 0
  %1177 = vmatprep.subr.bf16.mxu0 0
  %1178 = vmatpush2.bf16.msra.mxu0 0
  %1179 = vmatprep.subr.bf16.mxu0 0
  %1180 = vmatpush2.bf16.msra.mxu0 0
  %1181 = vmatprep.subr.bf16.mxu0 0
  %1182 = vmatpush2.bf16.msra.mxu0 0
  %1183 = vmatprep.subr.bf16.mxu0 0
  %1184 = vmatpush2.bf16.msra.mxu0 0
  %1185 = vmatprep.mubr.bf16.mxu0 0
  %1186 = vmatmul.mubr.bf16.gmra.mxu0 %v1148
  %v1187 = vpop.f32.mrf.mxu0
  %v1188 = vadd.f32 %v68, %v1187
  %v1189 = vpop.f32.mrf.mxu0
  %v1190 = vpop.f32.mrf.mxu0
  %v1191 = vpop.f32.mrf.mxu0
  %1192 = vdwg.mxu0
  %1194 = vrot.lane.b32.xlu0 %v523, 120
  %v1195 = vpop.permute.xlu0 %1194
  %v1197 = vsel %vm525, %v1093, 0
  %v1200 = vsel %vm529, %v1195, 0
  %1202 = vmatprep.subr.bf16.mxu0 0
  %1203 = vmatpush1.bf16.msra.mxu0 0
  %1204 = vmatprep.subr.bf16.mxu0 0
  %1205 = vmatpush1.bf16.msra.mxu0 0
  %1206 = vmatprep.subr.bf16.mxu0 0
  %1207 = vmatpush1.bf16.msra.mxu0 0
  %1208 = vmatprep.subr.bf16.mxu0 0
  %1209 = vmatpush1.bf16.msra.mxu0 0
  %1210 = vmatprep.subr.bf16.mxu0 0
  %1211 = vmatpush1.bf16.msra.mxu0 0
  %1212 = vmatprep.subr.bf16.mxu0 0
  %1213 = vmatpush1.bf16.msra.mxu0 0
  %1214 = vmatprep.subr.bf16.mxu0 0
  %1215 = vmatpush1.bf16.msra.mxu0 0
  %1216 = vmatprep.subr.bf16.mxu0 0
  %1217 = vmatpush1.bf16.msra.mxu0 %v1200
  %1218 = vmatprep.subr.bf16.mxu0 0
  %1219 = vmatpush2.bf16.msra.mxu0 0
  %1220 = vmatprep.subr.bf16.mxu0 0
  %1221 = vmatpush2.bf16.msra.mxu0 0
  %1222 = vmatprep.subr.bf16.mxu0 0
  %1223 = vmatpush2.bf16.msra.mxu0 0
  %1224 = vmatprep.subr.bf16.mxu0 0
  %1225 = vmatpush2.bf16.msra.mxu0 0
  %1226 = vmatprep.subr.bf16.mxu0 0
  %1227 = vmatpush2.bf16.msra.mxu0 0
  %1228 = vmatprep.subr.bf16.mxu0 0
  %1229 = vmatpush2.bf16.msra.mxu0 0
  %1230 = vmatprep.subr.bf16.mxu0 0
  %1231 = vmatpush2.bf16.msra.mxu0 0
  %1232 = vmatprep.subr.bf16.mxu0 0
  %1233 = vmatpush2.bf16.msra.mxu0 0
  %1234 = vmatprep.mubr.bf16.mxu0 0
  %1235 = vmatmul.mubr.bf16.gmra.mxu0 %v1197
  %v1236 = vpop.f32.mrf.mxu0
  %v1237 = vadd.f32 %v68, %v1236
  %v1238 = vpop.f32.mrf.mxu0
  %v1239 = vpop.f32.mrf.mxu0
  %v1240 = vpop.f32.mrf.mxu0
  %1241 = vdwg.mxu0
  %1243 = vrot.lane.b32.xlu0 %v524, 120
  %v1244 = vpop.permute.xlu0 %1243
  %v1246 = vsel %vm525, %v1094, 0
  %v1249 = vsel %vm529, %v1244, 0
  %1251 = vmatprep.subr.bf16.mxu0 0
  %1252 = vmatpush1.bf16.msra.mxu0 0
  %1253 = vmatprep.subr.bf16.mxu0 0
  %1254 = vmatpush1.bf16.msra.mxu0 0
  %1255 = vmatprep.subr.bf16.mxu0 0
  %1256 = vmatpush1.bf16.msra.mxu0 0
  %1257 = vmatprep.subr.bf16.mxu0 0
  %1258 = vmatpush1.bf16.msra.mxu0 0
  %1259 = vmatprep.subr.bf16.mxu0 0
  %1260 = vmatpush1.bf16.msra.mxu0 0
  %1261 = vmatprep.subr.bf16.mxu0 0
  %1262 = vmatpush1.bf16.msra.mxu0 0
  %1263 = vmatprep.subr.bf16.mxu0 0
  %1264 = vmatpush1.bf16.msra.mxu0 0
  %1265 = vmatprep.subr.bf16.mxu0 0
  %1266 = vmatpush1.bf16.msra.mxu0 %v1249
  %1267 = vmatprep.subr.bf16.mxu0 0
  %1268 = vmatpush2.bf16.msra.mxu0 0
  %1269 = vmatprep.subr.bf16.mxu0 0
  %1270 = vmatpush2.bf16.msra.mxu0 0
  %1271 = vmatprep.subr.bf16.mxu0 0
  %1272 = vmatpush2.bf16.msra.mxu0 0
  %1273 = vmatprep.subr.bf16.mxu0 0
  %1274 = vmatpush2.bf16.msra.mxu0 0
  %1275 = vmatprep.subr.bf16.mxu0 0
  %1276 = vmatpush2.bf16.msra.mxu0 0
  %1277 = vmatprep.subr.bf16.mxu0 0
  %1278 = vmatpush2.bf16.msra.mxu0 0
  %1279 = vmatprep.subr.bf16.mxu0 0
  %1280 = vmatpush2.bf16.msra.mxu0 0
  %1281 = vmatprep.subr.bf16.mxu0 0
  %1282 = vmatpush2.bf16.msra.mxu0 0
  %1283 = vmatprep.mubr.bf16.mxu0 0
  %1284 = vmatmul.mubr.bf16.gmra.mxu0 %v1246
  %v1285 = vpop.f32.mrf.mxu0
  %v1286 = vadd.f32 %v68, %v1285
  %v1287 = vpop.f32.mrf.mxu0
  %v1288 = vpop.f32.mrf.mxu0
  %v1289 = vpop.f32.mrf.mxu0
  %1290 = vdwg.mxu0
  %v1291 = vsel %vm525, %v1139, -inf
  %1292 = vmax.xlane.f32.xlu0 %v1291
  %v1293 = vpop.xlane.xlu0 %1292
  %v1294 = vsel %vm525, %v1188, -inf
  %1295 = vmax.xlane.f32.xlu0 %v1294
  %v1296 = vpop.xlane.xlu0 %1295
  %v1297 = vsel %vm525, %v1237, -inf
  %1298 = vmax.xlane.f32.xlu0 %v1297
  %v1299 = vpop.xlane.xlu0 %1298
  %v1300 = vsel %vm525, %v1286, -inf
  %1301 = vmax.xlane.f32.xlu0 %v1300
  %v1302 = vpop.xlane.xlu0 %1301
  %v1303 = vsub.f32 %v1139, %v1293
  %v1304 = vsub.f32 %v1188, %v1296
  %v1305 = vsub.f32 %v1237, %v1299
  %v1306 = vsub.f32 %v1286, %v1302
  %v1307 = vmul.f32 %v1303, 1.442695
  %v1308 = vpow.pop %v1307
  %v1309 = vmul.f32 %v1304, 1.442695
  %v1310 = vpow.pop %v1309
  %v1311 = vmul.f32 %v1305, 1.442695
  %v1312 = vpow.pop %v1311
  %v1313 = vmul.f32 %v1306, 1.442695
  %v1314 = vpow.pop %v1313
  %v1315 = vsel %vm525, %v1308, 0.0
  %1316 = vadd.xlane.f32.xlu0 %v1315
  %v1317 = vpop.xlane.xlu0 %1316
  %v1318 = vsel %vm525, %v1310, 0.0
  %1319 = vadd.xlane.f32.xlu0 %v1318
  %v1320 = vpop.xlane.xlu0 %1319
  %v1321 = vsel %vm525, %v1312, 0.0
  %1322 = vadd.xlane.f32.xlu0 %v1321
  %v1323 = vpop.xlane.xlu0 %1322
  %v1324 = vsel %vm525, %v1314, 0.0
  %1325 = vadd.xlane.f32.xlu0 %v1324
  %v1326 = vpop.xlane.xlu0 %1325
  %v1327 = vrcp.pop %v1317
  %v1328 = vrcp.pop %v1320
  %v1329 = vrcp.pop %v1323
  %v1330 = vrcp.pop %v1326
  %v1331 = vmul.f32 %v1308, %v1327
  %v1332 = vmul.f32 %v1310, %v1328
  %v1333 = vmul.f32 %v1312, %v1329
  %v1334 = vmul.f32 %v1314, %v1330
  %v1335 = vpack.c.bf16 %v1331, %v1331
  %v1336 = vpack.c.bf16 %v1332, %v1332
  %v1337 = vpack.c.bf16 %v1333, %v1333
  %v1338 = vpack.c.bf16 %v1334, %v1334
  %1340 = vrot.lane.b32.xlu0 %v755, 120
  %v1341 = vpop.permute.xlu0 %1340
  %v1343 = vsel %vm525, %v1341, 0
  %v1346 = vsel %vm525, %v1335, 0
  %1348 = vmatprep.subr.bf16.mxu0 0
  %1349 = vmatpush1.bf16.xpose.msra.mxu0 0
  %1350 = vmatprep.subr.bf16.mxu0 0
  %1351 = vmatpush1.bf16.xpose.msra.mxu0 0
  %1352 = vmatprep.subr.bf16.mxu0 0
  %1353 = vmatpush1.bf16.xpose.msra.mxu0 0
  %1354 = vmatprep.subr.bf16.mxu0 0
  %1355 = vmatpush1.bf16.xpose.msra.mxu0 0
  %1356 = vmatprep.subr.bf16.mxu0 0
  %1357 = vmatpush1.bf16.xpose.msra.mxu0 0
  %1358 = vmatprep.subr.bf16.mxu0 0
  %1359 = vmatpush1.bf16.xpose.msra.mxu0 0
  %1360 = vmatprep.subr.bf16.mxu0 0
  %1361 = vmatpush1.bf16.xpose.msra.mxu0 0
  %1362 = vmatprep.subr.bf16.mxu0 0
  %1363 = vmatpush1.bf16.xpose.msra.mxu0 %v1346
  %1364 = vmatprep.subr.bf16.mxu0 0
  %1365 = vmatpush2.bf16.xpose.msra.mxu0 0
  %1366 = vmatprep.subr.bf16.mxu0 0
  %1367 = vmatpush2.bf16.xpose.msra.mxu0 0
  %1368 = vmatprep.subr.bf16.mxu0 0
  %1369 = vmatpush2.bf16.xpose.msra.mxu0 0
  %1370 = vmatprep.subr.bf16.mxu0 0
  %1371 = vmatpush2.bf16.xpose.msra.mxu0 0
  %1372 = vmatprep.subr.bf16.mxu0 0
  %1373 = vmatpush2.bf16.xpose.msra.mxu0 0
  %1374 = vmatprep.subr.bf16.mxu0 0
  %1375 = vmatpush2.bf16.xpose.msra.mxu0 0
  %1376 = vmatprep.subr.bf16.mxu0 0
  %1377 = vmatpush2.bf16.xpose.msra.mxu0 0
  %1378 = vmatprep.subr.bf16.mxu0 0
  %1379 = vmatpush2.bf16.xpose.msra.mxu0 0
  %1380 = vmatprep.mubr.bf16.mxu0 0
  %1381 = vmatmul.mubr.bf16.gmra.mxu0 %v1343
  %v1382 = vpop.f32.mrf.mxu0
  %v1383 = vadd.f32 0.0, %v1382
  %v1384 = vpop.f32.mrf.mxu0
  %v1385 = vpop.f32.mrf.mxu0
  %v1386 = vpop.f32.mrf.mxu0
  %1387 = vdwg.mxu0
  %1389 = vrot.lane.b32.xlu0 %v756, 120
  %v1390 = vpop.permute.xlu0 %1389
  %v1392 = vsel %vm525, %v1390, 0
  %v1395 = vsel %vm525, %v1336, 0
  %1397 = vmatprep.subr.bf16.mxu0 0
  %1398 = vmatpush1.bf16.xpose.msra.mxu0 0
  %1399 = vmatprep.subr.bf16.mxu0 0
  %1400 = vmatpush1.bf16.xpose.msra.mxu0 0
  %1401 = vmatprep.subr.bf16.mxu0 0
  %1402 = vmatpush1.bf16.xpose.msra.mxu0 0
  %1403 = vmatprep.subr.bf16.mxu0 0
  %1404 = vmatpush1.bf16.xpose.msra.mxu0 0
  %1405 = vmatprep.subr.bf16.mxu0 0
  %1406 = vmatpush1.bf16.xpose.msra.mxu0 0
  %1407 = vmatprep.subr.bf16.mxu0 0
  %1408 = vmatpush1.bf16.xpose.msra.mxu0 0
  %1409 = vmatprep.subr.bf16.mxu0 0
  %1410 = vmatpush1.bf16.xpose.msra.mxu0 0
  %1411 = vmatprep.subr.bf16.mxu0 0
  %1412 = vmatpush1.bf16.xpose.msra.mxu0 %v1395
  %1413 = vmatprep.subr.bf16.mxu0 0
  %1414 = vmatpush2.bf16.xpose.msra.mxu0 0
  %1415 = vmatprep.subr.bf16.mxu0 0
  %1416 = vmatpush2.bf16.xpose.msra.mxu0 0
  %1417 = vmatprep.subr.bf16.mxu0 0
  %1418 = vmatpush2.bf16.xpose.msra.mxu0 0
  %1419 = vmatprep.subr.bf16.mxu0 0
  %1420 = vmatpush2.bf16.xpose.msra.mxu0 0
  %1421 = vmatprep.subr.bf16.mxu0 0
  %1422 = vmatpush2.bf16.xpose.msra.mxu0 0
  %1423 = vmatprep.subr.bf16.mxu0 0
  %1424 = vmatpush2.bf16.xpose.msra.mxu0 0
  %1425 = vmatprep.subr.bf16.mxu0 0
  %1426 = vmatpush2.bf16.xpose.msra.mxu0 0
  %1427 = vmatprep.subr.bf16.mxu0 0
  %1428 = vmatpush2.bf16.xpose.msra.mxu0 0
  %1429 = vmatprep.mubr.bf16.mxu0 0
  %1430 = vmatmul.mubr.bf16.gmra.mxu0 %v1392
  %v1431 = vpop.f32.mrf.mxu0
  %v1432 = vadd.f32 0.0, %v1431
  %v1433 = vpop.f32.mrf.mxu0
  %v1434 = vpop.f32.mrf.mxu0
  %v1435 = vpop.f32.mrf.mxu0
  %1436 = vdwg.mxu0
  %1438 = vrot.lane.b32.xlu0 %v757, 120
  %v1439 = vpop.permute.xlu0 %1438
  %v1441 = vsel %vm525, %v1439, 0
  %v1444 = vsel %vm525, %v1337, 0
  %1446 = vmatprep.subr.bf16.mxu0 0
  %1447 = vmatpush1.bf16.xpose.msra.mxu0 0
  %1448 = vmatprep.subr.bf16.mxu0 0
  %1449 = vmatpush1.bf16.xpose.msra.mxu0 0
  %1450 = vmatprep.subr.bf16.mxu0 0
  %1451 = vmatpush1.bf16.xpose.msra.mxu0 0
  %1452 = vmatprep.subr.bf16.mxu0 0
  %1453 = vmatpush1.bf16.xpose.msra.mxu0 0
  %1454 = vmatprep.subr.bf16.mxu0 0
  %1455 = vmatpush1.bf16.xpose.msra.mxu0 0
  %1456 = vmatprep.subr.bf16.mxu0 0
  %1457 = vmatpush1.bf16.xpose.msra.mxu0 0
  %1458 = vmatprep.subr.bf16.mxu0 0
  %1459 = vmatpush1.bf16.xpose.msra.mxu0 0
  %1460 = vmatprep.subr.bf16.mxu0 0
  %1461 = vmatpush1.bf16.xpose.msra.mxu0 %v1444
  %1462 = vmatprep.subr.bf16.mxu0 0
  %1463 = vmatpush2.bf16.xpose.msra.mxu0 0
  %1464 = vmatprep.subr.bf16.mxu0 0
  %1465 = vmatpush2.bf16.xpose.msra.mxu0 0
  %1466 = vmatprep.subr.bf16.mxu0 0
  %1467 = vmatpush2.bf16.xpose.msra.mxu0 0
  %1468 = vmatprep.subr.bf16.mxu0 0
  %1469 = vmatpush2.bf16.xpose.msra.mxu0 0
  %1470 = vmatprep.subr.bf16.mxu0 0
  %1471 = vmatpush2.bf16.xpose.msra.mxu0 0
  %1472 = vmatprep.subr.bf16.mxu0 0
  %1473 = vmatpush2.bf16.xpose.msra.mxu0 0
  %1474 = vmatprep.subr.bf16.mxu0 0
  %1475 = vmatpush2.bf16.xpose.msra.mxu0 0
  %1476 = vmatprep.subr.bf16.mxu0 0
  %1477 = vmatpush2.bf16.xpose.msra.mxu0 0
  %1478 = vmatprep.mubr.bf16.mxu0 0
  %1479 = vmatmul.mubr.bf16.gmra.mxu0 %v1441
  %v1480 = vpop.f32.mrf.mxu0
  %v1481 = vadd.f32 0.0, %v1480
  %v1482 = vpop.f32.mrf.mxu0
  %v1483 = vpop.f32.mrf.mxu0
  %v1484 = vpop.f32.mrf.mxu0
  %1485 = vdwg.mxu0
  %1487 = vrot.lane.b32.xlu0 %v758, 120
  %v1488 = vpop.permute.xlu0 %1487
  %v1490 = vsel %vm525, %v1488, 0
  %v1493 = vsel %vm525, %v1338, 0
  %1495 = vmatprep.subr.bf16.mxu0 0
  %1496 = vmatpush1.bf16.xpose.msra.mxu0 0
  %1497 = vmatprep.subr.bf16.mxu0 0
  %1498 = vmatpush1.bf16.xpose.msra.mxu0 0
  %1499 = vmatprep.subr.bf16.mxu0 0
  %1500 = vmatpush1.bf16.xpose.msra.mxu0 0
  %1501 = vmatprep.subr.bf16.mxu0 0
  %1502 = vmatpush1.bf16.xpose.msra.mxu0 0
  %1503 = vmatprep.subr.bf16.mxu0 0
  %1504 = vmatpush1.bf16.xpose.msra.mxu0 0
  %1505 = vmatprep.subr.bf16.mxu0 0
  %1506 = vmatpush1.bf16.xpose.msra.mxu0 0
  %1507 = vmatprep.subr.bf16.mxu0 0
  %1508 = vmatpush1.bf16.xpose.msra.mxu0 0
  %1509 = vmatprep.subr.bf16.mxu0 0
  %1510 = vmatpush1.bf16.xpose.msra.mxu0 %v1493
  %1511 = vmatprep.subr.bf16.mxu0 0
  %1512 = vmatpush2.bf16.xpose.msra.mxu0 0
  %1513 = vmatprep.subr.bf16.mxu0 0
  %1514 = vmatpush2.bf16.xpose.msra.mxu0 0
  %1515 = vmatprep.subr.bf16.mxu0 0
  %1516 = vmatpush2.bf16.xpose.msra.mxu0 0
  %1517 = vmatprep.subr.bf16.mxu0 0
  %1518 = vmatpush2.bf16.xpose.msra.mxu0 0
  %1519 = vmatprep.subr.bf16.mxu0 0
  %1520 = vmatpush2.bf16.xpose.msra.mxu0 0
  %1521 = vmatprep.subr.bf16.mxu0 0
  %1522 = vmatpush2.bf16.xpose.msra.mxu0 0
  %1523 = vmatprep.subr.bf16.mxu0 0
  %1524 = vmatpush2.bf16.xpose.msra.mxu0 0
  %1525 = vmatprep.subr.bf16.mxu0 0
  %1526 = vmatpush2.bf16.xpose.msra.mxu0 0
  %1527 = vmatprep.mubr.bf16.mxu0 0
  %1528 = vmatmul.mubr.bf16.gmra.mxu0 %v1490
  %v1529 = vpop.f32.mrf.mxu0
  %v1530 = vadd.f32 0.0, %v1529
  %v1531 = vpop.f32.mrf.mxu0
  %v1532 = vpop.f32.mrf.mxu0
  %v1533 = vpop.f32.mrf.mxu0
  %1534 = vdwg.mxu0
  %1539 = vrot.lane.b32.xlu0 %v1383, 8
  %v1540 = vpop.permute.xlu0 %1539
  %1541 = vrot.lane.b32.xlu0 %v1432, 8
  %v1542 = vpop.permute.xlu0 %1541
  %1543 = vrot.lane.b32.xlu0 %v1481, 8
  %v1544 = vpop.permute.xlu0 %1543
  %1545 = vrot.lane.b32.xlu0 %v1530, 8
  %v1546 = vpop.permute.xlu0 %1545
  %v1551 = vsel %vm525, %v804, %v1540
  %v1552 = vsel %vm525, %v850, %v1542
  %v1553 = vsel %vm525, %v896, %v1544
  %v1554 = vsel %vm525, %v942, %v1546
  %v1555 = vld [vmem:[%s7] sm:$0xf]
  %v1556 = vld [vmem:[%s7 + $0x4] sm:$0xf]
  %v1557 = vld [vmem:[%s7 + $0x8] sm:$0xf]
  %v1558 = vld [vmem:[%s7 + $0xc] sm:$0xf]
  %v1559 = vpack.c.bf16 %v1552, %v1551
  %v1560 = vpack.c.bf16 %v1554, %v1553
  %v1561 = vld [vmem:[%s8] sm:$0xff]
  %v1562 = vld [vmem:[%s8 + $0x8] sm:$0xff]
  %v1563 = vld [vmem:[%s8 + $0x10] sm:$0xff]
  %v1564 = vld [vmem:[%s8 + $0x18] sm:$0xff]
  %1566 = vset.pattern.permute.xlu0 0
  %1567 = vperm.xlu0 %1566, %v1561
  %v1568 = vpop.permute.xlu0 %1567
  %1571 = vset.pattern.permute.xlu0 0
  %1572 = vperm.xlu0 %1571, %v1562
  %v1573 = vpop.permute.xlu0 %1572
  %1576 = vset.pattern.permute.xlu0 0
  %1577 = vperm.xlu0 %1576, %v1563
  %v1578 = vpop.permute.xlu0 %1577
  %1581 = vset.pattern.permute.xlu0 0
  %1582 = vperm.xlu0 %1581, %v1564
  %v1583 = vpop.permute.xlu0 %1582
  %v1589 = vunpack.c.l.b16 %v1555
  %v1590 = vunpack.c.l.b16 %v1556
  %v1591 = vunpack.c.l.b16 %v1557
  %v1592 = vunpack.c.l.b16 %v1558
  %v1593 = vpack.c.b16 %v1590, %v1589
  %v1594 = vpack.c.b16 %v1592, %v1591
  %v1596 = vsel %vm289, %v1593, 0
  %v1599 = vsel %vm289, %v1594, 0
  %1601 = vmatprep.subr.bf16.mxu0 0
  %1602 = vmatpush1.bf16.msra.mxu0 0
  %1603 = vmatprep.subr.bf16.mxu0 0
  %1604 = vmatpush1.bf16.msra.mxu0 0
  %1605 = vmatprep.subr.bf16.mxu0 0
  %1606 = vmatpush1.bf16.msra.mxu0 0
  %1607 = vmatprep.subr.bf16.mxu0 0
  %1608 = vmatpush1.bf16.msra.mxu0 0
  %1609 = vmatprep.subr.bf16.mxu0 0
  %1610 = vmatpush1.bf16.msra.mxu0 0
  %1611 = vmatprep.subr.bf16.mxu0 0
  %1612 = vmatpush1.bf16.msra.mxu0 0
  %1613 = vmatprep.subr.bf16.mxu0 0
  %1614 = vmatpush1.bf16.msra.mxu0 %v1560
  %1615 = vmatprep.subr.bf16.mxu0 0
  %1616 = vmatpush1.bf16.msra.mxu0 %v1559
  %1617 = vmatprep.subr.bf16.mxu0 0
  %1618 = vmatpush2.bf16.msra.mxu0 0
  %1619 = vmatprep.subr.bf16.mxu0 0
  %1620 = vmatpush2.bf16.msra.mxu0 0
  %1621 = vmatprep.subr.bf16.mxu0 0
  %1622 = vmatpush2.bf16.msra.mxu0 0
  %1623 = vmatprep.subr.bf16.mxu0 0
  %1624 = vmatpush2.bf16.msra.mxu0 0
  %1625 = vmatprep.subr.bf16.mxu0 0
  %1626 = vmatpush2.bf16.msra.mxu0 0
  %1627 = vmatprep.subr.bf16.mxu0 0
  %1628 = vmatpush2.bf16.msra.mxu0 0
  %1629 = vmatprep.subr.bf16.mxu0 0
  %1630 = vmatpush2.bf16.msra.mxu0 0
  %1631 = vmatprep.subr.bf16.mxu0 0
  %1632 = vmatpush2.bf16.msra.mxu0 0
  %1633 = vmatprep.mubr.bf16.mxu0 0
  %1634 = vmatmul.mubr.bf16.gmra.mxu0 %v1596
  %v1635 = vpop.f32.mrf.mxu0
  %v1636 = vadd.f32 %v1568, %v1635
  %v1637 = vpop.f32.mrf.mxu0
  %v1638 = vpop.f32.mrf.mxu0
  %v1639 = vadd.f32 %v1573, %v1638
  %v1640 = vpop.f32.mrf.mxu0
  %1641 = vmatprep.mubr.bf16.mxu0 0
  %1642 = vmatmul.mubr.bf16.gmra.mxu0 %v1599
  %v1643 = vpop.f32.mrf.mxu0
  %v1644 = vadd.f32 %v1578, %v1643
  %v1645 = vpop.f32.mrf.mxu0
  %v1646 = vpop.f32.mrf.mxu0
  %v1647 = vadd.f32 %v1583, %v1646
  %v1648 = vpop.f32.mrf.mxu0
  %1649 = vdwg.mxu0
  %v1650 = vld [vmem:[%s1] sm:$0xff]
  %v1651 = vld [vmem:[%s1 + $0x8] sm:$0xff]
  %v1652 = vld [vmem:[%s1 + $0x10] sm:$0xff]
  %v1653 = vld [vmem:[%s1 + $0x18] sm:$0xff]
  %v1654 = vld [vmem:[%s9] sm:$0xf]
  %v1655 = vld [vmem:[%s9 + $0x4] sm:$0xf]
  %v1656 = vld [vmem:[%s9 + $0x8] sm:$0xf]
  %v1657 = vld [vmem:[%s9 + $0xc] sm:$0xf]
  %v1658 = vpack.c.bf16 %v1639, %v1636
  %v1659 = vpack.c.bf16 %v1647, %v1644
  %v1660 = vld [vmem:[%s10] sm:$0xff]
  %v1661 = vld [vmem:[%s10 + $0x8] sm:$0xff]
  %v1662 = vld [vmem:[%s10 + $0x10] sm:$0xff]
  %v1663 = vld [vmem:[%s10 + $0x18] sm:$0xff]
  %1665 = vset.pattern.permute.xlu0 0
  %1666 = vperm.xlu0 %1665, %v1660
  %v1667 = vpop.permute.xlu0 %1666
  %1670 = vset.pattern.permute.xlu0 0
  %1671 = vperm.xlu0 %1670, %v1661
  %v1672 = vpop.permute.xlu0 %1671
  %1675 = vset.pattern.permute.xlu0 0
  %1676 = vperm.xlu0 %1675, %v1662
  %v1677 = vpop.permute.xlu0 %1676
  %1680 = vset.pattern.permute.xlu0 0
  %1681 = vperm.xlu0 %1680, %v1663
  %v1682 = vpop.permute.xlu0 %1681
  %v1688 = vunpack.c.l.b16 %v1654
  %v1689 = vunpack.c.l.b16 %v1655
  %v1690 = vunpack.c.l.b16 %v1656
  %v1691 = vunpack.c.l.b16 %v1657
  %v1692 = vpack.c.b16 %v1689, %v1688
  %v1693 = vpack.c.b16 %v1691, %v1690
  %v1695 = vsel %vm289, %v1692, 0
  %v1698 = vsel %vm289, %v1693, 0
  %1700 = vmatprep.subr.bf16.mxu0 0
  %1701 = vmatpush1.bf16.msra.mxu0 0
  %1702 = vmatprep.subr.bf16.mxu0 0
  %1703 = vmatpush1.bf16.msra.mxu0 0
  %1704 = vmatprep.subr.bf16.mxu0 0
  %1705 = vmatpush1.bf16.msra.mxu0 0
  %1706 = vmatprep.subr.bf16.mxu0 0
  %1707 = vmatpush1.bf16.msra.mxu0 0
  %1708 = vmatprep.subr.bf16.mxu0 0
  %1709 = vmatpush1.bf16.msra.mxu0 0
  %1710 = vmatprep.subr.bf16.mxu0 0
  %1711 = vmatpush1.bf16.msra.mxu0 0
  %1712 = vmatprep.subr.bf16.mxu0 0
  %1713 = vmatpush1.bf16.msra.mxu0 %v1659
  %1714 = vmatprep.subr.bf16.mxu0 0
  %1715 = vmatpush1.bf16.msra.mxu0 %v1658
  %1716 = vmatprep.subr.bf16.mxu0 0
  %1717 = vmatpush2.bf16.msra.mxu0 0
  %1718 = vmatprep.subr.bf16.mxu0 0
  %1719 = vmatpush2.bf16.msra.mxu0 0
  %1720 = vmatprep.subr.bf16.mxu0 0
  %1721 = vmatpush2.bf16.msra.mxu0 0
  %1722 = vmatprep.subr.bf16.mxu0 0
  %1723 = vmatpush2.bf16.msra.mxu0 0
  %1724 = vmatprep.subr.bf16.mxu0 0
  %1725 = vmatpush2.bf16.msra.mxu0 0
  %1726 = vmatprep.subr.bf16.mxu0 0
  %1727 = vmatpush2.bf16.msra.mxu0 0
  %1728 = vmatprep.subr.bf16.mxu0 0
  %1729 = vmatpush2.bf16.msra.mxu0 0
  %1730 = vmatprep.subr.bf16.mxu0 0
  %1731 = vmatpush2.bf16.msra.mxu0 0
  %1732 = vmatprep.mubr.bf16.mxu0 0
  %1733 = vmatmul.mubr.bf16.gmra.mxu0 %v1695
  %v1734 = vpop.f32.mrf.mxu0
  %v1735 = vadd.f32 %v1667, %v1734
  %v1736 = vpop.f32.mrf.mxu0
  %v1737 = vpop.f32.mrf.mxu0
  %v1738 = vadd.f32 %v1672, %v1737
  %v1739 = vpop.f32.mrf.mxu0
  %1740 = vmatprep.mubr.bf16.mxu0 0
  %1741 = vmatmul.mubr.bf16.gmra.mxu0 %v1698
  %v1742 = vpop.f32.mrf.mxu0
  %v1743 = vadd.f32 %v1677, %v1742
  %v1744 = vpop.f32.mrf.mxu0
  %v1745 = vpop.f32.mrf.mxu0
  %v1746 = vadd.f32 %v1682, %v1745
  %v1747 = vpop.f32.mrf.mxu0
  %1748 = vdwg.mxu0
  %v1749 = vld [vmem:[%s11] sm:$0xf]
  %v1750 = vld [vmem:[%s11 + $0x4] sm:$0xf]
  %v1751 = vld [vmem:[%s11 + $0x8] sm:$0xf]
  %v1752 = vld [vmem:[%s11 + $0xc] sm:$0xf]
  %v1753 = vld [vmem:[%s11 + $0x10] sm:$0xf]
  %v1754 = vld [vmem:[%s11 + $0x14] sm:$0xf]
  %v1755 = vld [vmem:[%s11 + $0x18] sm:$0xf]
  %v1756 = vld [vmem:[%s11 + $0x1c] sm:$0xf]
  %v1757 = vpack.c.bf16 %v1651, %v1650
  %v1758 = vpack.c.bf16 %v1653, %v1652
  %v1759 = vld [vmem:[%s12] sm:$0xff]
  %v1760 = vld [vmem:[%s12 + $0x8] sm:$0xff]
  %v1761 = vld [vmem:[%s12 + $0x10] sm:$0xff]
  %v1762 = vld [vmem:[%s12 + $0x18] sm:$0xff]
  %v1763 = vld [vmem:[%s12 + $0x20] sm:$0xff]
  %v1764 = vld [vmem:[%s12 + $0x28] sm:$0xff]
  %v1765 = vld [vmem:[%s12 + $0x30] sm:$0xff]
  %v1766 = vld [vmem:[%s12 + $0x38] sm:$0xff]
  %1768 = vset.pattern.permute.xlu0 0
  %1769 = vperm.xlu0 %1768, %v1759
  %v1770 = vpop.permute.xlu0 %1769
  %1773 = vset.pattern.permute.xlu0 0
  %1774 = vperm.xlu0 %1773, %v1760
  %v1775 = vpop.permute.xlu0 %1774
  %1778 = vset.pattern.permute.xlu0 0
  %1779 = vperm.xlu0 %1778, %v1761
  %v1780 = vpop.permute.xlu0 %1779
  %1783 = vset.pattern.permute.xlu0 0
  %1784 = vperm.xlu0 %1783, %v1762
  %v1785 = vpop.permute.xlu0 %1784
  %1788 = vset.pattern.permute.xlu0 0
  %1789 = vperm.xlu0 %1788, %v1763
  %v1790 = vpop.permute.xlu0 %1789
  %1793 = vset.pattern.permute.xlu0 0
  %1794 = vperm.xlu0 %1793, %v1764
  %v1795 = vpop.permute.xlu0 %1794
  %1798 = vset.pattern.permute.xlu0 0
  %1799 = vperm.xlu0 %1798, %v1765
  %v1800 = vpop.permute.xlu0 %1799
  %1803 = vset.pattern.permute.xlu0 0
  %1804 = vperm.xlu0 %1803, %v1766
  %v1805 = vpop.permute.xlu0 %1804
  %v1815 = vunpack.c.l.b16 %v1749
  %v1816 = vunpack.c.l.b16 %v1750
  %v1817 = vunpack.c.l.b16 %v1751
  %v1818 = vunpack.c.l.b16 %v1752
  %v1819 = vunpack.c.l.b16 %v1753
  %v1820 = vunpack.c.l.b16 %v1754
  %v1821 = vunpack.c.l.b16 %v1755
  %v1822 = vunpack.c.l.b16 %v1756
  %v1823 = vpack.c.b16 %v1816, %v1815
  %v1824 = vpack.c.b16 %v1818, %v1817
  %v1825 = vpack.c.b16 %v1820, %v1819
  %v1826 = vpack.c.b16 %v1822, %v1821
  %v1828 = vsel %vm289, %v1823, 0
  %v1831 = vsel %vm289, %v1824, 0
  %v1834 = vsel %vm289, %v1825, 0
  %v1837 = vsel %vm289, %v1826, 0
  %1839 = vmatprep.subr.bf16.mxu0 0
  %1840 = vmatpush1.bf16.msra.mxu0 0
  %1841 = vmatprep.subr.bf16.mxu0 0
  %1842 = vmatpush1.bf16.msra.mxu0 0
  %1843 = vmatprep.subr.bf16.mxu0 0
  %1844 = vmatpush1.bf16.msra.mxu0 0
  %1845 = vmatprep.subr.bf16.mxu0 0
  %1846 = vmatpush1.bf16.msra.mxu0 0
  %1847 = vmatprep.subr.bf16.mxu0 0
  %1848 = vmatpush1.bf16.msra.mxu0 0
  %1849 = vmatprep.subr.bf16.mxu0 0
  %1850 = vmatpush1.bf16.msra.mxu0 0
  %1851 = vmatprep.subr.bf16.mxu0 0
  %1852 = vmatpush1.bf16.msra.mxu0 %v1758
  %1853 = vmatprep.subr.bf16.mxu0 0
  %1854 = vmatpush1.bf16.msra.mxu0 %v1757
  %1855 = vmatprep.subr.bf16.mxu0 0
  %1856 = vmatpush2.bf16.msra.mxu0 0
  %1857 = vmatprep.subr.bf16.mxu0 0
  %1858 = vmatpush2.bf16.msra.mxu0 0
  %1859 = vmatprep.subr.bf16.mxu0 0
  %1860 = vmatpush2.bf16.msra.mxu0 0
  %1861 = vmatprep.subr.bf16.mxu0 0
  %1862 = vmatpush2.bf16.msra.mxu0 0
  %1863 = vmatprep.subr.bf16.mxu0 0
  %1864 = vmatpush2.bf16.msra.mxu0 0
  %1865 = vmatprep.subr.bf16.mxu0 0
  %1866 = vmatpush2.bf16.msra.mxu0 0
  %1867 = vmatprep.subr.bf16.mxu0 0
  %1868 = vmatpush2.bf16.msra.mxu0 0
  %1869 = vmatprep.subr.bf16.mxu0 0
  %1870 = vmatpush2.bf16.msra.mxu0 0
  %1871 = vmatprep.mubr.bf16.mxu0 0
  %1872 = vmatmul.mubr.bf16.gmra.mxu0 %v1828
  %v1873 = vpop.f32.mrf.mxu0
  %v1874 = vadd.f32 %v1770, %v1873
  %v1875 = vpop.f32.mrf.mxu0
  %v1876 = vpop.f32.mrf.mxu0
  %v1877 = vadd.f32 %v1775, %v1876
  %v1878 = vpop.f32.mrf.mxu0
  %1879 = vmatprep.mubr.bf16.mxu0 0
  %1880 = vmatmul.mubr.bf16.gmra.mxu0 %v1831
  %v1881 = vpop.f32.mrf.mxu0
  %v1882 = vadd.f32 %v1780, %v1881
  %v1883 = vpop.f32.mrf.mxu0
  %v1884 = vpop.f32.mrf.mxu0
  %v1885 = vadd.f32 %v1785, %v1884
  %v1886 = vpop.f32.mrf.mxu0
  %1887 = vmatprep.mubr.bf16.mxu0 0
  %1888 = vmatmul.mubr.bf16.gmra.mxu0 %v1834
  %v1889 = vpop.f32.mrf.mxu0
  %v1890 = vadd.f32 %v1790, %v1889
  %v1891 = vpop.f32.mrf.mxu0
  %v1892 = vpop.f32.mrf.mxu0
  %v1893 = vadd.f32 %v1795, %v1892
  %v1894 = vpop.f32.mrf.mxu0
  %1895 = vmatprep.mubr.bf16.mxu0 0
  %1896 = vmatmul.mubr.bf16.gmra.mxu0 %v1837
  %v1897 = vpop.f32.mrf.mxu0
  %v1898 = vadd.f32 %v1800, %v1897
  %v1899 = vpop.f32.mrf.mxu0
  %v1900 = vpop.f32.mrf.mxu0
  %v1901 = vadd.f32 %v1805, %v1900
  %v1902 = vpop.f32.mrf.mxu0
  %1903 = vdwg.mxu0
  %1904 = vxpose.xlu0.b32.start [1/16] %v1735, 128
  %1905 = vxpose.xlu0.b32.cont [2/16] 0.0, 128
  %1906 = vxpose.xlu0.b32.cont [3/16] 0.0, 128
  %1907 = vxpose.xlu0.b32.cont [4/16] 0.0, 128
  %1908 = vxpose.xlu0.b32.cont [5/16] 0.0, 128
  %1909 = vxpose.xlu0.b32.cont [6/16] 0.0, 128
  %1910 = vxpose.xlu0.b32.cont [7/16] 0.0, 128
  %1911 = vxpose.xlu0.b32.cont [8/16] 0.0, 128
  %1912 = vxpose.xlu0.b32.cont [9/16] 0.0, 128
  %1913 = vxpose.xlu0.b32.cont [10/16] 0.0, 128
  %1914 = vxpose.xlu0.b32.cont [11/16] 0.0, 128
  %1915 = vxpose.xlu0.b32.cont [12/16] 0.0, 128
  %1916 = vxpose.xlu0.b32.cont [13/16] 0.0, 128
  %1917 = vxpose.xlu0.b32.cont [14/16] 0.0, 128
  %1918 = vxpose.xlu0.b32.cont [15/16] 0.0, 128
  %1919 = vxpose.xlu0.b32.end [16/16] 0.0, 128
  %v1920 = vpop.trf.xlu0
  %v1921 = vpop.trf.xlu0
  %v1922 = vpop.trf.xlu0
  %v1923 = vpop.trf.xlu0
  %v1924 = vpop.trf.xlu0
  %v1925 = vpop.trf.xlu0
  %v1926 = vpop.trf.xlu0
  %v1927 = vpop.trf.xlu0
  %v1928 = vpop.trf.xlu0
  %v1929 = vpop.trf.xlu0
  %v1930 = vpop.trf.xlu0
  %v1931 = vpop.trf.xlu0
  %v1932 = vpop.trf.xlu0
  %v1933 = vpop.trf.xlu0
  %v1934 = vpop.trf.xlu0
  %v1935 = vpop.trf.xlu0
  %1936 = vxpose.xlu0.b32.start [1/16] %v1738, 128
  %1937 = vxpose.xlu0.b32.cont [2/16] 0.0, 128
  %1938 = vxpose.xlu0.b32.cont [3/16] 0.0, 128
  %1939 = vxpose.xlu0.b32.cont [4/16] 0.0, 128
  %1940 = vxpose.xlu0.b32.cont [5/16] 0.0, 128
  %1941 = vxpose.xlu0.b32.cont [6/16] 0.0, 128
  %1942 = vxpose.xlu0.b32.cont [7/16] 0.0, 128
  %1943 = vxpose.xlu0.b32.cont [8/16] 0.0, 128
  %1944 = vxpose.xlu0.b32.cont [9/16] 0.0, 128
  %1945 = vxpose.xlu0.b32.cont [10/16] 0.0, 128
  %1946 = vxpose.xlu0.b32.cont [11/16] 0.0, 128
  %1947 = vxpose.xlu0.b32.cont [12/16] 0.0, 128
  %1948 = vxpose.xlu0.b32.cont [13/16] 0.0, 128
  %1949 = vxpose.xlu0.b32.cont [14/16] 0.0, 128
  %1950 = vxpose.xlu0.b32.cont [15/16] 0.0, 128
  %1951 = vxpose.xlu0.b32.end [16/16] 0.0, 128
  %v1952 = vpop.trf.xlu0
  %v1953 = vpop.trf.xlu0
  %v1954 = vpop.trf.xlu0
  %v1955 = vpop.trf.xlu0
  %v1956 = vpop.trf.xlu0
  %v1957 = vpop.trf.xlu0
  %v1958 = vpop.trf.xlu0
  %v1959 = vpop.trf.xlu0
  %v1960 = vpop.trf.xlu0
  %v1961 = vpop.trf.xlu0
  %v1962 = vpop.trf.xlu0
  %v1963 = vpop.trf.xlu0
  %v1964 = vpop.trf.xlu0
  %v1965 = vpop.trf.xlu0
  %v1966 = vpop.trf.xlu0
  %v1967 = vpop.trf.xlu0
  %1968 = vxpose.xlu0.b32.start [1/16] %v1743, 128
  %1969 = vxpose.xlu0.b32.cont [2/16] 0.0, 128
  %1970 = vxpose.xlu0.b32.cont [3/16] 0.0, 128
  %1971 = vxpose.xlu0.b32.cont [4/16] 0.0, 128
  %1972 = vxpose.xlu0.b32.cont [5/16] 0.0, 128
  %1973 = vxpose.xlu0.b32.cont [6/16] 0.0, 128
  %1974 = vxpose.xlu0.b32.cont [7/16] 0.0, 128
  %1975 = vxpose.xlu0.b32.cont [8/16] 0.0, 128
  %1976 = vxpose.xlu0.b32.cont [9/16] 0.0, 128
  %1977 = vxpose.xlu0.b32.cont [10/16] 0.0, 128
  %1978 = vxpose.xlu0.b32.cont [11/16] 0.0, 128
  %1979 = vxpose.xlu0.b32.cont [12/16] 0.0, 128
  %1980 = vxpose.xlu0.b32.cont [13/16] 0.0, 128
  %1981 = vxpose.xlu0.b32.cont [14/16] 0.0, 128
  %1982 = vxpose.xlu0.b32.cont [15/16] 0.0, 128
  %1983 = vxpose.xlu0.b32.end [16/16] 0.0, 128
  %v1984 = vpop.trf.xlu0
  %v1985 = vpop.trf.xlu0
  %v1986 = vpop.trf.xlu0
  %v1987 = vpop.trf.xlu0
  %v1988 = vpop.trf.xlu0
  %v1989 = vpop.trf.xlu0
  %v1990 = vpop.trf.xlu0
  %v1991 = vpop.trf.xlu0
  %v1992 = vpop.trf.xlu0
  %v1993 = vpop.trf.xlu0
  %v1994 = vpop.trf.xlu0
  %v1995 = vpop.trf.xlu0
  %v1996 = vpop.trf.xlu0
  %v1997 = vpop.trf.xlu0
  %v1998 = vpop.trf.xlu0
  %v1999 = vpop.trf.xlu0
  %2000 = vxpose.xlu0.b32.start [1/16] %v1746, 128
  %2001 = vxpose.xlu0.b32.cont [2/16] 0.0, 128
  %2002 = vxpose.xlu0.b32.cont [3/16] 0.0, 128
  %2003 = vxpose.xlu0.b32.cont [4/16] 0.0, 128
  %2004 = vxpose.xlu0.b32.cont [5/16] 0.0, 128
  %2005 = vxpose.xlu0.b32.cont [6/16] 0.0, 128
  %2006 = vxpose.xlu0.b32.cont [7/16] 0.0, 128
  %2007 = vxpose.xlu0.b32.cont [8/16] 0.0, 128
  %2008 = vxpose.xlu0.b32.cont [9/16] 0.0, 128
  %2009 = vxpose.xlu0.b32.cont [10/16] 0.0, 128
  %2010 = vxpose.xlu0.b32.cont [11/16] 0.0, 128
  %2011 = vxpose.xlu0.b32.cont [12/16] 0.0, 128
  %2012 = vxpose.xlu0.b32.cont [13/16] 0.0, 128
  %2013 = vxpose.xlu0.b32.cont [14/16] 0.0, 128
  %2014 = vxpose.xlu0.b32.cont [15/16] 0.0, 128
  %2015 = vxpose.xlu0.b32.end [16/16] 0.0, 128
  %v2016 = vpop.trf.xlu0
  %v2017 = vpop.trf.xlu0
  %v2018 = vpop.trf.xlu0
  %v2019 = vpop.trf.xlu0
  %v2020 = vpop.trf.xlu0
  %v2021 = vpop.trf.xlu0
  %v2022 = vpop.trf.xlu0
  %v2023 = vpop.trf.xlu0
  %v2024 = vpop.trf.xlu0
  %v2025 = vpop.trf.xlu0
  %v2026 = vpop.trf.xlu0
  %v2027 = vpop.trf.xlu0
  %v2028 = vpop.trf.xlu0
  %v2029 = vpop.trf.xlu0
  %v2030 = vpop.trf.xlu0
  %v2031 = vpop.trf.xlu0
  %v2032 = vpack.c.bf16 %v1920, %v1920
  %v2033 = vpack.c.bf16 %v1952, %v1952
  %v2034 = vpack.c.bf16 %v1984, %v1984
  %v2035 = vpack.c.bf16 %v2016, %v2016
  %v2036 = vpack.c.bf16 %v1874, %v1874
  %v2037 = vpack.c.bf16 %v1877, %v1877
  %v2038 = vpack.c.bf16 %v1882, %v1882
  %v2039 = vpack.c.bf16 %v1885, %v1885
  %v2041 = vsel %vm525, %v2032, 0
  %v2044 = vsel %vm529, %v2036, 0
  %2046 = vmatprep.subr.bf16.mxu0 0
  %2047 = vmatpush1.bf16.msra.mxu0 0
  %2048 = vmatprep.subr.bf16.mxu0 0
  %2049 = vmatpush1.bf16.msra.mxu0 0
  %2050 = vmatprep.subr.bf16.mxu0 0
  %2051 = vmatpush1.bf16.msra.mxu0 0
  %2052 = vmatprep.subr.bf16.mxu0 0
  %2053 = vmatpush1.bf16.msra.mxu0 0
  %2054 = vmatprep.subr.bf16.mxu0 0
  %2055 = vmatpush1.bf16.msra.mxu0 0
  %2056 = vmatprep.subr.bf16.mxu0 0
  %2057 = vmatpush1.bf16.msra.mxu0 0
  %2058 = vmatprep.subr.bf16.mxu0 0
  %2059 = vmatpush1.bf16.msra.mxu0 0
  %2060 = vmatprep.subr.bf16.mxu0 0
  %2061 = vmatpush1.bf16.msra.mxu0 %v2044
  %2062 = vmatprep.subr.bf16.mxu0 0
  %2063 = vmatpush2.bf16.msra.mxu0 0
  %2064 = vmatprep.subr.bf16.mxu0 0
  %2065 = vmatpush2.bf16.msra.mxu0 0
  %2066 = vmatprep.subr.bf16.mxu0 0
  %2067 = vmatpush2.bf16.msra.mxu0 0
  %2068 = vmatprep.subr.bf16.mxu0 0
  %2069 = vmatpush2.bf16.msra.mxu0 0
  %2070 = vmatprep.subr.bf16.mxu0 0
  %2071 = vmatpush2.bf16.msra.mxu0 0
  %2072 = vmatprep.subr.bf16.mxu0 0
  %2073 = vmatpush2.bf16.msra.mxu0 0
  %2074 = vmatprep.subr.bf16.mxu0 0
  %2075 = vmatpush2.bf16.msra.mxu0 0
  %2076 = vmatprep.subr.bf16.mxu0 0
  %2077 = vmatpush2.bf16.msra.mxu0 0
  %2078 = vmatprep.mubr.bf16.mxu0 0
  %2079 = vmatmul.mubr.bf16.gmra.mxu0 %v2041
  %v2080 = vpop.f32.mrf.mxu0
  %v2081 = vadd.f32 0.0, %v2080
  %v2082 = vpop.f32.mrf.mxu0
  %v2083 = vpop.f32.mrf.mxu0
  %v2084 = vpop.f32.mrf.mxu0
  %2085 = vdwg.mxu0
  %v2087 = vsel %vm525, %v2033, 0
  %v2090 = vsel %vm529, %v2037, 0
  %2092 = vmatprep.subr.bf16.mxu0 0
  %2093 = vmatpush1.bf16.msra.mxu0 0
  %2094 = vmatprep.subr.bf16.mxu0 0
  %2095 = vmatpush1.bf16.msra.mxu0 0
  %2096 = vmatprep.subr.bf16.mxu0 0
  %2097 = vmatpush1.bf16.msra.mxu0 0
  %2098 = vmatprep.subr.bf16.mxu0 0
  %2099 = vmatpush1.bf16.msra.mxu0 0
  %2100 = vmatprep.subr.bf16.mxu0 0
  %2101 = vmatpush1.bf16.msra.mxu0 0
  %2102 = vmatprep.subr.bf16.mxu0 0
  %2103 = vmatpush1.bf16.msra.mxu0 0
  %2104 = vmatprep.subr.bf16.mxu0 0
  %2105 = vmatpush1.bf16.msra.mxu0 0
  %2106 = vmatprep.subr.bf16.mxu0 0
  %2107 = vmatpush1.bf16.msra.mxu0 %v2090
  %2108 = vmatprep.subr.bf16.mxu0 0
  %2109 = vmatpush2.bf16.msra.mxu0 0
  %2110 = vmatprep.subr.bf16.mxu0 0
  %2111 = vmatpush2.bf16.msra.mxu0 0
  %2112 = vmatprep.subr.bf16.mxu0 0
  %2113 = vmatpush2.bf16.msra.mxu0 0
  %2114 = vmatprep.subr.bf16.mxu0 0
  %2115 = vmatpush2.bf16.msra.mxu0 0
  %2116 = vmatprep.subr.bf16.mxu0 0
  %2117 = vmatpush2.bf16.msra.mxu0 0
  %2118 = vmatprep.subr.bf16.mxu0 0
  %2119 = vmatpush2.bf16.msra.mxu0 0
  %2120 = vmatprep.subr.bf16.mxu0 0
  %2121 = vmatpush2.bf16.msra.mxu0 0
  %2122 = vmatprep.subr.bf16.mxu0 0
  %2123 = vmatpush2.bf16.msra.mxu0 0
  %2124 = vmatprep.mubr.bf16.mxu0 0
  %2125 = vmatmul.mubr.bf16.gmra.mxu0 %v2087
  %v2126 = vpop.f32.mrf.mxu0
  %v2127 = vadd.f32 0.0, %v2126
  %v2128 = vpop.f32.mrf.mxu0
  %v2129 = vpop.f32.mrf.mxu0
  %v2130 = vpop.f32.mrf.mxu0
  %2131 = vdwg.mxu0
  %v2133 = vsel %vm525, %v2034, 0
  %v2136 = vsel %vm529, %v2038, 0
  %2138 = vmatprep.subr.bf16.mxu0 0
  %2139 = vmatpush1.bf16.msra.mxu0 0
  %2140 = vmatprep.subr.bf16.mxu0 0
  %2141 = vmatpush1.bf16.msra.mxu0 0
  %2142 = vmatprep.subr.bf16.mxu0 0
  %2143 = vmatpush1.bf16.msra.mxu0 0
  %2144 = vmatprep.subr.bf16.mxu0 0
  %2145 = vmatpush1.bf16.msra.mxu0 0
  %2146 = vmatprep.subr.bf16.mxu0 0
  %2147 = vmatpush1.bf16.msra.mxu0 0
  %2148 = vmatprep.subr.bf16.mxu0 0
  %2149 = vmatpush1.bf16.msra.mxu0 0
  %2150 = vmatprep.subr.bf16.mxu0 0
  %2151 = vmatpush1.bf16.msra.mxu0 0
  %2152 = vmatprep.subr.bf16.mxu0 0
  %2153 = vmatpush1.bf16.msra.mxu0 %v2136
  %2154 = vmatprep.subr.bf16.mxu0 0
  %2155 = vmatpush2.bf16.msra.mxu0 0
  %2156 = vmatprep.subr.bf16.mxu0 0
  %2157 = vmatpush2.bf16.msra.mxu0 0
  %2158 = vmatprep.subr.bf16.mxu0 0
  %2159 = vmatpush2.bf16.msra.mxu0 0
  %2160 = vmatprep.subr.bf16.mxu0 0
  %2161 = vmatpush2.bf16.msra.mxu0 0
  %2162 = vmatprep.subr.bf16.mxu0 0
  %2163 = vmatpush2.bf16.msra.mxu0 0
  %2164 = vmatprep.subr.bf16.mxu0 0
  %2165 = vmatpush2.bf16.msra.mxu0 0
  %2166 = vmatprep.subr.bf16.mxu0 0
  %2167 = vmatpush2.bf16.msra.mxu0 0
  %2168 = vmatprep.subr.bf16.mxu0 0
  %2169 = vmatpush2.bf16.msra.mxu0 0
  %2170 = vmatprep.mubr.bf16.mxu0 0
  %2171 = vmatmul.mubr.bf16.gmra.mxu0 %v2133
  %v2172 = vpop.f32.mrf.mxu0
  %v2173 = vadd.f32 0.0, %v2172
  %v2174 = vpop.f32.mrf.mxu0
  %v2175 = vpop.f32.mrf.mxu0
  %v2176 = vpop.f32.mrf.mxu0
  %2177 = vdwg.mxu0
  %v2179 = vsel %vm525, %v2035, 0
  %v2182 = vsel %vm529, %v2039, 0
  %2184 = vmatprep.subr.bf16.mxu0 0
  %2185 = vmatpush1.bf16.msra.mxu0 0
  %2186 = vmatprep.subr.bf16.mxu0 0
  %2187 = vmatpush1.bf16.msra.mxu0 0
  %2188 = vmatprep.subr.bf16.mxu0 0
  %2189 = vmatpush1.bf16.msra.mxu0 0
  %2190 = vmatprep.subr.bf16.mxu0 0
  %2191 = vmatpush1.bf16.msra.mxu0 0
  %2192 = vmatprep.subr.bf16.mxu0 0
  %2193 = vmatpush1.bf16.msra.mxu0 0
  %2194 = vmatprep.subr.bf16.mxu0 0
  %2195 = vmatpush1.bf16.msra.mxu0 0
  %2196 = vmatprep.subr.bf16.mxu0 0
  %2197 = vmatpush1.bf16.msra.mxu0 0
  %2198 = vmatprep.subr.bf16.mxu0 0
  %2199 = vmatpush1.bf16.msra.mxu0 %v2182
  %2200 = vmatprep.subr.bf16.mxu0 0
  %2201 = vmatpush2.bf16.msra.mxu0 0
  %2202 = vmatprep.subr.bf16.mxu0 0
  %2203 = vmatpush2.bf16.msra.mxu0 0
  %2204 = vmatprep.subr.bf16.mxu0 0
  %2205 = vmatpush2.bf16.msra.mxu0 0
  %2206 = vmatprep.subr.bf16.mxu0 0
  %2207 = vmatpush2.bf16.msra.mxu0 0
  %2208 = vmatprep.subr.bf16.mxu0 0
  %2209 = vmatpush2.bf16.msra.mxu0 0
  %2210 = vmatprep.subr.bf16.mxu0 0
  %2211 = vmatpush2.bf16.msra.mxu0 0
  %2212 = vmatprep.subr.bf16.mxu0 0
  %2213 = vmatpush2.bf16.msra.mxu0 0
  %2214 = vmatprep.subr.bf16.mxu0 0
  %2215 = vmatpush2.bf16.msra.mxu0 0
  %2216 = vmatprep.mubr.bf16.mxu0 0
  %2217 = vmatmul.mubr.bf16.gmra.mxu0 %v2179
  %v2218 = vpop.f32.mrf.mxu0
  %v2219 = vadd.f32 0.0, %v2218
  %v2220 = vpop.f32.mrf.mxu0
  %v2221 = vpop.f32.mrf.mxu0
  %v2222 = vpop.f32.mrf.mxu0
  %2223 = vdwg.mxu0
  %v2224 = vsel %vm525, %v2081, -inf
  %2225 = vmax.xlane.f32.xlu0 %v2224
  %v2226 = vpop.xlane.xlu0 %2225
  %v2227 = vsel %vm525, %v2127, -inf
  %2228 = vmax.xlane.f32.xlu0 %v2227
  %v2229 = vpop.xlane.xlu0 %2228
  %v2230 = vsel %vm525, %v2173, -inf
  %2231 = vmax.xlane.f32.xlu0 %v2230
  %v2232 = vpop.xlane.xlu0 %2231
  %v2233 = vsel %vm525, %v2219, -inf
  %2234 = vmax.xlane.f32.xlu0 %v2233
  %v2235 = vpop.xlane.xlu0 %2234
  %v2236 = vsub.f32 %v2081, %v2226
  %v2237 = vsub.f32 %v2127, %v2229
  %v2238 = vsub.f32 %v2173, %v2232
  %v2239 = vsub.f32 %v2219, %v2235
  %v2240 = vmul.f32 %v2236, 1.442695
  %v2241 = vpow.pop %v2240
  %v2242 = vmul.f32 %v2237, 1.442695
  %v2243 = vpow.pop %v2242
  %v2244 = vmul.f32 %v2238, 1.442695
  %v2245 = vpow.pop %v2244
  %v2246 = vmul.f32 %v2239, 1.442695
  %v2247 = vpow.pop %v2246
  %v2248 = vsel %vm525, %v2241, 0.0
  %2249 = vadd.xlane.f32.xlu0 %v2248
  %v2250 = vpop.xlane.xlu0 %2249
  %v2251 = vsel %vm525, %v2243, 0.0
  %2252 = vadd.xlane.f32.xlu0 %v2251
  %v2253 = vpop.xlane.xlu0 %2252
  %v2254 = vsel %vm525, %v2245, 0.0
  %2255 = vadd.xlane.f32.xlu0 %v2254
  %v2256 = vpop.xlane.xlu0 %2255
  %v2257 = vsel %vm525, %v2247, 0.0
  %2258 = vadd.xlane.f32.xlu0 %v2257
  %v2259 = vpop.xlane.xlu0 %2258
  %v2260 = vrcp.pop %v2250
  %v2261 = vrcp.pop %v2253
  %v2262 = vrcp.pop %v2256
  %v2263 = vrcp.pop %v2259
  %v2264 = vmul.f32 %v2241, %v2260
  %v2265 = vmul.f32 %v2243, %v2261
  %v2266 = vmul.f32 %v2245, %v2262
  %v2267 = vmul.f32 %v2247, %v2263
  %v2268 = vpack.c.bf16 %v1890, %v1890
  %v2269 = vpack.c.bf16 %v1893, %v1893
  %v2270 = vpack.c.bf16 %v1898, %v1898
  %v2271 = vpack.c.bf16 %v1901, %v1901
  %v2272 = vpack.c.bf16 %v2264, %v2264
  %v2273 = vpack.c.bf16 %v2265, %v2265
  %v2274 = vpack.c.bf16 %v2266, %v2266
  %v2275 = vpack.c.bf16 %v2267, %v2267
  %v2277 = vsel %vm525, %v2268, 0
  %v2280 = vsel %vm525, %v2272, 0
  %2282 = vmatprep.subr.bf16.mxu0 0
  %2283 = vmatpush1.bf16.xpose.msra.mxu0 0
  %2284 = vmatprep.subr.bf16.mxu0 0
  %2285 = vmatpush1.bf16.xpose.msra.mxu0 0
  %2286 = vmatprep.subr.bf16.mxu0 0
  %2287 = vmatpush1.bf16.xpose.msra.mxu0 0
  %2288 = vmatprep.subr.bf16.mxu0 0
  %2289 = vmatpush1.bf16.xpose.msra.mxu0 0
  %2290 = vmatprep.subr.bf16.mxu0 0
  %2291 = vmatpush1.bf16.xpose.msra.mxu0 0
  %2292 = vmatprep.subr.bf16.mxu0 0
  %2293 = vmatpush1.bf16.xpose.msra.mxu0 0
  %2294 = vmatprep.subr.bf16.mxu0 0
  %2295 = vmatpush1.bf16.xpose.msra.mxu0 0
  %2296 = vmatprep.subr.bf16.mxu0 0
  %2297 = vmatpush1.bf16.xpose.msra.mxu0 %v2280
  %2298 = vmatprep.subr.bf16.mxu0 0
  %2299 = vmatpush2.bf16.xpose.msra.mxu0 0
  %2300 = vmatprep.subr.bf16.mxu0 0
  %2301 = vmatpush2.bf16.xpose.msra.mxu0 0
  %2302 = vmatprep.subr.bf16.mxu0 0
  %2303 = vmatpush2.bf16.xpose.msra.mxu0 0
  %2304 = vmatprep.subr.bf16.mxu0 0
  %2305 = vmatpush2.bf16.xpose.msra.mxu0 0
  %2306 = vmatprep.subr.bf16.mxu0 0
  %2307 = vmatpush2.bf16.xpose.msra.mxu0 0
  %2308 = vmatprep.subr.bf16.mxu0 0
  %2309 = vmatpush2.bf16.xpose.msra.mxu0 0
  %2310 = vmatprep.subr.bf16.mxu0 0
  %2311 = vmatpush2.bf16.xpose.msra.mxu0 0
  %2312 = vmatprep.subr.bf16.mxu0 0
  %2313 = vmatpush2.bf16.xpose.msra.mxu0 0
  %2314 = vmatprep.mubr.bf16.mxu0 0
  %2315 = vmatmul.mubr.bf16.gmra.mxu0 %v2277
  %v2316 = vpop.f32.mrf.mxu0
  %v2317 = vadd.f32 0.0, %v2316
  %v2318 = vpop.f32.mrf.mxu0
  %v2319 = vpop.f32.mrf.mxu0
  %v2320 = vpop.f32.mrf.mxu0
  %2321 = vdwg.mxu0
  %v2323 = vsel %vm525, %v2269, 0
  %v2326 = vsel %vm525, %v2273, 0
  %2328 = vmatprep.subr.bf16.mxu0 0
  %2329 = vmatpush1.bf16.xpose.msra.mxu0 0
  %2330 = vmatprep.subr.bf16.mxu0 0
  %2331 = vmatpush1.bf16.xpose.msra.mxu0 0
  %2332 = vmatprep.subr.bf16.mxu0 0
  %2333 = vmatpush1.bf16.xpose.msra.mxu0 0
  %2334 = vmatprep.subr.bf16.mxu0 0
  %2335 = vmatpush1.bf16.xpose.msra.mxu0 0
  %2336 = vmatprep.subr.bf16.mxu0 0
  %2337 = vmatpush1.bf16.xpose.msra.mxu0 0
  %2338 = vmatprep.subr.bf16.mxu0 0
  %2339 = vmatpush1.bf16.xpose.msra.mxu0 0
  %2340 = vmatprep.subr.bf16.mxu0 0
  %2341 = vmatpush1.bf16.xpose.msra.mxu0 0
  %2342 = vmatprep.subr.bf16.mxu0 0
  %2343 = vmatpush1.bf16.xpose.msra.mxu0 %v2326
  %2344 = vmatprep.subr.bf16.mxu0 0
  %2345 = vmatpush2.bf16.xpose.msra.mxu0 0
  %2346 = vmatprep.subr.bf16.mxu0 0
  %2347 = vmatpush2.bf16.xpose.msra.mxu0 0
  %2348 = vmatprep.subr.bf16.mxu0 0
  %2349 = vmatpush2.bf16.xpose.msra.mxu0 0
  %2350 = vmatprep.subr.bf16.mxu0 0
  %2351 = vmatpush2.bf16.xpose.msra.mxu0 0
  %2352 = vmatprep.subr.bf16.mxu0 0
  %2353 = vmatpush2.bf16.xpose.msra.mxu0 0
  %2354 = vmatprep.subr.bf16.mxu0 0
  %2355 = vmatpush2.bf16.xpose.msra.mxu0 0
  %2356 = vmatprep.subr.bf16.mxu0 0
  %2357 = vmatpush2.bf16.xpose.msra.mxu0 0
  %2358 = vmatprep.subr.bf16.mxu0 0
  %2359 = vmatpush2.bf16.xpose.msra.mxu0 0
  %2360 = vmatprep.mubr.bf16.mxu0 0
  %2361 = vmatmul.mubr.bf16.gmra.mxu0 %v2323
  %v2362 = vpop.f32.mrf.mxu0
  %v2363 = vadd.f32 0.0, %v2362
  %v2364 = vpop.f32.mrf.mxu0
  %v2365 = vpop.f32.mrf.mxu0
  %v2366 = vpop.f32.mrf.mxu0
  %2367 = vdwg.mxu0
  %v2369 = vsel %vm525, %v2270, 0
  %v2372 = vsel %vm525, %v2274, 0
  %2374 = vmatprep.subr.bf16.mxu0 0
  %2375 = vmatpush1.bf16.xpose.msra.mxu0 0
  %2376 = vmatprep.subr.bf16.mxu0 0
  %2377 = vmatpush1.bf16.xpose.msra.mxu0 0
  %2378 = vmatprep.subr.bf16.mxu0 0
  %2379 = vmatpush1.bf16.xpose.msra.mxu0 0
  %2380 = vmatprep.subr.bf16.mxu0 0
  %2381 = vmatpush1.bf16.xpose.msra.mxu0 0
  %2382 = vmatprep.subr.bf16.mxu0 0
  %2383 = vmatpush1.bf16.xpose.msra.mxu0 0
  %2384 = vmatprep.subr.bf16.mxu0 0
  %2385 = vmatpush1.bf16.xpose.msra.mxu0 0
  %2386 = vmatprep.subr.bf16.mxu0 0
  %2387 = vmatpush1.bf16.xpose.msra.mxu0 0
  %2388 = vmatprep.subr.bf16.mxu0 0
  %2389 = vmatpush1.bf16.xpose.msra.mxu0 %v2372
  %2390 = vmatprep.subr.bf16.mxu0 0
  %2391 = vmatpush2.bf16.xpose.msra.mxu0 0
  %2392 = vmatprep.subr.bf16.mxu0 0
  %2393 = vmatpush2.bf16.xpose.msra.mxu0 0
  %2394 = vmatprep.subr.bf16.mxu0 0
  %2395 = vmatpush2.bf16.xpose.msra.mxu0 0
  %2396 = vmatprep.subr.bf16.mxu0 0
  %2397 = vmatpush2.bf16.xpose.msra.mxu0 0
  %2398 = vmatprep.subr.bf16.mxu0 0
  %2399 = vmatpush2.bf16.xpose.msra.mxu0 0
  %2400 = vmatprep.subr.bf16.mxu0 0
  %2401 = vmatpush2.bf16.xpose.msra.mxu0 0
  %2402 = vmatprep.subr.bf16.mxu0 0
  %2403 = vmatpush2.bf16.xpose.msra.mxu0 0
  %2404 = vmatprep.subr.bf16.mxu0 0
  %2405 = vmatpush2.bf16.xpose.msra.mxu0 0
  %2406 = vmatprep.mubr.bf16.mxu0 0
  %2407 = vmatmul.mubr.bf16.gmra.mxu0 %v2369
  %v2408 = vpop.f32.mrf.mxu0
  %v2409 = vadd.f32 0.0, %v2408
  %v2410 = vpop.f32.mrf.mxu0
  %v2411 = vpop.f32.mrf.mxu0
  %v2412 = vpop.f32.mrf.mxu0
  %2413 = vdwg.mxu0
  %v2415 = vsel %vm525, %v2271, 0
  %v2418 = vsel %vm525, %v2275, 0
  %2420 = vmatprep.subr.bf16.mxu0 0
  %2421 = vmatpush1.bf16.xpose.msra.mxu0 0
  %2422 = vmatprep.subr.bf16.mxu0 0
  %2423 = vmatpush1.bf16.xpose.msra.mxu0 0
  %2424 = vmatprep.subr.bf16.mxu0 0
  %2425 = vmatpush1.bf16.xpose.msra.mxu0 0
  %2426 = vmatprep.subr.bf16.mxu0 0
  %2427 = vmatpush1.bf16.xpose.msra.mxu0 0
  %2428 = vmatprep.subr.bf16.mxu0 0
  %2429 = vmatpush1.bf16.xpose.msra.mxu0 0
  %2430 = vmatprep.subr.bf16.mxu0 0
  %2431 = vmatpush1.bf16.xpose.msra.mxu0 0
  %2432 = vmatprep.subr.bf16.mxu0 0
  %2433 = vmatpush1.bf16.xpose.msra.mxu0 0
  %2434 = vmatprep.subr.bf16.mxu0 0
  %2435 = vmatpush1.bf16.xpose.msra.mxu0 %v2418
  %2436 = vmatprep.subr.bf16.mxu0 0
  %2437 = vmatpush2.bf16.xpose.msra.mxu0 0
  %2438 = vmatprep.subr.bf16.mxu0 0
  %2439 = vmatpush2.bf16.xpose.msra.mxu0 0
  %2440 = vmatprep.subr.bf16.mxu0 0
  %2441 = vmatpush2.bf16.xpose.msra.mxu0 0
  %2442 = vmatprep.subr.bf16.mxu0 0
  %2443 = vmatpush2.bf16.xpose.msra.mxu0 0
  %2444 = vmatprep.subr.bf16.mxu0 0
  %2445 = vmatpush2.bf16.xpose.msra.mxu0 0
  %2446 = vmatprep.subr.bf16.mxu0 0
  %2447 = vmatpush2.bf16.xpose.msra.mxu0 0
  %2448 = vmatprep.subr.bf16.mxu0 0
  %2449 = vmatpush2.bf16.xpose.msra.mxu0 0
  %2450 = vmatprep.subr.bf16.mxu0 0
  %2451 = vmatpush2.bf16.xpose.msra.mxu0 0
  %2452 = vmatprep.mubr.bf16.mxu0 0
  %2453 = vmatmul.mubr.bf16.gmra.mxu0 %v2415
  %v2454 = vpop.f32.mrf.mxu0
  %v2455 = vadd.f32 0.0, %v2454
  %v2456 = vpop.f32.mrf.mxu0
  %v2457 = vpop.f32.mrf.mxu0
  %v2458 = vpop.f32.mrf.mxu0
  %2459 = vdwg.mxu0
  %2464 = vrot.lane.b32.xlu0 %v1735, 120
  %v2465 = vpop.permute.xlu0 %2464
  %2466 = vrot.lane.b32.xlu0 %v1738, 120
  %v2467 = vpop.permute.xlu0 %2466
  %2468 = vrot.lane.b32.xlu0 %v1743, 120
  %v2469 = vpop.permute.xlu0 %2468
  %2470 = vrot.lane.b32.xlu0 %v1746, 120
  %v2471 = vpop.permute.xlu0 %2470
  %2476 = vxpose.xlu0.b32.start [1/16] %v2465, 128
  %2477 = vxpose.xlu0.b32.cont [2/16] 0.0, 128
  %2478 = vxpose.xlu0.b32.cont [3/16] 0.0, 128
  %2479 = vxpose.xlu0.b32.cont [4/16] 0.0, 128
  %2480 = vxpose.xlu0.b32.cont [5/16] 0.0, 128
  %2481 = vxpose.xlu0.b32.cont [6/16] 0.0, 128
  %2482 = vxpose.xlu0.b32.cont [7/16] 0.0, 128
  %2483 = vxpose.xlu0.b32.cont [8/16] 0.0, 128
  %2484 = vxpose.xlu0.b32.cont [9/16] 0.0, 128
  %2485 = vxpose.xlu0.b32.cont [10/16] 0.0, 128
  %2486 = vxpose.xlu0.b32.cont [11/16] 0.0, 128
  %2487 = vxpose.xlu0.b32.cont [12/16] 0.0, 128
  %2488 = vxpose.xlu0.b32.cont [13/16] 0.0, 128
  %2489 = vxpose.xlu0.b32.cont [14/16] 0.0, 128
  %2490 = vxpose.xlu0.b32.cont [15/16] 0.0, 128
  %2491 = vxpose.xlu0.b32.end [16/16] 0.0, 128
  %v2492 = vpop.trf.xlu0
  %v2493 = vpop.trf.xlu0
  %v2494 = vpop.trf.xlu0
  %v2495 = vpop.trf.xlu0
  %v2496 = vpop.trf.xlu0
  %v2497 = vpop.trf.xlu0
  %v2498 = vpop.trf.xlu0
  %v2499 = vpop.trf.xlu0
  %v2500 = vpop.trf.xlu0
  %v2501 = vpop.trf.xlu0
  %v2502 = vpop.trf.xlu0
  %v2503 = vpop.trf.xlu0
  %v2504 = vpop.trf.xlu0
  %v2505 = vpop.trf.xlu0
  %v2506 = vpop.trf.xlu0
  %v2507 = vpop.trf.xlu0
  %2508 = vxpose.xlu0.b32.start [1/16] %v2467, 128
  %2509 = vxpose.xlu0.b32.cont [2/16] 0.0, 128
  %2510 = vxpose.xlu0.b32.cont [3/16] 0.0, 128
  %2511 = vxpose.xlu0.b32.cont [4/16] 0.0, 128
  %2512 = vxpose.xlu0.b32.cont [5/16] 0.0, 128
  %2513 = vxpose.xlu0.b32.cont [6/16] 0.0, 128
  %2514 = vxpose.xlu0.b32.cont [7/16] 0.0, 128
  %2515 = vxpose.xlu0.b32.cont [8/16] 0.0, 128
  %2516 = vxpose.xlu0.b32.cont [9/16] 0.0, 128
  %2517 = vxpose.xlu0.b32.cont [10/16] 0.0, 128
  %2518 = vxpose.xlu0.b32.cont [11/16] 0.0, 128
  %2519 = vxpose.xlu0.b32.cont [12/16] 0.0, 128
  %2520 = vxpose.xlu0.b32.cont [13/16] 0.0, 128
  %2521 = vxpose.xlu0.b32.cont [14/16] 0.0, 128
  %2522 = vxpose.xlu0.b32.cont [15/16] 0.0, 128
  %2523 = vxpose.xlu0.b32.end [16/16] 0.0, 128
  %v2524 = vpop.trf.xlu0
  %v2525 = vpop.trf.xlu0
  %v2526 = vpop.trf.xlu0
  %v2527 = vpop.trf.xlu0
  %v2528 = vpop.trf.xlu0
  %v2529 = vpop.trf.xlu0
  %v2530 = vpop.trf.xlu0
  %v2531 = vpop.trf.xlu0
  %v2532 = vpop.trf.xlu0
  %v2533 = vpop.trf.xlu0
  %v2534 = vpop.trf.xlu0
  %v2535 = vpop.trf.xlu0
  %v2536 = vpop.trf.xlu0
  %v2537 = vpop.trf.xlu0
  %v2538 = vpop.trf.xlu0
  %v2539 = vpop.trf.xlu0
  %2540 = vxpose.xlu0.b32.start [1/16] %v2469, 128
  %2541 = vxpose.xlu0.b32.cont [2/16] 0.0, 128
  %2542 = vxpose.xlu0.b32.cont [3/16] 0.0, 128
  %2543 = vxpose.xlu0.b32.cont [4/16] 0.0, 128
  %2544 = vxpose.xlu0.b32.cont [5/16] 0.0, 128
  %2545 = vxpose.xlu0.b32.cont [6/16] 0.0, 128
  %2546 = vxpose.xlu0.b32.cont [7/16] 0.0, 128
  %2547 = vxpose.xlu0.b32.cont [8/16] 0.0, 128
  %2548 = vxpose.xlu0.b32.cont [9/16] 0.0, 128
  %2549 = vxpose.xlu0.b32.cont [10/16] 0.0, 128
  %2550 = vxpose.xlu0.b32.cont [11/16] 0.0, 128
  %2551 = vxpose.xlu0.b32.cont [12/16] 0.0, 128
  %2552 = vxpose.xlu0.b32.cont [13/16] 0.0, 128
  %2553 = vxpose.xlu0.b32.cont [14/16] 0.0, 128
  %2554 = vxpose.xlu0.b32.cont [15/16] 0.0, 128
  %2555 = vxpose.xlu0.b32.end [16/16] 0.0, 128
  %v2556 = vpop.trf.xlu0
  %v2557 = vpop.trf.xlu0
  %v2558 = vpop.trf.xlu0
  %v2559 = vpop.trf.xlu0
  %v2560 = vpop.trf.xlu0
  %v2561 = vpop.trf.xlu0
  %v2562 = vpop.trf.xlu0
  %v2563 = vpop.trf.xlu0
  %v2564 = vpop.trf.xlu0
  %v2565 = vpop.trf.xlu0
  %v2566 = vpop.trf.xlu0
  %v2567 = vpop.trf.xlu0
  %v2568 = vpop.trf.xlu0
  %v2569 = vpop.trf.xlu0
  %v2570 = vpop.trf.xlu0
  %v2571 = vpop.trf.xlu0
  %2572 = vxpose.xlu0.b32.start [1/16] %v2471, 128
  %2573 = vxpose.xlu0.b32.cont [2/16] 0.0, 128
  %2574 = vxpose.xlu0.b32.cont [3/16] 0.0, 128
  %2575 = vxpose.xlu0.b32.cont [4/16] 0.0, 128
  %2576 = vxpose.xlu0.b32.cont [5/16] 0.0, 128
  %2577 = vxpose.xlu0.b32.cont [6/16] 0.0, 128
  %2578 = vxpose.xlu0.b32.cont [7/16] 0.0, 128
  %2579 = vxpose.xlu0.b32.cont [8/16] 0.0, 128
  %2580 = vxpose.xlu0.b32.cont [9/16] 0.0, 128
  %2581 = vxpose.xlu0.b32.cont [10/16] 0.0, 128
  %2582 = vxpose.xlu0.b32.cont [11/16] 0.0, 128
  %2583 = vxpose.xlu0.b32.cont [12/16] 0.0, 128
  %2584 = vxpose.xlu0.b32.cont [13/16] 0.0, 128
  %2585 = vxpose.xlu0.b32.cont [14/16] 0.0, 128
  %2586 = vxpose.xlu0.b32.cont [15/16] 0.0, 128
  %2587 = vxpose.xlu0.b32.end [16/16] 0.0, 128
  %v2588 = vpop.trf.xlu0
  %v2589 = vpop.trf.xlu0
  %v2590 = vpop.trf.xlu0
  %v2591 = vpop.trf.xlu0
  %v2592 = vpop.trf.xlu0
  %v2593 = vpop.trf.xlu0
  %v2594 = vpop.trf.xlu0
  %v2595 = vpop.trf.xlu0
  %v2596 = vpop.trf.xlu0
  %v2597 = vpop.trf.xlu0
  %v2598 = vpop.trf.xlu0
  %v2599 = vpop.trf.xlu0
  %v2600 = vpop.trf.xlu0
  %v2601 = vpop.trf.xlu0
  %v2602 = vpop.trf.xlu0
  %v2603 = vpop.trf.xlu0
  %v2604 = vpack.c.bf16 %v2492, %v2492
  %v2605 = vpack.c.bf16 %v2524, %v2524
  %v2606 = vpack.c.bf16 %v2556, %v2556
  %v2607 = vpack.c.bf16 %v2588, %v2588
  %2609 = vrot.lane.b32.xlu0 %v2036, 120
  %v2610 = vpop.permute.xlu0 %2609
  %v2612 = vsel %vm525, %v2604, 0
  %v2615 = vsel %vm529, %v2610, 0
  %2617 = vmatprep.subr.bf16.mxu0 0
  %2618 = vmatpush1.bf16.msra.mxu0 0
  %2619 = vmatprep.subr.bf16.mxu0 0
  %2620 = vmatpush1.bf16.msra.mxu0 0
  %2621 = vmatprep.subr.bf16.mxu0 0
  %2622 = vmatpush1.bf16.msra.mxu0 0
  %2623 = vmatprep.subr.bf16.mxu0 0
  %2624 = vmatpush1.bf16.msra.mxu0 0
  %2625 = vmatprep.subr.bf16.mxu0 0
  %2626 = vmatpush1.bf16.msra.mxu0 0
  %2627 = vmatprep.subr.bf16.mxu0 0
  %2628 = vmatpush1.bf16.msra.mxu0 0
  %2629 = vmatprep.subr.bf16.mxu0 0
  %2630 = vmatpush1.bf16.msra.mxu0 0
  %2631 = vmatprep.subr.bf16.mxu0 0
  %2632 = vmatpush1.bf16.msra.mxu0 %v2615
  %2633 = vmatprep.subr.bf16.mxu0 0
  %2634 = vmatpush2.bf16.msra.mxu0 0
  %2635 = vmatprep.subr.bf16.mxu0 0
  %2636 = vmatpush2.bf16.msra.mxu0 0
  %2637 = vmatprep.subr.bf16.mxu0 0
  %2638 = vmatpush2.bf16.msra.mxu0 0
  %2639 = vmatprep.subr.bf16.mxu0 0
  %2640 = vmatpush2.bf16.msra.mxu0 0
  %2641 = vmatprep.subr.bf16.mxu0 0
  %2642 = vmatpush2.bf16.msra.mxu0 0
  %2643 = vmatprep.subr.bf16.mxu0 0
  %2644 = vmatpush2.bf16.msra.mxu0 0
  %2645 = vmatprep.subr.bf16.mxu0 0
  %2646 = vmatpush2.bf16.msra.mxu0 0
  %2647 = vmatprep.subr.bf16.mxu0 0
  %2648 = vmatpush2.bf16.msra.mxu0 0
  %2649 = vmatprep.mubr.bf16.mxu0 0
  %2650 = vmatmul.mubr.bf16.gmra.mxu0 %v2612
  %v2651 = vpop.f32.mrf.mxu0
  %v2652 = vadd.f32 0.0, %v2651
  %v2653 = vpop.f32.mrf.mxu0
  %v2654 = vpop.f32.mrf.mxu0
  %v2655 = vpop.f32.mrf.mxu0
  %2656 = vdwg.mxu0
  %2658 = vrot.lane.b32.xlu0 %v2037, 120
  %v2659 = vpop.permute.xlu0 %2658
  %v2661 = vsel %vm525, %v2605, 0
  %v2664 = vsel %vm529, %v2659, 0
  %2666 = vmatprep.subr.bf16.mxu0 0
  %2667 = vmatpush1.bf16.msra.mxu0 0
  %2668 = vmatprep.subr.bf16.mxu0 0
  %2669 = vmatpush1.bf16.msra.mxu0 0
  %2670 = vmatprep.subr.bf16.mxu0 0
  %2671 = vmatpush1.bf16.msra.mxu0 0
  %2672 = vmatprep.subr.bf16.mxu0 0
  %2673 = vmatpush1.bf16.msra.mxu0 0
  %2674 = vmatprep.subr.bf16.mxu0 0
  %2675 = vmatpush1.bf16.msra.mxu0 0
  %2676 = vmatprep.subr.bf16.mxu0 0
  %2677 = vmatpush1.bf16.msra.mxu0 0
  %2678 = vmatprep.subr.bf16.mxu0 0
  %2679 = vmatpush1.bf16.msra.mxu0 0
  %2680 = vmatprep.subr.bf16.mxu0 0
  %2681 = vmatpush1.bf16.msra.mxu0 %v2664
  %2682 = vmatprep.subr.bf16.mxu0 0
  %2683 = vmatpush2.bf16.msra.mxu0 0
  %2684 = vmatprep.subr.bf16.mxu0 0
  %2685 = vmatpush2.bf16.msra.mxu0 0
  %2686 = vmatprep.subr.bf16.mxu0 0
  %2687 = vmatpush2.bf16.msra.mxu0 0
  %2688 = vmatprep.subr.bf16.mxu0 0
  %2689 = vmatpush2.bf16.msra.mxu0 0
  %2690 = vmatprep.subr.bf16.mxu0 0
  %2691 = vmatpush2.bf16.msra.mxu0 0
  %2692 = vmatprep.subr.bf16.mxu0 0
  %2693 = vmatpush2.bf16.msra.mxu0 0
  %2694 = vmatprep.subr.bf16.mxu0 0
  %2695 = vmatpush2.bf16.msra.mxu0 0
  %2696 = vmatprep.subr.bf16.mxu0 0
  %2697 = vmatpush2.bf16.msra.mxu0 0
  %2698 = vmatprep.mubr.bf16.mxu0 0
  %2699 = vmatmul.mubr.bf16.gmra.mxu0 %v2661
  %v2700 = vpop.f32.mrf.mxu0
  %v2701 = vadd.f32 0.0, %v2700
  %v2702 = vpop.f32.mrf.mxu0
  %v2703 = vpop.f32.mrf.mxu0
  %v2704 = vpop.f32.mrf.mxu0
  %2705 = vdwg.mxu0
  %2707 = vrot.lane.b32.xlu0 %v2038, 120
  %v2708 = vpop.permute.xlu0 %2707
  %v2710 = vsel %vm525, %v2606, 0
  %v2713 = vsel %vm529, %v2708, 0
  %2715 = vmatprep.subr.bf16.mxu0 0
  %2716 = vmatpush1.bf16.msra.mxu0 0
  %2717 = vmatprep.subr.bf16.mxu0 0
  %2718 = vmatpush1.bf16.msra.mxu0 0
  %2719 = vmatprep.subr.bf16.mxu0 0
  %2720 = vmatpush1.bf16.msra.mxu0 0
  %2721 = vmatprep.subr.bf16.mxu0 0
  %2722 = vmatpush1.bf16.msra.mxu0 0
  %2723 = vmatprep.subr.bf16.mxu0 0
  %2724 = vmatpush1.bf16.msra.mxu0 0
  %2725 = vmatprep.subr.bf16.mxu0 0
  %2726 = vmatpush1.bf16.msra.mxu0 0
  %2727 = vmatprep.subr.bf16.mxu0 0
  %2728 = vmatpush1.bf16.msra.mxu0 0
  %2729 = vmatprep.subr.bf16.mxu0 0
  %2730 = vmatpush1.bf16.msra.mxu0 %v2713
  %2731 = vmatprep.subr.bf16.mxu0 0
  %2732 = vmatpush2.bf16.msra.mxu0 0
  %2733 = vmatprep.subr.bf16.mxu0 0
  %2734 = vmatpush2.bf16.msra.mxu0 0
  %2735 = vmatprep.subr.bf16.mxu0 0
  %2736 = vmatpush2.bf16.msra.mxu0 0
  %2737 = vmatprep.subr.bf16.mxu0 0
  %2738 = vmatpush2.bf16.msra.mxu0 0
  %2739 = vmatprep.subr.bf16.mxu0 0
  %2740 = vmatpush2.bf16.msra.mxu0 0
  %2741 = vmatprep.subr.bf16.mxu0 0
  %2742 = vmatpush2.bf16.msra.mxu0 0
  %2743 = vmatprep.subr.bf16.mxu0 0
  %2744 = vmatpush2.bf16.msra.mxu0 0
  %2745 = vmatprep.subr.bf16.mxu0 0
  %2746 = vmatpush2.bf16.msra.mxu0 0
  %2747 = vmatprep.mubr.bf16.mxu0 0
  %2748 = vmatmul.mubr.bf16.gmra.mxu0 %v2710
  %v2749 = vpop.f32.mrf.mxu0
  %v2750 = vadd.f32 0.0, %v2749
  %v2751 = vpop.f32.mrf.mxu0
  %v2752 = vpop.f32.mrf.mxu0
  %v2753 = vpop.f32.mrf.mxu0
  %2754 = vdwg.mxu0
  %2756 = vrot.lane.b32.xlu0 %v2039, 120
  %v2757 = vpop.permute.xlu0 %2756
  %v2759 = vsel %vm525, %v2607, 0
  %v2762 = vsel %vm529, %v2757, 0
  %2764 = vmatprep.subr.bf16.mxu0 0
  %2765 = vmatpush1.bf16.msra.mxu0 0
  %2766 = vmatprep.subr.bf16.mxu0 0
  %2767 = vmatpush1.bf16.msra.mxu0 0
  %2768 = vmatprep.subr.bf16.mxu0 0
  %2769 = vmatpush1.bf16.msra.mxu0 0
  %2770 = vmatprep.subr.bf16.mxu0 0
  %2771 = vmatpush1.bf16.msra.mxu0 0
  %2772 = vmatprep.subr.bf16.mxu0 0
  %2773 = vmatpush1.bf16.msra.mxu0 0
  %2774 = vmatprep.subr.bf16.mxu0 0
  %2775 = vmatpush1.bf16.msra.mxu0 0
  %2776 = vmatprep.subr.bf16.mxu0 0
  %2777 = vmatpush1.bf16.msra.mxu0 0
  %2778 = vmatprep.subr.bf16.mxu0 0
  %2779 = vmatpush1.bf16.msra.mxu0 %v2762
  %2780 = vmatprep.subr.bf16.mxu0 0
  %2781 = vmatpush2.bf16.msra.mxu0 0
  %2782 = vmatprep.subr.bf16.mxu0 0
  %2783 = vmatpush2.bf16.msra.mxu0 0
  %2784 = vmatprep.subr.bf16.mxu0 0
  %2785 = vmatpush2.bf16.msra.mxu0 0
  %2786 = vmatprep.subr.bf16.mxu0 0
  %2787 = vmatpush2.bf16.msra.mxu0 0
  %2788 = vmatprep.subr.bf16.mxu0 0
  %2789 = vmatpush2.bf16.msra.mxu0 0
  %2790 = vmatprep.subr.bf16.mxu0 0
  %2791 = vmatpush2.bf16.msra.mxu0 0
  %2792 = vmatprep.subr.bf16.mxu0 0
  %2793 = vmatpush2.bf16.msra.mxu0 0
  %2794 = vmatprep.subr.bf16.mxu0 0
  %2795 = vmatpush2.bf16.msra.mxu0 0
  %2796 = vmatprep.mubr.bf16.mxu0 0
  %2797 = vmatmul.mubr.bf16.gmra.mxu0 %v2759
  %v2798 = vpop.f32.mrf.mxu0
  %v2799 = vadd.f32 0.0, %v2798
  %v2800 = vpop.f32.mrf.mxu0
  %v2801 = vpop.f32.mrf.mxu0
  %v2802 = vpop.f32.mrf.mxu0
  %2803 = vdwg.mxu0
  %v2804 = vsel %vm525, %v2652, -inf
  %2805 = vmax.xlane.f32.xlu0 %v2804
  %v2806 = vpop.xlane.xlu0 %2805
  %v2807 = vsel %vm525, %v2701, -inf
  %2808 = vmax.xlane.f32.xlu0 %v2807
  %v2809 = vpop.xlane.xlu0 %2808
  %v2810 = vsel %vm525, %v2750, -inf
  %2811 = vmax.xlane.f32.xlu0 %v2810
  %v2812 = vpop.xlane.xlu0 %2811
  %v2813 = vsel %vm525, %v2799, -inf
  %2814 = vmax.xlane.f32.xlu0 %v2813
  %v2815 = vpop.xlane.xlu0 %2814
  %v2816 = vsub.f32 %v2652, %v2806
  %v2817 = vsub.f32 %v2701, %v2809
  %v2818 = vsub.f32 %v2750, %v2812
  %v2819 = vsub.f32 %v2799, %v2815
  %v2820 = vmul.f32 %v2816, 1.442695
  %v2821 = vpow.pop %v2820
  %v2822 = vmul.f32 %v2817, 1.442695
  %v2823 = vpow.pop %v2822
  %v2824 = vmul.f32 %v2818, 1.442695
  %v2825 = vpow.pop %v2824
  %v2826 = vmul.f32 %v2819, 1.442695
  %v2827 = vpow.pop %v2826
  %v2828 = vsel %vm525, %v2821, 0.0
  %2829 = vadd.xlane.f32.xlu0 %v2828
  %v2830 = vpop.xlane.xlu0 %2829
  %v2831 = vsel %vm525, %v2823, 0.0
  %2832 = vadd.xlane.f32.xlu0 %v2831
  %v2833 = vpop.xlane.xlu0 %2832
  %v2834 = vsel %vm525, %v2825, 0.0
  %2835 = vadd.xlane.f32.xlu0 %v2834
  %v2836 = vpop.xlane.xlu0 %2835
  %v2837 = vsel %vm525, %v2827, 0.0
  %2838 = vadd.xlane.f32.xlu0 %v2837
  %v2839 = vpop.xlane.xlu0 %2838
  %v2840 = vrcp.pop %v2830
  %v2841 = vrcp.pop %v2833
  %v2842 = vrcp.pop %v2836
  %v2843 = vrcp.pop %v2839
  %v2844 = vmul.f32 %v2821, %v2840
  %v2845 = vmul.f32 %v2823, %v2841
  %v2846 = vmul.f32 %v2825, %v2842
  %v2847 = vmul.f32 %v2827, %v2843
  %v2848 = vpack.c.bf16 %v2844, %v2844
  %v2849 = vpack.c.bf16 %v2845, %v2845
  %v2850 = vpack.c.bf16 %v2846, %v2846
  %v2851 = vpack.c.bf16 %v2847, %v2847
  %2853 = vrot.lane.b32.xlu0 %v2268, 120
  %v2854 = vpop.permute.xlu0 %2853
  %v2856 = vsel %vm525, %v2854, 0
  %v2859 = vsel %vm525, %v2848, 0
  %2861 = vmatprep.subr.bf16.mxu0 0
  %2862 = vmatpush1.bf16.xpose.msra.mxu0 0
  %2863 = vmatprep.subr.bf16.mxu0 0
  %2864 = vmatpush1.bf16.xpose.msra.mxu0 0
  %2865 = vmatprep.subr.bf16.mxu0 0
  %2866 = vmatpush1.bf16.xpose.msra.mxu0 0
  %2867 = vmatprep.subr.bf16.mxu0 0
  %2868 = vmatpush1.bf16.xpose.msra.mxu0 0
  %2869 = vmatprep.subr.bf16.mxu0 0
  %2870 = vmatpush1.bf16.xpose.msra.mxu0 0
  %2871 = vmatprep.subr.bf16.mxu0 0
  %2872 = vmatpush1.bf16.xpose.msra.mxu0 0
  %2873 = vmatprep.subr.bf16.mxu0 0
  %2874 = vmatpush1.bf16.xpose.msra.mxu0 0
  %2875 = vmatprep.subr.bf16.mxu0 0
  %2876 = vmatpush1.bf16.xpose.msra.mxu0 %v2859
  %2877 = vmatprep.subr.bf16.mxu0 0
  %2878 = vmatpush2.bf16.xpose.msra.mxu0 0
  %2879 = vmatprep.subr.bf16.mxu0 0
  %2880 = vmatpush2.bf16.xpose.msra.mxu0 0
  %2881 = vmatprep.subr.bf16.mxu0 0
  %2882 = vmatpush2.bf16.xpose.msra.mxu0 0
  %2883 = vmatprep.subr.bf16.mxu0 0
  %2884 = vmatpush2.bf16.xpose.msra.mxu0 0
  %2885 = vmatprep.subr.bf16.mxu0 0
  %2886 = vmatpush2.bf16.xpose.msra.mxu0 0
  %2887 = vmatprep.subr.bf16.mxu0 0
  %2888 = vmatpush2.bf16.xpose.msra.mxu0 0
  %2889 = vmatprep.subr.bf16.mxu0 0
  %2890 = vmatpush2.bf16.xpose.msra.mxu0 0
  %2891 = vmatprep.subr.bf16.mxu0 0
  %2892 = vmatpush2.bf16.xpose.msra.mxu0 0
  %2893 = vmatprep.mubr.bf16.mxu0 0
  %2894 = vmatmul.mubr.bf16.gmra.mxu0 %v2856
  %v2895 = vpop.f32.mrf.mxu0
  %v2896 = vadd.f32 0.0, %v2895
  %v2897 = vpop.f32.mrf.mxu0
  %v2898 = vpop.f32.mrf.mxu0
  %v2899 = vpop.f32.mrf.mxu0
  %2900 = vdwg.mxu0
  %2902 = vrot.lane.b32.xlu0 %v2269, 120
  %v2903 = vpop.permute.xlu0 %2902
  %v2905 = vsel %vm525, %v2903, 0
  %v2908 = vsel %vm525, %v2849, 0
  %2910 = vmatprep.subr.bf16.mxu0 0
  %2911 = vmatpush1.bf16.xpose.msra.mxu0 0
  %2912 = vmatprep.subr.bf16.mxu0 0
  %2913 = vmatpush1.bf16.xpose.msra.mxu0 0
  %2914 = vmatprep.subr.bf16.mxu0 0
  %2915 = vmatpush1.bf16.xpose.msra.mxu0 0
  %2916 = vmatprep.subr.bf16.mxu0 0
  %2917 = vmatpush1.bf16.xpose.msra.mxu0 0
  %2918 = vmatprep.subr.bf16.mxu0 0
  %2919 = vmatpush1.bf16.xpose.msra.mxu0 0
  %2920 = vmatprep.subr.bf16.mxu0 0
  %2921 = vmatpush1.bf16.xpose.msra.mxu0 0
  %2922 = vmatprep.subr.bf16.mxu0 0
  %2923 = vmatpush1.bf16.xpose.msra.mxu0 0
  %2924 = vmatprep.subr.bf16.mxu0 0
  %2925 = vmatpush1.bf16.xpose.msra.mxu0 %v2908
  %2926 = vmatprep.subr.bf16.mxu0 0
  %2927 = vmatpush2.bf16.xpose.msra.mxu0 0
  %2928 = vmatprep.subr.bf16.mxu0 0
  %2929 = vmatpush2.bf16.xpose.msra.mxu0 0
  %2930 = vmatprep.subr.bf16.mxu0 0
  %2931 = vmatpush2.bf16.xpose.msra.mxu0 0
  %2932 = vmatprep.subr.bf16.mxu0 0
  %2933 = vmatpush2.bf16.xpose.msra.mxu0 0
  %2934 = vmatprep.subr.bf16.mxu0 0
  %2935 = vmatpush2.bf16.xpose.msra.mxu0 0
  %2936 = vmatprep.subr.bf16.mxu0 0
  %2937 = vmatpush2.bf16.xpose.msra.mxu0 0
  %2938 = vmatprep.subr.bf16.mxu0 0
  %2939 = vmatpush2.bf16.xpose.msra.mxu0 0
  %2940 = vmatprep.subr.bf16.mxu0 0
  %2941 = vmatpush2.bf16.xpose.msra.mxu0 0
  %2942 = vmatprep.mubr.bf16.mxu0 0
  %2943 = vmatmul.mubr.bf16.gmra.mxu0 %v2905
  %v2944 = vpop.f32.mrf.mxu0
  %v2945 = vadd.f32 0.0, %v2944
  %v2946 = vpop.f32.mrf.mxu0
  %v2947 = vpop.f32.mrf.mxu0
  %v2948 = vpop.f32.mrf.mxu0
  %2949 = vdwg.mxu0
  %2951 = vrot.lane.b32.xlu0 %v2270, 120
  %v2952 = vpop.permute.xlu0 %2951
  %v2954 = vsel %vm525, %v2952, 0
  %v2957 = vsel %vm525, %v2850, 0
  %2959 = vmatprep.subr.bf16.mxu0 0
  %2960 = vmatpush1.bf16.xpose.msra.mxu0 0
  %2961 = vmatprep.subr.bf16.mxu0 0
  %2962 = vmatpush1.bf16.xpose.msra.mxu0 0
  %2963 = vmatprep.subr.bf16.mxu0 0
  %2964 = vmatpush1.bf16.xpose.msra.mxu0 0
  %2965 = vmatprep.subr.bf16.mxu0 0
  %2966 = vmatpush1.bf16.xpose.msra.mxu0 0
  %2967 = vmatprep.subr.bf16.mxu0 0
  %2968 = vmatpush1.bf16.xpose.msra.mxu0 0
  %2969 = vmatprep.subr.bf16.mxu0 0
  %2970 = vmatpush1.bf16.xpose.msra.mxu0 0
  %2971 = vmatprep.subr.bf16.mxu0 0
  %2972 = vmatpush1.bf16.xpose.msra.mxu0 0
  %2973 = vmatprep.subr.bf16.mxu0 0
  %2974 = vmatpush1.bf16.xpose.msra.mxu0 %v2957
  %2975 = vmatprep.subr.bf16.mxu0 0
  %2976 = vmatpush2.bf16.xpose.msra.mxu0 0
  %2977 = vmatprep.subr.bf16.mxu0 0
  %2978 = vmatpush2.bf16.xpose.msra.mxu0 0
  %2979 = vmatprep.subr.bf16.mxu0 0
  %2980 = vmatpush2.bf16.xpose.msra.mxu0 0
  %2981 = vmatprep.subr.bf16.mxu0 0
  %2982 = vmatpush2.bf16.xpose.msra.mxu0 0
  %2983 = vmatprep.subr.bf16.mxu0 0
  %2984 = vmatpush2.bf16.xpose.msra.mxu0 0
  %2985 = vmatprep.subr.bf16.mxu0 0
  %2986 = vmatpush2.bf16.xpose.msra.mxu0 0
  %2987 = vmatprep.subr.bf16.mxu0 0
  %2988 = vmatpush2.bf16.xpose.msra.mxu0 0
  %2989 = vmatprep.subr.bf16.mxu0 0
  %2990 = vmatpush2.bf16.xpose.msra.mxu0 0
  %2991 = vmatprep.mubr.bf16.mxu0 0
  %2992 = vmatmul.mubr.bf16.gmra.mxu0 %v2954
  %v2993 = vpop.f32.mrf.mxu0
  %v2994 = vadd.f32 0.0, %v2993
  %v2995 = vpop.f32.mrf.mxu0
  %v2996 = vpop.f32.mrf.mxu0
  %v2997 = vpop.f32.mrf.mxu0
  %2998 = vdwg.mxu0
  %3000 = vrot.lane.b32.xlu0 %v2271, 120
  %v3001 = vpop.permute.xlu0 %3000
  %v3003 = vsel %vm525, %v3001, 0
  %v3006 = vsel %vm525, %v2851, 0
  %3008 = vmatprep.subr.bf16.mxu0 0
  %3009 = vmatpush1.bf16.xpose.msra.mxu0 0
  %3010 = vmatprep.subr.bf16.mxu0 0
  %3011 = vmatpush1.bf16.xpose.msra.mxu0 0
  %3012 = vmatprep.subr.bf16.mxu0 0
  %3013 = vmatpush1.bf16.xpose.msra.mxu0 0
  %3014 = vmatprep.subr.bf16.mxu0 0
  %3015 = vmatpush1.bf16.xpose.msra.mxu0 0
  %3016 = vmatprep.subr.bf16.mxu0 0
  %3017 = vmatpush1.bf16.xpose.msra.mxu0 0
  %3018 = vmatprep.subr.bf16.mxu0 0
  %3019 = vmatpush1.bf16.xpose.msra.mxu0 0
  %3020 = vmatprep.subr.bf16.mxu0 0
  %3021 = vmatpush1.bf16.xpose.msra.mxu0 0
  %3022 = vmatprep.subr.bf16.mxu0 0
  %3023 = vmatpush1.bf16.xpose.msra.mxu0 %v3006
  %3024 = vmatprep.subr.bf16.mxu0 0
  %3025 = vmatpush2.bf16.xpose.msra.mxu0 0
  %3026 = vmatprep.subr.bf16.mxu0 0
  %3027 = vmatpush2.bf16.xpose.msra.mxu0 0
  %3028 = vmatprep.subr.bf16.mxu0 0
  %3029 = vmatpush2.bf16.xpose.msra.mxu0 0
  %3030 = vmatprep.subr.bf16.mxu0 0
  %3031 = vmatpush2.bf16.xpose.msra.mxu0 0
  %3032 = vmatprep.subr.bf16.mxu0 0
  %3033 = vmatpush2.bf16.xpose.msra.mxu0 0
  %3034 = vmatprep.subr.bf16.mxu0 0
  %3035 = vmatpush2.bf16.xpose.msra.mxu0 0
  %3036 = vmatprep.subr.bf16.mxu0 0
  %3037 = vmatpush2.bf16.xpose.msra.mxu0 0
  %3038 = vmatprep.subr.bf16.mxu0 0
  %3039 = vmatpush2.bf16.xpose.msra.mxu0 0
  %3040 = vmatprep.mubr.bf16.mxu0 0
  %3041 = vmatmul.mubr.bf16.gmra.mxu0 %v3003
  %v3042 = vpop.f32.mrf.mxu0
  %v3043 = vadd.f32 0.0, %v3042
  %v3044 = vpop.f32.mrf.mxu0
  %v3045 = vpop.f32.mrf.mxu0
  %v3046 = vpop.f32.mrf.mxu0
  %3047 = vdwg.mxu0
  %3052 = vrot.lane.b32.xlu0 %v2896, 8
  %v3053 = vpop.permute.xlu0 %3052
  %3054 = vrot.lane.b32.xlu0 %v2945, 8
  %v3055 = vpop.permute.xlu0 %3054
  %3056 = vrot.lane.b32.xlu0 %v2994, 8
  %v3057 = vpop.permute.xlu0 %3056
  %3058 = vrot.lane.b32.xlu0 %v3043, 8
  %v3059 = vpop.permute.xlu0 %3058
  %v3064 = vsel %vm525, %v2317, %v3053
  %v3065 = vsel %vm525, %v2363, %v3055
  %v3066 = vsel %vm525, %v2409, %v3057
  %v3067 = vsel %vm525, %v2455, %v3059
  %v3068 = vld [vmem:[%s13] sm:$0xf]
  %v3069 = vld [vmem:[%s13 + $0x4] sm:$0xf]
  %v3070 = vld [vmem:[%s13 + $0x8] sm:$0xf]
  %v3071 = vld [vmem:[%s13 + $0xc] sm:$0xf]
  %v3072 = vpack.c.bf16 %v3065, %v3064
  %v3073 = vpack.c.bf16 %v3067, %v3066
  %v3074 = vld [vmem:[%s14] sm:$0xff]
  %v3075 = vld [vmem:[%s14 + $0x8] sm:$0xff]
  %v3076 = vld [vmem:[%s14 + $0x10] sm:$0xff]
  %v3077 = vld [vmem:[%s14 + $0x18] sm:$0xff]
  %3079 = vset.pattern.permute.xlu0 0
  %3080 = vperm.xlu0 %3079, %v3074
  %v3081 = vpop.permute.xlu0 %3080
  %3084 = vset.pattern.permute.xlu0 0
  %3085 = vperm.xlu0 %3084, %v3075
  %v3086 = vpop.permute.xlu0 %3085
  %3089 = vset.pattern.permute.xlu0 0
  %3090 = vperm.xlu0 %3089, %v3076
  %v3091 = vpop.permute.xlu0 %3090
  %3094 = vset.pattern.permute.xlu0 0
  %3095 = vperm.xlu0 %3094, %v3077
  %v3096 = vpop.permute.xlu0 %3095
  %v3102 = vunpack.c.l.b16 %v3068
  %v3103 = vunpack.c.l.b16 %v3069
  %v3104 = vunpack.c.l.b16 %v3070
  %v3105 = vunpack.c.l.b16 %v3071
  %v3106 = vpack.c.b16 %v3103, %v3102
  %v3107 = vpack.c.b16 %v3105, %v3104
  %v3109 = vsel %vm289, %v3106, 0
  %v3112 = vsel %vm289, %v3107, 0
  %3114 = vmatprep.subr.bf16.mxu0 0
  %3115 = vmatpush1.bf16.msra.mxu0 0
  %3116 = vmatprep.subr.bf16.mxu0 0
  %3117 = vmatpush1.bf16.msra.mxu0 0
  %3118 = vmatprep.subr.bf16.mxu0 0
  %3119 = vmatpush1.bf16.msra.mxu0 0
  %3120 = vmatprep.subr.bf16.mxu0 0
  %3121 = vmatpush1.bf16.msra.mxu0 0
  %3122 = vmatprep.subr.bf16.mxu0 0
  %3123 = vmatpush1.bf16.msra.mxu0 0
  %3124 = vmatprep.subr.bf16.mxu0 0
  %3125 = vmatpush1.bf16.msra.mxu0 0
  %3126 = vmatprep.subr.bf16.mxu0 0
  %3127 = vmatpush1.bf16.msra.mxu0 %v3073
  %3128 = vmatprep.subr.bf16.mxu0 0
  %3129 = vmatpush1.bf16.msra.mxu0 %v3072
  %3130 = vmatprep.subr.bf16.mxu0 0
  %3131 = vmatpush2.bf16.msra.mxu0 0
  %3132 = vmatprep.subr.bf16.mxu0 0
  %3133 = vmatpush2.bf16.msra.mxu0 0
  %3134 = vmatprep.subr.bf16.mxu0 0
  %3135 = vmatpush2.bf16.msra.mxu0 0
  %3136 = vmatprep.subr.bf16.mxu0 0
  %3137 = vmatpush2.bf16.msra.mxu0 0
  %3138 = vmatprep.subr.bf16.mxu0 0
  %3139 = vmatpush2.bf16.msra.mxu0 0
  %3140 = vmatprep.subr.bf16.mxu0 0
  %3141 = vmatpush2.bf16.msra.mxu0 0
  %3142 = vmatprep.subr.bf16.mxu0 0
  %3143 = vmatpush2.bf16.msra.mxu0 0
  %3144 = vmatprep.subr.bf16.mxu0 0
  %3145 = vmatpush2.bf16.msra.mxu0 0
  %3146 = vmatprep.mubr.bf16.mxu0 0
  %3147 = vmatmul.mubr.bf16.gmra.mxu0 %v3109
  %v3148 = vpop.f32.mrf.mxu0
  %v3149 = vadd.f32 %v3081, %v3148
  %v3150 = vpop.f32.mrf.mxu0
  %v3151 = vpop.f32.mrf.mxu0
  %v3152 = vadd.f32 %v3086, %v3151
  %v3153 = vpop.f32.mrf.mxu0
  %3154 = vmatprep.mubr.bf16.mxu0 0
  %3155 = vmatmul.mubr.bf16.gmra.mxu0 %v3112
  %v3156 = vpop.f32.mrf.mxu0
  %v3157 = vadd.f32 %v3091, %v3156
  %v3158 = vpop.f32.mrf.mxu0
  %v3159 = vpop.f32.mrf.mxu0
  %v3160 = vadd.f32 %v3096, %v3159
  %v3161 = vpop.f32.mrf.mxu0
  %3162 = vdwg.mxu0
  %v3163 = vld [vmem:[%s15] sm:$0xf]
  %v3164 = vld [vmem:[%s15 + $0x4] sm:$0xf]
  %v3165 = vld [vmem:[%s15 + $0x8] sm:$0xf]
  %v3166 = vld [vmem:[%s15 + $0xc] sm:$0xf]
  %v3167 = vpack.c.bf16 %v3152, %v3149
  %v3168 = vpack.c.bf16 %v3160, %v3157
  %v3169 = vld [vmem:[%s16] sm:$0xff]
  %v3170 = vld [vmem:[%s16 + $0x8] sm:$0xff]
  %v3171 = vld [vmem:[%s16 + $0x10] sm:$0xff]
  %v3172 = vld [vmem:[%s16 + $0x18] sm:$0xff]
  %3174 = vset.pattern.permute.xlu0 0
  %3175 = vperm.xlu0 %3174, %v3169
  %v3176 = vpop.permute.xlu0 %3175
  %3179 = vset.pattern.permute.xlu0 0
  %3180 = vperm.xlu0 %3179, %v3170
  %v3181 = vpop.permute.xlu0 %3180
  %3184 = vset.pattern.permute.xlu0 0
  %3185 = vperm.xlu0 %3184, %v3171
  %v3186 = vpop.permute.xlu0 %3185
  %3189 = vset.pattern.permute.xlu0 0
  %3190 = vperm.xlu0 %3189, %v3172
  %v3191 = vpop.permute.xlu0 %3190
  %v3197 = vunpack.c.l.b16 %v3163
  %v3198 = vunpack.c.l.b16 %v3164
  %v3199 = vunpack.c.l.b16 %v3165
  %v3200 = vunpack.c.l.b16 %v3166
  %v3201 = vpack.c.b16 %v3198, %v3197
  %v3202 = vpack.c.b16 %v3200, %v3199
  %v3204 = vsel %vm289, %v3201, 0
  %v3207 = vsel %vm289, %v3202, 0
  %3209 = vmatprep.subr.bf16.mxu0 0
  %3210 = vmatpush1.bf16.msra.mxu0 0
  %3211 = vmatprep.subr.bf16.mxu0 0
  %3212 = vmatpush1.bf16.msra.mxu0 0
  %3213 = vmatprep.subr.bf16.mxu0 0
  %3214 = vmatpush1.bf16.msra.mxu0 0
  %3215 = vmatprep.subr.bf16.mxu0 0
  %3216 = vmatpush1.bf16.msra.mxu0 0
  %3217 = vmatprep.subr.bf16.mxu0 0
  %3218 = vmatpush1.bf16.msra.mxu0 0
  %3219 = vmatprep.subr.bf16.mxu0 0
  %3220 = vmatpush1.bf16.msra.mxu0 0
  %3221 = vmatprep.subr.bf16.mxu0 0
  %3222 = vmatpush1.bf16.msra.mxu0 %v3168
  %3223 = vmatprep.subr.bf16.mxu0 0
  %3224 = vmatpush1.bf16.msra.mxu0 %v3167
  %3225 = vmatprep.subr.bf16.mxu0 0
  %3226 = vmatpush2.bf16.msra.mxu0 0
  %3227 = vmatprep.subr.bf16.mxu0 0
  %3228 = vmatpush2.bf16.msra.mxu0 0
  %3229 = vmatprep.subr.bf16.mxu0 0
  %3230 = vmatpush2.bf16.msra.mxu0 0
  %3231 = vmatprep.subr.bf16.mxu0 0
  %3232 = vmatpush2.bf16.msra.mxu0 0
  %3233 = vmatprep.subr.bf16.mxu0 0
  %3234 = vmatpush2.bf16.msra.mxu0 0
  %3235 = vmatprep.subr.bf16.mxu0 0
  %3236 = vmatpush2.bf16.msra.mxu0 0
  %3237 = vmatprep.subr.bf16.mxu0 0
  %3238 = vmatpush2.bf16.msra.mxu0 0
  %3239 = vmatprep.subr.bf16.mxu0 0
  %3240 = vmatpush2.bf16.msra.mxu0 0
  %3241 = vmatprep.mubr.bf16.mxu0 0
  %3242 = vmatmul.mubr.bf16.gmra.mxu0 %v3204
  %v3243 = vpop.f32.mrf.mxu0
  %v3244 = vadd.f32 %v3176, %v3243
  %v3245 = vpop.f32.mrf.mxu0
  %v3246 = vpop.f32.mrf.mxu0
  %v3247 = vadd.f32 %v3181, %v3246
  %v3248 = vpop.f32.mrf.mxu0
  %3249 = vmatprep.mubr.bf16.mxu0 0
  %3250 = vmatmul.mubr.bf16.gmra.mxu0 %v3207
  %v3251 = vpop.f32.mrf.mxu0
  %v3252 = vadd.f32 %v3186, %v3251
  %v3253 = vpop.f32.mrf.mxu0
  %v3254 = vpop.f32.mrf.mxu0
  %v3255 = vadd.f32 %v3191, %v3254
  %v3256 = vpop.f32.mrf.mxu0
  %3257 = vdwg.mxu0
  %v3258 = vmax.f32 %v3244, 0.0
  %v3259 = vmax.f32 %v3247, 0.0
  %v3260 = vmax.f32 %v3252, 0.0
  %v3261 = vmax.f32 %v3255, 0.0
  %v3262 = vld [vmem:[%s17] sm:$0xf]
  %v3263 = vld [vmem:[%s17 + $0x4] sm:$0xf]
  %v3264 = vld [vmem:[%s17 + $0x8] sm:$0xf]
  %v3265 = vld [vmem:[%s17 + $0xc] sm:$0xf]
  %v3266 = vpack.c.bf16 %v3259, %v3258
  %v3267 = vpack.c.bf16 %v3261, %v3260
  %v3268 = vld [vmem:[%s18] sm:$0xff]
  %v3269 = vld [vmem:[%s18 + $0x8] sm:$0xff]
  %v3270 = vld [vmem:[%s18 + $0x10] sm:$0xff]
  %v3271 = vld [vmem:[%s18 + $0x18] sm:$0xff]
  %3273 = vset.pattern.permute.xlu0 0
  %3274 = vperm.xlu0 %3273, %v3268
  %v3275 = vpop.permute.xlu0 %3274
  %3278 = vset.pattern.permute.xlu0 0
  %3279 = vperm.xlu0 %3278, %v3269
  %v3280 = vpop.permute.xlu0 %3279
  %3283 = vset.pattern.permute.xlu0 0
  %3284 = vperm.xlu0 %3283, %v3270
  %v3285 = vpop.permute.xlu0 %3284
  %3288 = vset.pattern.permute.xlu0 0
  %3289 = vperm.xlu0 %3288, %v3271
  %v3290 = vpop.permute.xlu0 %3289
  %v3296 = vunpack.c.l.b16 %v3262
  %v3297 = vunpack.c.l.b16 %v3263
  %v3298 = vunpack.c.l.b16 %v3264
  %v3299 = vunpack.c.l.b16 %v3265
  %v3300 = vpack.c.b16 %v3297, %v3296
  %v3301 = vpack.c.b16 %v3299, %v3298
  %v3303 = vsel %vm289, %v3300, 0
  %v3306 = vsel %vm289, %v3301, 0
  %3308 = vmatprep.subr.bf16.mxu0 0
  %3309 = vmatpush1.bf16.msra.mxu0 0
  %3310 = vmatprep.subr.bf16.mxu0 0
  %3311 = vmatpush1.bf16.msra.mxu0 0
  %3312 = vmatprep.subr.bf16.mxu0 0
  %3313 = vmatpush1.bf16.msra.mxu0 0
  %3314 = vmatprep.subr.bf16.mxu0 0
  %3315 = vmatpush1.bf16.msra.mxu0 0
  %3316 = vmatprep.subr.bf16.mxu0 0
  %3317 = vmatpush1.bf16.msra.mxu0 0
  %3318 = vmatprep.subr.bf16.mxu0 0
  %3319 = vmatpush1.bf16.msra.mxu0 0
  %3320 = vmatprep.subr.bf16.mxu0 0
  %3321 = vmatpush1.bf16.msra.mxu0 %v3267
  %3322 = vmatprep.subr.bf16.mxu0 0
  %3323 = vmatpush1.bf16.msra.mxu0 %v3266
  %3324 = vmatprep.subr.bf16.mxu0 0
  %3325 = vmatpush2.bf16.msra.mxu0 0
  %3326 = vmatprep.subr.bf16.mxu0 0
  %3327 = vmatpush2.bf16.msra.mxu0 0
  %3328 = vmatprep.subr.bf16.mxu0 0
  %3329 = vmatpush2.bf16.msra.mxu0 0
  %3330 = vmatprep.subr.bf16.mxu0 0
  %3331 = vmatpush2.bf16.msra.mxu0 0
  %3332 = vmatprep.subr.bf16.mxu0 0
  %3333 = vmatpush2.bf16.msra.mxu0 0
  %3334 = vmatprep.subr.bf16.mxu0 0
  %3335 = vmatpush2.bf16.msra.mxu0 0
  %3336 = vmatprep.subr.bf16.mxu0 0
  %3337 = vmatpush2.bf16.msra.mxu0 0
  %3338 = vmatprep.subr.bf16.mxu0 0
  %3339 = vmatpush2.bf16.msra.mxu0 0
  %3340 = vmatprep.mubr.bf16.mxu0 0
  %3341 = vmatmul.mubr.bf16.gmra.mxu0 %v3303
  %v3342 = vpop.f32.mrf.mxu0
  %v3343 = vadd.f32 %v3275, %v3342
  %v3344 = vpop.f32.mrf.mxu0
  %v3345 = vpop.f32.mrf.mxu0
  %v3346 = vadd.f32 %v3280, %v3345
  %v3347 = vpop.f32.mrf.mxu0
  %3348 = vmatprep.mubr.bf16.mxu0 0
  %3349 = vmatmul.mubr.bf16.gmra.mxu0 %v3306
  %v3350 = vpop.f32.mrf.mxu0
  %v3351 = vadd.f32 %v3285, %v3350
  %v3352 = vpop.f32.mrf.mxu0
  %v3353 = vpop.f32.mrf.mxu0
  %v3354 = vadd.f32 %v3290, %v3353
  %v3355 = vpop.f32.mrf.mxu0
  %3356 = vdwg.mxu0
  %v3357 = vadd.f32 %v169, %v3149
  %v3358 = vadd.f32 %v170, %v3152
  %v3359 = vadd.f32 %v171, %v3157
  %v3360 = vadd.f32 %v172, %v3160
  %v3361 = vadd.f32 %v3357, %v3343
  %v3362 = vadd.f32 %v3358, %v3346
  %v3363 = vadd.f32 %v3359, %v3351
  %v3364 = vadd.f32 %v3360, %v3354
  %v3365 = vld [vmem:[%s2] sm:$0x1]
  %v3367 = vlaneseq
  %v3368 = vshrl.u32 %v3367, 7
  %v3369 = vsub.s32 0, %v3368
  %v3370 = vrot.slane %v3365, %v3369
  %v3372 = vmul.f32 %v3361, %v3370
  %v3373 = vmul.f32 %v3362, %v3370
  %v3374 = vmul.f32 %v3363, %v3370
  %v3375 = vmul.f32 %v3364, %v3370
  %3376 = vst.msk [vmem:[%s19] sm:$0xff] %vm73, %v3372
  %3377 = vst.msk [vmem:[%s19 + $0x8] sm:$0xff] %vm73, %v3373
  %3378 = vst.msk [vmem:[%s19 + $0x10] sm:$0xff] %vm73, %v3374
  %3379 = vst.msk [vmem:[%s19 + $0x18] sm:$0xff] %vm73, %v3375
  // Predicated region
  $region78: #{tpu_custom_call.1} parent=0 // pred_check
    _
  $region79: #{tpu_custom_call.1} parent=0 // pred_check_branch
    %3381 = sbr.rel (0) target = $region81
  $region80: #{tpu_custom_call.1} parent=0 // pred_region
    _
  $region81: #{tpu_custom_call.1} parent=0 // pred_fallthru
    _
  // Predicated region
  $region82: #{tpu_custom_call.1} parent=0 // pred_check
    _
  $region83: #{tpu_custom_call.1} parent=0 // pred_check_branch
    %3383 = sbr.rel (0) target = $region85
  $region84: #{tpu_custom_call.1} parent=0 // pred_region
    _
  $region85: #{tpu_custom_call.1} parent=0 // pred_fallthru
    _

</llo_original>
